<compile_context>
chip_gen: v7x
topology: tpu7x:2x2x1
jax: 0.10.0
libtpu: 0.0.40
codegen_flags: <defaults>
</compile_context>

<pallas_src>
import math
import functools

import jax
import jax.numpy as jnp
from jax import lax
from jax.experimental import pallas as pl
from jax.experimental.pallas import tpu as pltpu


# ---------------------------------------------------------------------------
# Pallas kernel: one batch element per grid step, whole DecoderLayer fused.
# ---------------------------------------------------------------------------
def _decoder_layer_kernel(
    x_ref,        # (1, St, D)
    mem_ref,      # (1, Ss, D)
    tgt_mask_ref, # (1, St, St) int32 (1 = attend, 0 = masked)
    src_mask_ref, # (1, St, Ss) int32
    ln_a_ref,     # (3, D)  LayerNorm gains   (sublayers 0,1,2)
    ln_b_ref,     # (3, D)  LayerNorm biases
    self_w_ref,   # (4, D, D)  self-attn  Wq, Wk, Wv, Wo   (in, out layout)
    self_b_ref,   # (4, D)
    src_w_ref,    # (4, D, D)  src-attn   Wq, Wk, Wv, Wo
    src_b_ref,    # (4, D)
    ffn_w1_ref,   # (D, Dff)
    ffn_b1_ref,   # (1, Dff)
    ffn_w2_ref,   # (Dff, D)
    ffn_b2_ref,   # (1, D)
    out_ref,      # (1, St, D)
    *, n_heads: int, eps: float,
):
    x = x_ref[0].astype(jnp.float32)        # (St, D)
    m = mem_ref[0].astype(jnp.float32)      # (Ss, D)
    tgt_mask = tgt_mask_ref[0]              # (St, St)
    src_mask = src_mask_ref[0]              # (St, Ss)

    D = x.shape[-1]
    d_k = D // n_heads
    inv_sqrt_dk = 1.0 / math.sqrt(d_k)

    def layer_norm(v, idx):
        # Matches the PyTorch module: unbiased std (ddof=1), divide by (std + eps).
        a = ln_a_ref[idx:idx + 1, :]                       # (1, D)
        b = ln_b_ref[idx:idx + 1, :]                       # (1, D)
        mean = jnp.mean(v, axis=-1, keepdims=True)
        centered = v - mean
        var = jnp.sum(centered * centered, axis=-1, keepdims=True) / (D - 1)
        std = jnp.sqrt(var)
        return a * centered / (std + eps) + b

    def linear(v, w_ref, b_ref, idx):
        w = w_ref[idx]                                     # (D, D)
        b = b_ref[idx:idx + 1, :]                          # (1, D)
        return jnp.dot(v, w, preferred_element_type=jnp.float32) + b

    def mha(q_in, kv_in, mask, w_ref, b_ref):
        q = linear(q_in, w_ref, b_ref, 0)                  # (Sq, D)
        k = linear(kv_in, w_ref, b_ref, 1)                 # (Skv, D)
        v = linear(kv_in, w_ref, b_ref, 2)                 # (Skv, D)
        heads = []
        for h in range(n_heads):                           # static, unrolled
            sl = slice(h * d_k, (h + 1) * d_k)
            q_h, k_h, v_h = q[:, sl], k[:, sl], v[:, sl]
            scores = lax.dot_general(
                q_h, k_h, (((1,), (1,)), ((), ())),
                preferred_element_type=jnp.float32) * inv_sqrt_dk  # (Sq, Skv)
            scores = jnp.where(mask == 0, -1e9, scores)
            smax = jnp.max(scores, axis=-1, keepdims=True)
            p = jnp.exp(scores - smax)
            p = p / jnp.sum(p, axis=-1, keepdims=True)
            # TODO(synk): attention-probability dropout omitted (eval mode).
            heads.append(jnp.dot(p, v_h, preferred_element_type=jnp.float32))
        concat = jnp.concatenate(heads, axis=-1)           # (Sq, D)
        return linear(concat, w_ref, b_ref, 3)

    def feed_forward(v):
        h1 = jnp.dot(v, ffn_w1_ref[...],
                     preferred_element_type=jnp.float32) + ffn_b1_ref[...]
        h1 = jnp.maximum(h1, 0.0)
        # TODO(synk): inner FFN dropout omitted (eval mode).
        return jnp.dot(h1, ffn_w2_ref[...],
                       preferred_element_type=jnp.float32) + ffn_b2_ref[...]

    # Sublayer 0: masked self-attention + residual (dropout = identity, eval).
    y = layer_norm(x, 0)
    x = x + mha(y, y, tgt_mask, self_w_ref, self_b_ref)

    # Sublayer 1: encoder-decoder (source) attention + residual.
    y = layer_norm(x, 1)
    x = x + mha(y, m, src_mask, src_w_ref, src_b_ref)

    # Sublayer 2: position-wise feed-forward + residual.
    y = layer_norm(x, 2)
    x = x + feed_forward(y)

    out_ref[0] = x.astype(out_ref.dtype)


# ---------------------------------------------------------------------------
# Wrapper
# ---------------------------------------------------------------------------
def decoder_layer_forward(x, memory, tgt_mask, src_mask, params, *,
                          n_heads: int, eps: float = 1e-6):
    B, St, D = x.shape
    Ss = memory.shape[1]
    Dff = params["ffn_w1"].shape[1]

    kernel = functools.partial(_decoder_layer_kernel, n_heads=n_heads, eps=eps)

    in_specs = [
        pl.BlockSpec((1, St, D), lambda b: (b, 0, 0)),      # x
        pl.BlockSpec((1, Ss, D), lambda b: (b, 0, 0)),      # memory
        pl.BlockSpec((1, St, St), lambda b: (b, 0, 0)),     # tgt_mask
        pl.BlockSpec((1, St, Ss), lambda b: (b, 0, 0)),     # src_mask
        pl.BlockSpec((3, D), lambda b: (0, 0)),             # ln_a
        pl.BlockSpec((3, D), lambda b: (0, 0)),             # ln_b
        pl.BlockSpec((4, D, D), lambda b: (0, 0, 0)),       # self_w
        pl.BlockSpec((4, D), lambda b: (0, 0)),             # self_b
        pl.BlockSpec((4, D, D), lambda b: (0, 0, 0)),       # src_w
        pl.BlockSpec((4, D), lambda b: (0, 0)),             # src_b
        pl.BlockSpec((D, Dff), lambda b: (0, 0)),           # ffn_w1
        pl.BlockSpec((1, Dff), lambda b: (0, 0)),           # ffn_b1
        pl.BlockSpec((Dff, D), lambda b: (0, 0)),           # ffn_w2
        pl.BlockSpec((1, D), lambda b: (0, 0)),             # ffn_b2
    ]
    out_spec = pl.BlockSpec((1, St, D), lambda b: (b, 0, 0))

    return pl.pallas_call(
        kernel,
        out_shape=jax.ShapeDtypeStruct((B, St, D), x.dtype),
        grid=(B,),
        in_specs=in_specs,
        out_specs=out_spec,
        compiler_params=pltpu.CompilerParams(
            dimension_semantics=("parallel",),   # batch axis -> 2 TCs on v7x
        ),
    )(x, memory, tgt_mask, src_mask,
      params["ln_a"], params["ln_b"],
      params["self_w"], params["self_b"],
      params["src_w"], params["src_b"],
      params["ffn_w1"], params["ffn_b1"], params["ffn_w2"], params["ffn_b2"])


# ---------------------------------------------------------------------------
# Pure-JAX reference (same math, batched) for the correctness check.
# ---------------------------------------------------------------------------
def reference_decoder_layer(x, memory, tgt_mask, src_mask, params, *,
                            n_heads: int, eps: float = 1e-6):
    def layer_norm(v, a, b):
        mean = v.mean(-1, keepdims=True)
        centered = v - mean
        var = (centered ** 2).sum(-1, keepdims=True) / (v.shape[-1] - 1)
        std = jnp.sqrt(var)
        return a * centered / (std + eps) + b

    def mha(q_in, kv_in, mask, w, bvec):
        B, Sq, D = q_in.shape
        Skv = kv_in.shape[1]
        d_k = D // n_heads
        q = q_in @ w[0] + bvec[0]
        k = kv_in @ w[1] + bvec[1]
        v = kv_in @ w[2] + bvec[2]
        q = q.reshape(B, Sq, n_heads, d_k).transpose(0, 2, 1, 3)
        k = k.reshape(B, Skv, n_heads, d_k).transpose(0, 2, 1, 3)
        v = v.reshape(B, Skv, n_heads, d_k).transpose(0, 2, 1, 3)
        scores = jnp.einsum("bhqd,bhkd->bhqk", q, k) / math.sqrt(d_k)
        scores = jnp.where(mask[:, None, :, :] == 0, -1e9, scores)
        p = jax.nn.softmax(scores, axis=-1)
        o = jnp.einsum("bhqk,bhkd->bhqd", p, v)
        o = o.transpose(0, 2, 1, 3).reshape(B, Sq, D)
        return o @ w[3] + bvec[3]

    def ffn(v):
        h1 = jnp.maximum(v @ params["ffn_w1"] + params["ffn_b1"], 0.0)
        return h1 @ params["ffn_w2"] + params["ffn_b2"]

    ln_a, ln_b = params["ln_a"], params["ln_b"]
    y = layer_norm(x, ln_a[0], ln_b[0])
    x = x + mha(y, y, tgt_mask, params["self_w"], params["self_b"])
    y = layer_norm(x, ln_a[1], ln_b[1])
    x = x + mha(y, memory, src_mask, params["src_w"], params["src_b"])
    y = layer_norm(x, ln_a[2], ln_b[2])
    return x + ffn(y)


# ---------------------------------------------------------------------------
if __name__ == "__main__":
    B, St, Ss = 2, 8, 16          # batch, target seq, source (memory) seq
    D, H, Dff = 128, 4, 256       # d_model (lane-dense), heads, FFN hidden
    eps = 1e-6

    key = jax.random.PRNGKey(0)
    keys = jax.random.split(key, 10)

    x = jax.random.normal(keys[0], (B, St, D), dtype=jnp.float32)
    memory = jax.random.normal(keys[1], (B, Ss, D), dtype=jnp.float32)

    # Causal target mask; source padding mask (batch 1 has 4 padded positions).
    causal = jnp.tril(jnp.ones((St, St), dtype=jnp.int32))
    tgt_mask = jnp.tile(causal[None], (B, 1, 1))
    src_lens = jnp.array([Ss, Ss - 4], dtype=jnp.int32)
    src_valid = (jnp.arange(Ss)[None, :] < src_lens[:, None]).astype(jnp.int32)  # (B, Ss)
    src_mask = jnp.tile(src_valid[:, None, :], (1, St, 1))

    scale = 0.1
    params = {
        "ln_a": jnp.ones((3, D), jnp.float32),
        "ln_b": jnp.zeros((3, D), jnp.float32),
        "self_w": scale * jax.random.normal(keys[2], (4, D, D), dtype=jnp.float32),
        "self_b": scale * jax.random.normal(keys[3], (4, D), dtype=jnp.float32),
        "src_w":  scale * jax.random.normal(keys[4], (4, D, D), dtype=jnp.float32),
        "src_b":  scale * jax.random.normal(keys[5], (4, D), dtype=jnp.float32),
        "ffn_w1": scale * jax.random.normal(keys[6], (D, Dff), dtype=jnp.float32),
        "ffn_b1": scale * jax.random.normal(keys[7], (1, Dff), dtype=jnp.float32),
        "ffn_w2": scale * jax.random.normal(keys[8], (Dff, D), dtype=jnp.float32),
        "ffn_b2": scale * jax.random.normal(keys[9], (1, D), dtype=jnp.float32),
    }

    out = decoder_layer_forward(x, memory, tgt_mask, src_mask, params,
                                n_heads=H, eps=eps)
    out = jax.block_until_ready(out)

    ref = reference_decoder_layer(x, memory, tgt_mask, src_mask, params,
                                  n_heads=H, eps=eps)
    ref = jax.block_until_ready(ref)

    assert out.shape == x.shape and out.dtype == x.dtype
    assert jnp.allclose(out, ref, atol=1e-3, rtol=1e-3), "mismatch vs reference"

    print("KERNEL_OK")
</pallas_src>

<mosaic_0001>
module attributes {stable_mosaic.version = 11 : i64} {
  func.func @_decoder_layer_kernel(%arg0: i32, %arg1: memref<1x8x128xf32, #tpu.memory_space<vmem>>, %arg2: memref<1x16x128xf32, #tpu.memory_space<vmem>>, %arg3: memref<1x8x8xi32, #tpu.memory_space<vmem>>, %arg4: memref<1x8x16xi32, #tpu.memory_space<vmem>>, %arg5: memref<3x128xf32, #tpu.memory_space<vmem>>, %arg6: memref<3x128xf32, #tpu.memory_space<vmem>>, %arg7: memref<4x128x128xf32, #tpu.memory_space<vmem>>, %arg8: memref<4x128xf32, #tpu.memory_space<vmem>>, %arg9: memref<4x128x128xf32, #tpu.memory_space<vmem>>, %arg10: memref<4x128xf32, #tpu.memory_space<vmem>>, %arg11: memref<128x256xf32, #tpu.memory_space<vmem>>, %arg12: memref<1x256xf32, #tpu.memory_space<vmem>>, %arg13: memref<256x128xf32, #tpu.memory_space<vmem>>, %arg14: memref<1x128xf32, #tpu.memory_space<vmem>>, %arg15: memref<1x8x128xf32, #tpu.memory_space<vmem>>) attributes {dimension_semantics = [#tpu.dimension_semantics<parallel>], iteration_bounds = array<i64: 2>, scalar_prefetch = 0 : i64, scratch_operands = 0 : i64, tpu.core_type = #tpu.core_type<tc>, window_params = [{transform_indices = @transform_0, window_bounds = array<i64: 1, 8, 128>}, {transform_indices = @transform_1, window_bounds = array<i64: 1, 16, 128>}, {transform_indices = @transform_2, window_bounds = array<i64: 1, 8, 8>}, {transform_indices = @transform_3, window_bounds = array<i64: 1, 8, 16>}, {pipeline_mode = #tpu.pipeline_mode<synchronous>, transform_indices = @transform_4, window_bounds = array<i64: 3, 128>}, {pipeline_mode = #tpu.pipeline_mode<synchronous>, transform_indices = @transform_5, window_bounds = array<i64: 3, 128>}, {pipeline_mode = #tpu.pipeline_mode<synchronous>, transform_indices = @transform_6, window_bounds = array<i64: 4, 128, 128>}, {pipeline_mode = #tpu.pipeline_mode<synchronous>, transform_indices = @transform_7, window_bounds = array<i64: 4, 128>}, {pipeline_mode = #tpu.pipeline_mode<synchronous>, transform_indices = @transform_8, window_bounds = array<i64: 4, 128, 128>}, {pipeline_mode = #tpu.pipeline_mode<synchronous>, transform_indices = @transform_9, window_bounds = array<i64: 4, 128>}, {pipeline_mode = #tpu.pipeline_mode<synchronous>, transform_indices = @transform_10, window_bounds = array<i64: 128, 256>}, {pipeline_mode = #tpu.pipeline_mode<synchronous>, transform_indices = @transform_11, window_bounds = array<i64: 1, 256>}, {pipeline_mode = #tpu.pipeline_mode<synchronous>, transform_indices = @transform_12, window_bounds = array<i64: 256, 128>}, {pipeline_mode = #tpu.pipeline_mode<synchronous>, transform_indices = @transform_13, window_bounds = array<i64: 1, 128>}, {transform_indices = @transform_14, window_bounds = array<i64: 1, 8, 128>}]} {
    %c0 = arith.constant 0 : index
    %c0_0 = arith.constant 0 : index
    %c0_1 = arith.constant 0 : index
    %0 = vector.load %arg1[%c0, %c0_0, %c0_1] : memref<1x8x128xf32, #tpu.memory_space<vmem>>, vector<1x8x128xf32>
    %1 = vector.shape_cast %0 : vector<1x8x128xf32> to vector<8x128xf32>
    %c0_2 = arith.constant 0 : index
    %c0_3 = arith.constant 0 : index
    %c0_4 = arith.constant 0 : index
    %2 = vector.load %arg2[%c0_2, %c0_3, %c0_4] : memref<1x16x128xf32, #tpu.memory_space<vmem>>, vector<1x16x128xf32>
    %3 = vector.shape_cast %2 : vector<1x16x128xf32> to vector<16x128xf32>
    %c0_5 = arith.constant 0 : index
    %c0_6 = arith.constant 0 : index
    %c0_7 = arith.constant 0 : index
    %4 = vector.load %arg3[%c0_5, %c0_6, %c0_7] : memref<1x8x8xi32, #tpu.memory_space<vmem>>, vector<1x8x8xi32>
    %5 = vector.shape_cast %4 : vector<1x8x8xi32> to vector<8x8xi32>
    %c0_8 = arith.constant 0 : index
    %c0_9 = arith.constant 0 : index
    %c0_10 = arith.constant 0 : index
    %6 = vector.load %arg4[%c0_8, %c0_9, %c0_10] : memref<1x8x16xi32, #tpu.memory_space<vmem>>, vector<1x8x16xi32>
    %7 = vector.shape_cast %6 : vector<1x8x16xi32> to vector<8x16xi32>
    %c0_11 = arith.constant 0 : index
    %c0_12 = arith.constant 0 : index
    %8 = vector.load %arg5[%c0_11, %c0_12] : memref<3x128xf32, #tpu.memory_space<vmem>>, vector<1x128xf32>
    %c0_13 = arith.constant 0 : index
    %c0_14 = arith.constant 0 : index
    %9 = vector.load %arg6[%c0_13, %c0_14] : memref<3x128xf32, #tpu.memory_space<vmem>>, vector<1x128xf32>
    %cst = arith.constant dense<0.000000e+00> : vector<8xf32>
    %10 = vector.multi_reduction <add>, %1, %cst [1] : vector<8x128xf32> to vector<8xf32>
    %11 = vector.shape_cast %10 : vector<8xf32> to vector<8x1xf32>
    %cst_15 = arith.constant 1.280000e+02 : f32
    %12 = vector.broadcast %cst_15 : f32 to vector<8x1xf32>
    %13 = arith.divf %11, %12 : vector<8x1xf32>
    %14 = vector.broadcast %13 : vector<8x1xf32> to vector<8x128xf32>
    %15 = arith.subf %1, %14 : vector<8x128xf32>
    %16 = arith.mulf %15, %15 : vector<8x128xf32>
    %cst_16 = arith.constant dense<0.000000e+00> : vector<8xf32>
    %17 = vector.multi_reduction <add>, %16, %cst_16 [1] : vector<8x128xf32> to vector<8xf32>
    %18 = vector.shape_cast %17 : vector<8xf32> to vector<8x1xf32>
    %cst_17 = arith.constant 1.270000e+02 : f32
    %19 = vector.broadcast %cst_17 : f32 to vector<8x1xf32>
    %20 = arith.divf %18, %19 : vector<8x1xf32>
    %21 = math.sqrt %20 : vector<8x1xf32>
    %22 = vector.broadcast %8 : vector<1x128xf32> to vector<8x128xf32>
    %23 = arith.mulf %22, %15 : vector<8x128xf32>
    %cst_18 = arith.constant 9.99999997E-7 : f32
    %24 = vector.broadcast %cst_18 : f32 to vector<8x1xf32>
    %25 = arith.addf %21, %24 : vector<8x1xf32>
    %26 = vector.broadcast %25 : vector<8x1xf32> to vector<8x128xf32>
    %27 = arith.divf %23, %26 : vector<8x128xf32>
    %28 = vector.broadcast %9 : vector<1x128xf32> to vector<8x128xf32>
    %29 = arith.addf %27, %28 : vector<8x128xf32>
    %c0_19 = arith.constant 0 : index
    %c0_20 = arith.constant 0 : index
    %c0_21 = arith.constant 0 : index
    %30 = vector.load %arg7[%c0_19, %c0_20, %c0_21] : memref<4x128x128xf32, #tpu.memory_space<vmem>>, vector<1x128x128xf32>
    %31 = vector.shape_cast %30 : vector<1x128x128xf32> to vector<128x128xf32>
    %c0_22 = arith.constant 0 : index
    %c0_23 = arith.constant 0 : index
    %32 = vector.load %arg8[%c0_22, %c0_23] : memref<4x128xf32, #tpu.memory_space<vmem>>, vector<1x128xf32>
    %cst_24 = arith.constant dense<0.000000e+00> : vector<8x128xf32>
    %33 = tpu.matmul %29, %31, %cst_24 {dimension_numbers = #tpu.dot_dimension_numbers<[1], [0], [0], [1], [0, 0, 1, 1], [], []>} : vector<8x128xf32>, vector<128x128xf32>, vector<8x128xf32> -> vector<8x128xf32>
    %34 = vector.broadcast %32 : vector<1x128xf32> to vector<8x128xf32>
    %35 = arith.addf %33, %34 : vector<8x128xf32>
    %c1 = arith.constant 1 : index
    %c0_25 = arith.constant 0 : index
    %c0_26 = arith.constant 0 : index
    %36 = vector.load %arg7[%c1, %c0_25, %c0_26] : memref<4x128x128xf32, #tpu.memory_space<vmem>>, vector<1x128x128xf32>
    %37 = vector.shape_cast %36 : vector<1x128x128xf32> to vector<128x128xf32>
    %c1_27 = arith.constant 1 : index
    %c0_28 = arith.constant 0 : index
    %38 = vector.load %arg8[%c1_27, %c0_28] : memref<4x128xf32, #tpu.memory_space<vmem>>, vector<1x128xf32>
    %cst_29 = arith.constant dense<0.000000e+00> : vector<8x128xf32>
    %39 = tpu.matmul %29, %37, %cst_29 {dimension_numbers = #tpu.dot_dimension_numbers<[1], [0], [0], [1], [0, 0, 1, 1], [], []>} : vector<8x128xf32>, vector<128x128xf32>, vector<8x128xf32> -> vector<8x128xf32>
    %40 = vector.broadcast %38 : vector<1x128xf32> to vector<8x128xf32>
    %41 = arith.addf %39, %40 : vector<8x128xf32>
    %c2 = arith.constant 2 : index
    %c0_30 = arith.constant 0 : index
    %c0_31 = arith.constant 0 : index
    %42 = vector.load %arg7[%c2, %c0_30, %c0_31] : memref<4x128x128xf32, #tpu.memory_space<vmem>>, vector<1x128x128xf32>
    %43 = vector.shape_cast %42 : vector<1x128x128xf32> to vector<128x128xf32>
    %c2_32 = arith.constant 2 : index
    %c0_33 = arith.constant 0 : index
    %44 = vector.load %arg8[%c2_32, %c0_33] : memref<4x128xf32, #tpu.memory_space<vmem>>, vector<1x128xf32>
    %cst_34 = arith.constant dense<0.000000e+00> : vector<8x128xf32>
    %45 = tpu.matmul %29, %43, %cst_34 {dimension_numbers = #tpu.dot_dimension_numbers<[1], [0], [0], [1], [0, 0, 1, 1], [], []>} : vector<8x128xf32>, vector<128x128xf32>, vector<8x128xf32> -> vector<8x128xf32>
    %46 = vector.broadcast %44 : vector<1x128xf32> to vector<8x128xf32>
    %47 = arith.addf %45, %46 : vector<8x128xf32>
    %48 = vector.extract_strided_slice %35 {offsets = [0, 0], sizes = [8, 32], strides = [1, 1]} : vector<8x128xf32> to vector<8x32xf32>
    %49 = vector.extract_strided_slice %41 {offsets = [0, 0], sizes = [8, 32], strides = [1, 1]} : vector<8x128xf32> to vector<8x32xf32>
    %50 = vector.extract_strided_slice %47 {offsets = [0, 0], sizes = [8, 32], strides = [1, 1]} : vector<8x128xf32> to vector<8x32xf32>
    %cst_35 = arith.constant dense<0.000000e+00> : vector<8x8xf32>
    %51 = tpu.matmul %48, %49, %cst_35 {dimension_numbers = #tpu.dot_dimension_numbers<[1], [1], [0], [0], [0, 0, 1, 0], [], []>} : vector<8x32xf32>, vector<8x32xf32>, vector<8x8xf32> -> vector<8x8xf32>
    %cst_36 = arith.constant 0.176776692 : f32
    %52 = vector.broadcast %cst_36 : f32 to vector<8x8xf32>
    %53 = arith.mulf %51, %52 : vector<8x8xf32>
    %c0_i32 = arith.constant 0 : i32
    %54 = vector.broadcast %c0_i32 : i32 to vector<8x8xi32>
    %55 = arith.cmpi eq, %5, %54 : vector<8x8xi32>
    %cst_37 = arith.constant -1.000000e+09 : f32
    %56 = vector.broadcast %cst_37 : f32 to vector<8x8xf32>
    %57 = arith.select %55, %56, %53 : vector<8x8xi1>, vector<8x8xf32>
    %cst_38 = arith.constant dense<0xFF800000> : vector<8xf32>
    %58 = vector.multi_reduction <maximumf>, %57, %cst_38 [1] : vector<8x8xf32> to vector<8xf32>
    %59 = vector.shape_cast %58 : vector<8xf32> to vector<8x1xf32>
    %60 = vector.broadcast %59 : vector<8x1xf32> to vector<8x8xf32>
    %61 = arith.subf %57, %60 : vector<8x8xf32>
    %62 = math.exp %61 : vector<8x8xf32>
    %cst_39 = arith.constant dense<0.000000e+00> : vector<8xf32>
    %63 = vector.multi_reduction <add>, %62, %cst_39 [1] : vector<8x8xf32> to vector<8xf32>
    %64 = vector.shape_cast %63 : vector<8xf32> to vector<8x1xf32>
    %65 = vector.broadcast %64 : vector<8x1xf32> to vector<8x8xf32>
    %66 = arith.divf %62, %65 : vector<8x8xf32>
    %cst_40 = arith.constant dense<0.000000e+00> : vector<8x32xf32>
    %67 = tpu.matmul %66, %50, %cst_40 {dimension_numbers = #tpu.dot_dimension_numbers<[1], [0], [0], [1], [0, 0, 1, 1], [], []>} : vector<8x8xf32>, vector<8x32xf32>, vector<8x32xf32> -> vector<8x32xf32>
    %68 = vector.extract_strided_slice %35 {offsets = [0, 32], sizes = [8, 32], strides = [1, 1]} : vector<8x128xf32> to vector<8x32xf32>
    %69 = vector.extract_strided_slice %41 {offsets = [0, 32], sizes = [8, 32], strides = [1, 1]} : vector<8x128xf32> to vector<8x32xf32>
    %70 = vector.extract_strided_slice %47 {offsets = [0, 32], sizes = [8, 32], strides = [1, 1]} : vector<8x128xf32> to vector<8x32xf32>
    %cst_41 = arith.constant dense<0.000000e+00> : vector<8x8xf32>
    %71 = tpu.matmul %68, %69, %cst_41 {dimension_numbers = #tpu.dot_dimension_numbers<[1], [1], [0], [0], [0, 0, 1, 0], [], []>} : vector<8x32xf32>, vector<8x32xf32>, vector<8x8xf32> -> vector<8x8xf32>
    %cst_42 = arith.constant 0.176776692 : f32
    %72 = vector.broadcast %cst_42 : f32 to vector<8x8xf32>
    %73 = arith.mulf %71, %72 : vector<8x8xf32>
    %c0_i32_43 = arith.constant 0 : i32
    %74 = vector.broadcast %c0_i32_43 : i32 to vector<8x8xi32>
    %75 = arith.cmpi eq, %5, %74 : vector<8x8xi32>
    %cst_44 = arith.constant -1.000000e+09 : f32
    %76 = vector.broadcast %cst_44 : f32 to vector<8x8xf32>
    %77 = arith.select %75, %76, %73 : vector<8x8xi1>, vector<8x8xf32>
    %cst_45 = arith.constant dense<0xFF800000> : vector<8xf32>
    %78 = vector.multi_reduction <maximumf>, %77, %cst_45 [1] : vector<8x8xf32> to vector<8xf32>
    %79 = vector.shape_cast %78 : vector<8xf32> to vector<8x1xf32>
    %80 = vector.broadcast %79 : vector<8x1xf32> to vector<8x8xf32>
    %81 = arith.subf %77, %80 : vector<8x8xf32>
    %82 = math.exp %81 : vector<8x8xf32>
    %cst_46 = arith.constant dense<0.000000e+00> : vector<8xf32>
    %83 = vector.multi_reduction <add>, %82, %cst_46 [1] : vector<8x8xf32> to vector<8xf32>
    %84 = vector.shape_cast %83 : vector<8xf32> to vector<8x1xf32>
    %85 = vector.broadcast %84 : vector<8x1xf32> to vector<8x8xf32>
    %86 = arith.divf %82, %85 : vector<8x8xf32>
    %cst_47 = arith.constant dense<0.000000e+00> : vector<8x32xf32>
    %87 = tpu.matmul %86, %70, %cst_47 {dimension_numbers = #tpu.dot_dimension_numbers<[1], [0], [0], [1], [0, 0, 1, 1], [], []>} : vector<8x8xf32>, vector<8x32xf32>, vector<8x32xf32> -> vector<8x32xf32>
    %88 = vector.extract_strided_slice %35 {offsets = [0, 64], sizes = [8, 32], strides = [1, 1]} : vector<8x128xf32> to vector<8x32xf32>
    %89 = vector.extract_strided_slice %41 {offsets = [0, 64], sizes = [8, 32], strides = [1, 1]} : vector<8x128xf32> to vector<8x32xf32>
    %90 = vector.extract_strided_slice %47 {offsets = [0, 64], sizes = [8, 32], strides = [1, 1]} : vector<8x128xf32> to vector<8x32xf32>
    %cst_48 = arith.constant dense<0.000000e+00> : vector<8x8xf32>
    %91 = tpu.matmul %88, %89, %cst_48 {dimension_numbers = #tpu.dot_dimension_numbers<[1], [1], [0], [0], [0, 0, 1, 0], [], []>} : vector<8x32xf32>, vector<8x32xf32>, vector<8x8xf32> -> vector<8x8xf32>
    %cst_49 = arith.constant 0.176776692 : f32
    %92 = vector.broadcast %cst_49 : f32 to vector<8x8xf32>
    %93 = arith.mulf %91, %92 : vector<8x8xf32>
    %c0_i32_50 = arith.constant 0 : i32
    %94 = vector.broadcast %c0_i32_50 : i32 to vector<8x8xi32>
    %95 = arith.cmpi eq, %5, %94 : vector<8x8xi32>
    %cst_51 = arith.constant -1.000000e+09 : f32
    %96 = vector.broadcast %cst_51 : f32 to vector<8x8xf32>
    %97 = arith.select %95, %96, %93 : vector<8x8xi1>, vector<8x8xf32>
    %cst_52 = arith.constant dense<0xFF800000> : vector<8xf32>
    %98 = vector.multi_reduction <maximumf>, %97, %cst_52 [1] : vector<8x8xf32> to vector<8xf32>
    %99 = vector.shape_cast %98 : vector<8xf32> to vector<8x1xf32>
    %100 = vector.broadcast %99 : vector<8x1xf32> to vector<8x8xf32>
    %101 = arith.subf %97, %100 : vector<8x8xf32>
    %102 = math.exp %101 : vector<8x8xf32>
    %cst_53 = arith.constant dense<0.000000e+00> : vector<8xf32>
    %103 = vector.multi_reduction <add>, %102, %cst_53 [1] : vector<8x8xf32> to vector<8xf32>
    %104 = vector.shape_cast %103 : vector<8xf32> to vector<8x1xf32>
    %105 = vector.broadcast %104 : vector<8x1xf32> to vector<8x8xf32>
    %106 = arith.divf %102, %105 : vector<8x8xf32>
    %cst_54 = arith.constant dense<0.000000e+00> : vector<8x32xf32>
    %107 = tpu.matmul %106, %90, %cst_54 {dimension_numbers = #tpu.dot_dimension_numbers<[1], [0], [0], [1], [0, 0, 1, 1], [], []>} : vector<8x8xf32>, vector<8x32xf32>, vector<8x32xf32> -> vector<8x32xf32>
    %108 = vector.extract_strided_slice %35 {offsets = [0, 96], sizes = [8, 32], strides = [1, 1]} : vector<8x128xf32> to vector<8x32xf32>
    %109 = vector.extract_strided_slice %41 {offsets = [0, 96], sizes = [8, 32], strides = [1, 1]} : vector<8x128xf32> to vector<8x32xf32>
    %110 = vector.extract_strided_slice %47 {offsets = [0, 96], sizes = [8, 32], strides = [1, 1]} : vector<8x128xf32> to vector<8x32xf32>
    %cst_55 = arith.constant dense<0.000000e+00> : vector<8x8xf32>
    %111 = tpu.matmul %108, %109, %cst_55 {dimension_numbers = #tpu.dot_dimension_numbers<[1], [1], [0], [0], [0, 0, 1, 0], [], []>} : vector<8x32xf32>, vector<8x32xf32>, vector<8x8xf32> -> vector<8x8xf32>
    %cst_56 = arith.constant 0.176776692 : f32
    %112 = vector.broadcast %cst_56 : f32 to vector<8x8xf32>
    %113 = arith.mulf %111, %112 : vector<8x8xf32>
    %c0_i32_57 = arith.constant 0 : i32
    %114 = vector.broadcast %c0_i32_57 : i32 to vector<8x8xi32>
    %115 = arith.cmpi eq, %5, %114 : vector<8x8xi32>
    %cst_58 = arith.constant -1.000000e+09 : f32
    %116 = vector.broadcast %cst_58 : f32 to vector<8x8xf32>
    %117 = arith.select %115, %116, %113 : vector<8x8xi1>, vector<8x8xf32>
    %cst_59 = arith.constant dense<0xFF800000> : vector<8xf32>
    %118 = vector.multi_reduction <maximumf>, %117, %cst_59 [1] : vector<8x8xf32> to vector<8xf32>
    %119 = vector.shape_cast %118 : vector<8xf32> to vector<8x1xf32>
    %120 = vector.broadcast %119 : vector<8x1xf32> to vector<8x8xf32>
    %121 = arith.subf %117, %120 : vector<8x8xf32>
    %122 = math.exp %121 : vector<8x8xf32>
    %cst_60 = arith.constant dense<0.000000e+00> : vector<8xf32>
    %123 = vector.multi_reduction <add>, %122, %cst_60 [1] : vector<8x8xf32> to vector<8xf32>
    %124 = vector.shape_cast %123 : vector<8xf32> to vector<8x1xf32>
    %125 = vector.broadcast %124 : vector<8x1xf32> to vector<8x8xf32>
    %126 = arith.divf %122, %125 : vector<8x8xf32>
    %cst_61 = arith.constant dense<0.000000e+00> : vector<8x32xf32>
    %127 = tpu.matmul %126, %110, %cst_61 {dimension_numbers = #tpu.dot_dimension_numbers<[1], [0], [0], [1], [0, 0, 1, 1], [], []>} : vector<8x8xf32>, vector<8x32xf32>, vector<8x32xf32> -> vector<8x32xf32>
    %128 = tpu.concatenate %67, %87, %107, %127 in 1 : vector<8x32xf32>, vector<8x32xf32>, vector<8x32xf32>, vector<8x32xf32> -> vector<8x128xf32>
    %c3 = arith.constant 3 : index
    %c0_62 = arith.constant 0 : index
    %c0_63 = arith.constant 0 : index
    %129 = vector.load %arg7[%c3, %c0_62, %c0_63] : memref<4x128x128xf32, #tpu.memory_space<vmem>>, vector<1x128x128xf32>
    %130 = vector.shape_cast %129 : vector<1x128x128xf32> to vector<128x128xf32>
    %c3_64 = arith.constant 3 : index
    %c0_65 = arith.constant 0 : index
    %131 = vector.load %arg8[%c3_64, %c0_65] : memref<4x128xf32, #tpu.memory_space<vmem>>, vector<1x128xf32>
    %cst_66 = arith.constant dense<0.000000e+00> : vector<8x128xf32>
    %132 = tpu.matmul %128, %130, %cst_66 {dimension_numbers = #tpu.dot_dimension_numbers<[1], [0], [0], [1], [0, 0, 1, 1], [], []>} : vector<8x128xf32>, vector<128x128xf32>, vector<8x128xf32> -> vector<8x128xf32>
    %133 = vector.broadcast %131 : vector<1x128xf32> to vector<8x128xf32>
    %134 = arith.addf %132, %133 : vector<8x128xf32>
    %135 = arith.addf %1, %134 : vector<8x128xf32>
    %c1_67 = arith.constant 1 : index
    %c0_68 = arith.constant 0 : index
    %136 = vector.load %arg5[%c1_67, %c0_68] : memref<3x128xf32, #tpu.memory_space<vmem>>, vector<1x128xf32>
    %c1_69 = arith.constant 1 : index
    %c0_70 = arith.constant 0 : index
    %137 = vector.load %arg6[%c1_69, %c0_70] : memref<3x128xf32, #tpu.memory_space<vmem>>, vector<1x128xf32>
    %cst_71 = arith.constant dense<0.000000e+00> : vector<8xf32>
    %138 = vector.multi_reduction <add>, %135, %cst_71 [1] : vector<8x128xf32> to vector<8xf32>
    %139 = vector.shape_cast %138 : vector<8xf32> to vector<8x1xf32>
    %cst_72 = arith.constant 1.280000e+02 : f32
    %140 = vector.broadcast %cst_72 : f32 to vector<8x1xf32>
    %141 = arith.divf %139, %140 : vector<8x1xf32>
    %142 = vector.broadcast %141 : vector<8x1xf32> to vector<8x128xf32>
    %143 = arith.subf %135, %142 : vector<8x128xf32>
    %144 = arith.mulf %143, %143 : vector<8x128xf32>
    %cst_73 = arith.constant dense<0.000000e+00> : vector<8xf32>
    %145 = vector.multi_reduction <add>, %144, %cst_73 [1] : vector<8x128xf32> to vector<8xf32>
    %146 = vector.shape_cast %145 : vector<8xf32> to vector<8x1xf32>
    %cst_74 = arith.constant 1.270000e+02 : f32
    %147 = vector.broadcast %cst_74 : f32 to vector<8x1xf32>
    %148 = arith.divf %146, %147 : vector<8x1xf32>
    %149 = math.sqrt %148 : vector<8x1xf32>
    %150 = vector.broadcast %136 : vector<1x128xf32> to vector<8x128xf32>
    %151 = arith.mulf %150, %143 : vector<8x128xf32>
    %cst_75 = arith.constant 9.99999997E-7 : f32
    %152 = vector.broadcast %cst_75 : f32 to vector<8x1xf32>
    %153 = arith.addf %149, %152 : vector<8x1xf32>
    %154 = vector.broadcast %153 : vector<8x1xf32> to vector<8x128xf32>
    %155 = arith.divf %151, %154 : vector<8x128xf32>
    %156 = vector.broadcast %137 : vector<1x128xf32> to vector<8x128xf32>
    %157 = arith.addf %155, %156 : vector<8x128xf32>
    %c0_76 = arith.constant 0 : index
    %c0_77 = arith.constant 0 : index
    %c0_78 = arith.constant 0 : index
    %158 = vector.load %arg9[%c0_76, %c0_77, %c0_78] : memref<4x128x128xf32, #tpu.memory_space<vmem>>, vector<1x128x128xf32>
    %159 = vector.shape_cast %158 : vector<1x128x128xf32> to vector<128x128xf32>
    %c0_79 = arith.constant 0 : index
    %c0_80 = arith.constant 0 : index
    %160 = vector.load %arg10[%c0_79, %c0_80] : memref<4x128xf32, #tpu.memory_space<vmem>>, vector<1x128xf32>
    %cst_81 = arith.constant dense<0.000000e+00> : vector<8x128xf32>
    %161 = tpu.matmul %157, %159, %cst_81 {dimension_numbers = #tpu.dot_dimension_numbers<[1], [0], [0], [1], [0, 0, 1, 1], [], []>} : vector<8x128xf32>, vector<128x128xf32>, vector<8x128xf32> -> vector<8x128xf32>
    %162 = vector.broadcast %160 : vector<1x128xf32> to vector<8x128xf32>
    %163 = arith.addf %161, %162 : vector<8x128xf32>
    %c1_82 = arith.constant 1 : index
    %c0_83 = arith.constant 0 : index
    %c0_84 = arith.constant 0 : index
    %164 = vector.load %arg9[%c1_82, %c0_83, %c0_84] : memref<4x128x128xf32, #tpu.memory_space<vmem>>, vector<1x128x128xf32>
    %165 = vector.shape_cast %164 : vector<1x128x128xf32> to vector<128x128xf32>
    %c1_85 = arith.constant 1 : index
    %c0_86 = arith.constant 0 : index
    %166 = vector.load %arg10[%c1_85, %c0_86] : memref<4x128xf32, #tpu.memory_space<vmem>>, vector<1x128xf32>
    %cst_87 = arith.constant dense<0.000000e+00> : vector<16x128xf32>
    %167 = tpu.matmul %3, %165, %cst_87 {dimension_numbers = #tpu.dot_dimension_numbers<[1], [0], [0], [1], [0, 0, 1, 1], [], []>} : vector<16x128xf32>, vector<128x128xf32>, vector<16x128xf32> -> vector<16x128xf32>
    %168 = vector.broadcast %166 : vector<1x128xf32> to vector<16x128xf32>
    %169 = arith.addf %167, %168 : vector<16x128xf32>
    %c2_88 = arith.constant 2 : index
    %c0_89 = arith.constant 0 : index
    %c0_90 = arith.constant 0 : index
    %170 = vector.load %arg9[%c2_88, %c0_89, %c0_90] : memref<4x128x128xf32, #tpu.memory_space<vmem>>, vector<1x128x128xf32>
    %171 = vector.shape_cast %170 : vector<1x128x128xf32> to vector<128x128xf32>
    %c2_91 = arith.constant 2 : index
    %c0_92 = arith.constant 0 : index
    %172 = vector.load %arg10[%c2_91, %c0_92] : memref<4x128xf32, #tpu.memory_space<vmem>>, vector<1x128xf32>
    %cst_93 = arith.constant dense<0.000000e+00> : vector<16x128xf32>
    %173 = tpu.matmul %3, %171, %cst_93 {dimension_numbers = #tpu.dot_dimension_numbers<[1], [0], [0], [1], [0, 0, 1, 1], [], []>} : vector<16x128xf32>, vector<128x128xf32>, vector<16x128xf32> -> vector<16x128xf32>
    %174 = vector.broadcast %172 : vector<1x128xf32> to vector<16x128xf32>
    %175 = arith.addf %173, %174 : vector<16x128xf32>
    %176 = vector.extract_strided_slice %163 {offsets = [0, 0], sizes = [8, 32], strides = [1, 1]} : vector<8x128xf32> to vector<8x32xf32>
    %177 = vector.extract_strided_slice %169 {offsets = [0, 0], sizes = [16, 32], strides = [1, 1]} : vector<16x128xf32> to vector<16x32xf32>
    %178 = vector.extract_strided_slice %175 {offsets = [0, 0], sizes = [16, 32], strides = [1, 1]} : vector<16x128xf32> to vector<16x32xf32>
    %cst_94 = arith.constant dense<0.000000e+00> : vector<8x16xf32>
    %179 = tpu.matmul %176, %177, %cst_94 {dimension_numbers = #tpu.dot_dimension_numbers<[1], [1], [0], [0], [0, 0, 1, 0], [], []>} : vector<8x32xf32>, vector<16x32xf32>, vector<8x16xf32> -> vector<8x16xf32>
    %cst_95 = arith.constant 0.176776692 : f32
    %180 = vector.broadcast %cst_95 : f32 to vector<8x16xf32>
    %181 = arith.mulf %179, %180 : vector<8x16xf32>
    %c0_i32_96 = arith.constant 0 : i32
    %182 = vector.broadcast %c0_i32_96 : i32 to vector<8x16xi32>
    %183 = arith.cmpi eq, %7, %182 : vector<8x16xi32>
    %cst_97 = arith.constant -1.000000e+09 : f32
    %184 = vector.broadcast %cst_97 : f32 to vector<8x16xf32>
    %185 = arith.select %183, %184, %181 : vector<8x16xi1>, vector<8x16xf32>
    %cst_98 = arith.constant dense<0xFF800000> : vector<8xf32>
    %186 = vector.multi_reduction <maximumf>, %185, %cst_98 [1] : vector<8x16xf32> to vector<8xf32>
    %187 = vector.shape_cast %186 : vector<8xf32> to vector<8x1xf32>
    %188 = vector.broadcast %187 : vector<8x1xf32> to vector<8x16xf32>
    %189 = arith.subf %185, %188 : vector<8x16xf32>
    %190 = math.exp %189 : vector<8x16xf32>
    %cst_99 = arith.constant dense<0.000000e+00> : vector<8xf32>
    %191 = vector.multi_reduction <add>, %190, %cst_99 [1] : vector<8x16xf32> to vector<8xf32>
    %192 = vector.shape_cast %191 : vector<8xf32> to vector<8x1xf32>
    %193 = vector.broadcast %192 : vector<8x1xf32> to vector<8x16xf32>
    %194 = arith.divf %190, %193 : vector<8x16xf32>
    %cst_100 = arith.constant dense<0.000000e+00> : vector<8x32xf32>
    %195 = tpu.matmul %194, %178, %cst_100 {dimension_numbers = #tpu.dot_dimension_numbers<[1], [0], [0], [1], [0, 0, 1, 1], [], []>} : vector<8x16xf32>, vector<16x32xf32>, vector<8x32xf32> -> vector<8x32xf32>
    %196 = vector.extract_strided_slice %163 {offsets = [0, 32], sizes = [8, 32], strides = [1, 1]} : vector<8x128xf32> to vector<8x32xf32>
    %197 = vector.extract_strided_slice %169 {offsets = [0, 32], sizes = [16, 32], strides = [1, 1]} : vector<16x128xf32> to vector<16x32xf32>
    %198 = vector.extract_strided_slice %175 {offsets = [0, 32], sizes = [16, 32], strides = [1, 1]} : vector<16x128xf32> to vector<16x32xf32>
    %cst_101 = arith.constant dense<0.000000e+00> : vector<8x16xf32>
    %199 = tpu.matmul %196, %197, %cst_101 {dimension_numbers = #tpu.dot_dimension_numbers<[1], [1], [0], [0], [0, 0, 1, 0], [], []>} : vector<8x32xf32>, vector<16x32xf32>, vector<8x16xf32> -> vector<8x16xf32>
    %cst_102 = arith.constant 0.176776692 : f32
    %200 = vector.broadcast %cst_102 : f32 to vector<8x16xf32>
    %201 = arith.mulf %199, %200 : vector<8x16xf32>
    %c0_i32_103 = arith.constant 0 : i32
    %202 = vector.broadcast %c0_i32_103 : i32 to vector<8x16xi32>
    %203 = arith.cmpi eq, %7, %202 : vector<8x16xi32>
    %cst_104 = arith.constant -1.000000e+09 : f32
    %204 = vector.broadcast %cst_104 : f32 to vector<8x16xf32>
    %205 = arith.select %203, %204, %201 : vector<8x16xi1>, vector<8x16xf32>
    %cst_105 = arith.constant dense<0xFF800000> : vector<8xf32>
    %206 = vector.multi_reduction <maximumf>, %205, %cst_105 [1] : vector<8x16xf32> to vector<8xf32>
    %207 = vector.shape_cast %206 : vector<8xf32> to vector<8x1xf32>
    %208 = vector.broadcast %207 : vector<8x1xf32> to vector<8x16xf32>
    %209 = arith.subf %205, %208 : vector<8x16xf32>
    %210 = math.exp %209 : vector<8x16xf32>
    %cst_106 = arith.constant dense<0.000000e+00> : vector<8xf32>
    %211 = vector.multi_reduction <add>, %210, %cst_106 [1] : vector<8x16xf32> to vector<8xf32>
    %212 = vector.shape_cast %211 : vector<8xf32> to vector<8x1xf32>
    %213 = vector.broadcast %212 : vector<8x1xf32> to vector<8x16xf32>
    %214 = arith.divf %210, %213 : vector<8x16xf32>
    %cst_107 = arith.constant dense<0.000000e+00> : vector<8x32xf32>
    %215 = tpu.matmul %214, %198, %cst_107 {dimension_numbers = #tpu.dot_dimension_numbers<[1], [0], [0], [1], [0, 0, 1, 1], [], []>} : vector<8x16xf32>, vector<16x32xf32>, vector<8x32xf32> -> vector<8x32xf32>
    %216 = vector.extract_strided_slice %163 {offsets = [0, 64], sizes = [8, 32], strides = [1, 1]} : vector<8x128xf32> to vector<8x32xf32>
    %217 = vector.extract_strided_slice %169 {offsets = [0, 64], sizes = [16, 32], strides = [1, 1]} : vector<16x128xf32> to vector<16x32xf32>
    %218 = vector.extract_strided_slice %175 {offsets = [0, 64], sizes = [16, 32], strides = [1, 1]} : vector<16x128xf32> to vector<16x32xf32>
    %cst_108 = arith.constant dense<0.000000e+00> : vector<8x16xf32>
    %219 = tpu.matmul %216, %217, %cst_108 {dimension_numbers = #tpu.dot_dimension_numbers<[1], [1], [0], [0], [0, 0, 1, 0], [], []>} : vector<8x32xf32>, vector<16x32xf32>, vector<8x16xf32> -> vector<8x16xf32>
    %cst_109 = arith.constant 0.176776692 : f32
    %220 = vector.broadcast %cst_109 : f32 to vector<8x16xf32>
    %221 = arith.mulf %219, %220 : vector<8x16xf32>
    %c0_i32_110 = arith.constant 0 : i32
    %222 = vector.broadcast %c0_i32_110 : i32 to vector<8x16xi32>
    %223 = arith.cmpi eq, %7, %222 : vector<8x16xi32>
    %cst_111 = arith.constant -1.000000e+09 : f32
    %224 = vector.broadcast %cst_111 : f32 to vector<8x16xf32>
    %225 = arith.select %223, %224, %221 : vector<8x16xi1>, vector<8x16xf32>
    %cst_112 = arith.constant dense<0xFF800000> : vector<8xf32>
    %226 = vector.multi_reduction <maximumf>, %225, %cst_112 [1] : vector<8x16xf32> to vector<8xf32>
    %227 = vector.shape_cast %226 : vector<8xf32> to vector<8x1xf32>
    %228 = vector.broadcast %227 : vector<8x1xf32> to vector<8x16xf32>
    %229 = arith.subf %225, %228 : vector<8x16xf32>
    %230 = math.exp %229 : vector<8x16xf32>
    %cst_113 = arith.constant dense<0.000000e+00> : vector<8xf32>
    %231 = vector.multi_reduction <add>, %230, %cst_113 [1] : vector<8x16xf32> to vector<8xf32>
    %232 = vector.shape_cast %231 : vector<8xf32> to vector<8x1xf32>
    %233 = vector.broadcast %232 : vector<8x1xf32> to vector<8x16xf32>
    %234 = arith.divf %230, %233 : vector<8x16xf32>
    %cst_114 = arith.constant dense<0.000000e+00> : vector<8x32xf32>
    %235 = tpu.matmul %234, %218, %cst_114 {dimension_numbers = #tpu.dot_dimension_numbers<[1], [0], [0], [1], [0, 0, 1, 1], [], []>} : vector<8x16xf32>, vector<16x32xf32>, vector<8x32xf32> -> vector<8x32xf32>
    %236 = vector.extract_strided_slice %163 {offsets = [0, 96], sizes = [8, 32], strides = [1, 1]} : vector<8x128xf32> to vector<8x32xf32>
    %237 = vector.extract_strided_slice %169 {offsets = [0, 96], sizes = [16, 32], strides = [1, 1]} : vector<16x128xf32> to vector<16x32xf32>
    %238 = vector.extract_strided_slice %175 {offsets = [0, 96], sizes = [16, 32], strides = [1, 1]} : vector<16x128xf32> to vector<16x32xf32>
    %cst_115 = arith.constant dense<0.000000e+00> : vector<8x16xf32>
    %239 = tpu.matmul %236, %237, %cst_115 {dimension_numbers = #tpu.dot_dimension_numbers<[1], [1], [0], [0], [0, 0, 1, 0], [], []>} : vector<8x32xf32>, vector<16x32xf32>, vector<8x16xf32> -> vector<8x16xf32>
    %cst_116 = arith.constant 0.176776692 : f32
    %240 = vector.broadcast %cst_116 : f32 to vector<8x16xf32>
    %241 = arith.mulf %239, %240 : vector<8x16xf32>
    %c0_i32_117 = arith.constant 0 : i32
    %242 = vector.broadcast %c0_i32_117 : i32 to vector<8x16xi32>
    %243 = arith.cmpi eq, %7, %242 : vector<8x16xi32>
    %cst_118 = arith.constant -1.000000e+09 : f32
    %244 = vector.broadcast %cst_118 : f32 to vector<8x16xf32>
    %245 = arith.select %243, %244, %241 : vector<8x16xi1>, vector<8x16xf32>
    %cst_119 = arith.constant dense<0xFF800000> : vector<8xf32>
    %246 = vector.multi_reduction <maximumf>, %245, %cst_119 [1] : vector<8x16xf32> to vector<8xf32>
    %247 = vector.shape_cast %246 : vector<8xf32> to vector<8x1xf32>
    %248 = vector.broadcast %247 : vector<8x1xf32> to vector<8x16xf32>
    %249 = arith.subf %245, %248 : vector<8x16xf32>
    %250 = math.exp %249 : vector<8x16xf32>
    %cst_120 = arith.constant dense<0.000000e+00> : vector<8xf32>
    %251 = vector.multi_reduction <add>, %250, %cst_120 [1] : vector<8x16xf32> to vector<8xf32>
    %252 = vector.shape_cast %251 : vector<8xf32> to vector<8x1xf32>
    %253 = vector.broadcast %252 : vector<8x1xf32> to vector<8x16xf32>
    %254 = arith.divf %250, %253 : vector<8x16xf32>
    %cst_121 = arith.constant dense<0.000000e+00> : vector<8x32xf32>
    %255 = tpu.matmul %254, %238, %cst_121 {dimension_numbers = #tpu.dot_dimension_numbers<[1], [0], [0], [1], [0, 0, 1, 1], [], []>} : vector<8x16xf32>, vector<16x32xf32>, vector<8x32xf32> -> vector<8x32xf32>
    %256 = tpu.concatenate %195, %215, %235, %255 in 1 : vector<8x32xf32>, vector<8x32xf32>, vector<8x32xf32>, vector<8x32xf32> -> vector<8x128xf32>
    %c3_122 = arith.constant 3 : index
    %c0_123 = arith.constant 0 : index
    %c0_124 = arith.constant 0 : index
    %257 = vector.load %arg9[%c3_122, %c0_123, %c0_124] : memref<4x128x128xf32, #tpu.memory_space<vmem>>, vector<1x128x128xf32>
    %258 = vector.shape_cast %257 : vector<1x128x128xf32> to vector<128x128xf32>
    %c3_125 = arith.constant 3 : index
    %c0_126 = arith.constant 0 : index
    %259 = vector.load %arg10[%c3_125, %c0_126] : memref<4x128xf32, #tpu.memory_space<vmem>>, vector<1x128xf32>
    %cst_127 = arith.constant dense<0.000000e+00> : vector<8x128xf32>
    %260 = tpu.matmul %256, %258, %cst_127 {dimension_numbers = #tpu.dot_dimension_numbers<[1], [0], [0], [1], [0, 0, 1, 1], [], []>} : vector<8x128xf32>, vector<128x128xf32>, vector<8x128xf32> -> vector<8x128xf32>
    %261 = vector.broadcast %259 : vector<1x128xf32> to vector<8x128xf32>
    %262 = arith.addf %260, %261 : vector<8x128xf32>
    %263 = arith.addf %135, %262 : vector<8x128xf32>
    %c2_128 = arith.constant 2 : index
    %c0_129 = arith.constant 0 : index
    %264 = vector.load %arg5[%c2_128, %c0_129] : memref<3x128xf32, #tpu.memory_space<vmem>>, vector<1x128xf32>
    %c2_130 = arith.constant 2 : index
    %c0_131 = arith.constant 0 : index
    %265 = vector.load %arg6[%c2_130, %c0_131] : memref<3x128xf32, #tpu.memory_space<vmem>>, vector<1x128xf32>
    %cst_132 = arith.constant dense<0.000000e+00> : vector<8xf32>
    %266 = vector.multi_reduction <add>, %263, %cst_132 [1] : vector<8x128xf32> to vector<8xf32>
    %267 = vector.shape_cast %266 : vector<8xf32> to vector<8x1xf32>
    %cst_133 = arith.constant 1.280000e+02 : f32
    %268 = vector.broadcast %cst_133 : f32 to vector<8x1xf32>
    %269 = arith.divf %267, %268 : vector<8x1xf32>
    %270 = vector.broadcast %269 : vector<8x1xf32> to vector<8x128xf32>
    %271 = arith.subf %263, %270 : vector<8x128xf32>
    %272 = arith.mulf %271, %271 : vector<8x128xf32>
    %cst_134 = arith.constant dense<0.000000e+00> : vector<8xf32>
    %273 = vector.multi_reduction <add>, %272, %cst_134 [1] : vector<8x128xf32> to vector<8xf32>
    %274 = vector.shape_cast %273 : vector<8xf32> to vector<8x1xf32>
    %cst_135 = arith.constant 1.270000e+02 : f32
    %275 = vector.broadcast %cst_135 : f32 to vector<8x1xf32>
    %276 = arith.divf %274, %275 : vector<8x1xf32>
    %277 = math.sqrt %276 : vector<8x1xf32>
    %278 = vector.broadcast %264 : vector<1x128xf32> to vector<8x128xf32>
    %279 = arith.mulf %278, %271 : vector<8x128xf32>
    %cst_136 = arith.constant 9.99999997E-7 : f32
    %280 = vector.broadcast %cst_136 : f32 to vector<8x1xf32>
    %281 = arith.addf %277, %280 : vector<8x1xf32>
    %282 = vector.broadcast %281 : vector<8x1xf32> to vector<8x128xf32>
    %283 = arith.divf %279, %282 : vector<8x128xf32>
    %284 = vector.broadcast %265 : vector<1x128xf32> to vector<8x128xf32>
    %285 = arith.addf %283, %284 : vector<8x128xf32>
    %c0_137 = arith.constant 0 : index
    %c0_138 = arith.constant 0 : index
    %286 = vector.load %arg11[%c0_137, %c0_138] : memref<128x256xf32, #tpu.memory_space<vmem>>, vector<128x256xf32>
    %cst_139 = arith.constant dense<0.000000e+00> : vector<8x256xf32>
    %287 = tpu.matmul %285, %286, %cst_139 {dimension_numbers = #tpu.dot_dimension_numbers<[1], [0], [0], [1], [0, 0, 1, 1], [], []>} : vector<8x128xf32>, vector<128x256xf32>, vector<8x256xf32> -> vector<8x256xf32>
    %c0_140 = arith.constant 0 : index
    %c0_141 = arith.constant 0 : index
    %288 = vector.load %arg12[%c0_140, %c0_141] : memref<1x256xf32, #tpu.memory_space<vmem>>, vector<1x256xf32>
    %289 = vector.broadcast %288 : vector<1x256xf32> to vector<8x256xf32>
    %290 = arith.addf %287, %289 : vector<8x256xf32>
    %cst_142 = arith.constant 0.000000e+00 : f32
    %291 = vector.broadcast %cst_142 : f32 to vector<8x256xf32>
    %292 = arith.maximumf %290, %291 : vector<8x256xf32>
    %c0_143 = arith.constant 0 : index
    %c0_144 = arith.constant 0 : index
    %293 = vector.load %arg13[%c0_143, %c0_144] : memref<256x128xf32, #tpu.memory_space<vmem>>, vector<256x128xf32>
    %cst_145 = arith.constant dense<0.000000e+00> : vector<8x128xf32>
    %294 = tpu.matmul %292, %293, %cst_145 {dimension_numbers = #tpu.dot_dimension_numbers<[1], [0], [0], [1], [0, 0, 1, 1], [], []>} : vector<8x256xf32>, vector<256x128xf32>, vector<8x128xf32> -> vector<8x128xf32>
    %c0_146 = arith.constant 0 : index
    %c0_147 = arith.constant 0 : index
    %295 = vector.load %arg14[%c0_146, %c0_147] : memref<1x128xf32, #tpu.memory_space<vmem>>, vector<1x128xf32>
    %296 = vector.broadcast %295 : vector<1x128xf32> to vector<8x128xf32>
    %297 = arith.addf %294, %296 : vector<8x128xf32>
    %298 = arith.addf %263, %297 : vector<8x128xf32>
    %c0_148 = arith.constant 0 : index
    %c0_149 = arith.constant 0 : index
    %c0_150 = arith.constant 0 : index
    %299 = vector.load %arg15[%c0_148, %c0_149, %c0_150] : memref<1x8x128xf32, #tpu.memory_space<vmem>>, vector<1x8x128xf32>
    %300 = vector.shape_cast %299 : vector<1x8x128xf32> to vector<8x128xf32>
    %301 = vector.shape_cast %298 : vector<8x128xf32> to vector<1x8x128xf32>
    tpu.vector_store %arg15[%c0_148, %c0_149, %c0_150], %301 {strides = array<i32>} : memref<1x8x128xf32, #tpu.memory_space<vmem>>, vector<1x8x128xf32>,
    return
  }
  func.func @transform_0(%arg0: i32) -> (i32, i32, i32) {
    %c0_i32 = arith.constant 0 : i32
    %c0_i32_0 = arith.constant 0 : i32
    %c0_i32_1 = arith.constant 0 : i32
    return %arg0, %c0_i32, %c0_i32_0 : i32, i32, i32
  }
  func.func @transform_1(%arg0: i32) -> (i32, i32, i32) {
    %c0_i32 = arith.constant 0 : i32
    %c0_i32_0 = arith.constant 0 : i32
    %c0_i32_1 = arith.constant 0 : i32
    return %arg0, %c0_i32, %c0_i32_0 : i32, i32, i32
  }
  func.func @transform_2(%arg0: i32) -> (i32, i32, i32) {
    %c0_i32 = arith.constant 0 : i32
    %c0_i32_0 = arith.constant 0 : i32
    %c0_i32_1 = arith.constant 0 : i32
    return %arg0, %c0_i32, %c0_i32_0 : i32, i32, i32
  }
  func.func @transform_3(%arg0: i32) -> (i32, i32, i32) {
    %c0_i32 = arith.constant 0 : i32
    %c0_i32_0 = arith.constant 0 : i32
    %c0_i32_1 = arith.constant 0 : i32
    return %arg0, %c0_i32, %c0_i32_0 : i32, i32, i32
  }
  func.func @transform_4(%arg0: i32) -> (i32, i32) {
    %c0_i32 = arith.constant 0 : i32
    %c0_i32_0 = arith.constant 0 : i32
    %c0_i32_1 = arith.constant 0 : i32
    return %c0_i32, %c0_i32_0 : i32, i32
  }
  func.func @transform_5(%arg0: i32) -> (i32, i32) {
    %c0_i32 = arith.constant 0 : i32
    %c0_i32_0 = arith.constant 0 : i32
    %c0_i32_1 = arith.constant 0 : i32
    return %c0_i32, %c0_i32_0 : i32, i32
  }
  func.func @transform_6(%arg0: i32) -> (i32, i32, i32) {
    %c0_i32 = arith.constant 0 : i32
    %c0_i32_0 = arith.constant 0 : i32
    %c0_i32_1 = arith.constant 0 : i32
    %c0_i32_2 = arith.constant 0 : i32
    return %c0_i32, %c0_i32_0, %c0_i32_1 : i32, i32, i32
  }
  func.func @transform_7(%arg0: i32) -> (i32, i32) {
    %c0_i32 = arith.constant 0 : i32
    %c0_i32_0 = arith.constant 0 : i32
    %c0_i32_1 = arith.constant 0 : i32
    return %c0_i32, %c0_i32_0 : i32, i32
  }
  func.func @transform_8(%arg0: i32) -> (i32, i32, i32) {
    %c0_i32 = arith.constant 0 : i32
    %c0_i32_0 = arith.constant 0 : i32
    %c0_i32_1 = arith.constant 0 : i32
    %c0_i32_2 = arith.constant 0 : i32
    return %c0_i32, %c0_i32_0, %c0_i32_1 : i32, i32, i32
  }
  func.func @transform_9(%arg0: i32) -> (i32, i32) {
    %c0_i32 = arith.constant 0 : i32
    %c0_i32_0 = arith.constant 0 : i32
    %c0_i32_1 = arith.constant 0 : i32
    return %c0_i32, %c0_i32_0 : i32, i32
  }
  func.func @transform_10(%arg0: i32) -> (i32, i32) {
    %c0_i32 = arith.constant 0 : i32
    %c0_i32_0 = arith.constant 0 : i32
    %c0_i32_1 = arith.constant 0 : i32
    return %c0_i32, %c0_i32_0 : i32, i32
  }
  func.func @transform_11(%arg0: i32) -> (i32, i32) {
    %c0_i32 = arith.constant 0 : i32
    %c0_i32_0 = arith.constant 0 : i32
    %c0_i32_1 = arith.constant 0 : i32
    return %c0_i32, %c0_i32_0 : i32, i32
  }
  func.func @transform_12(%arg0: i32) -> (i32, i32) {
    %c0_i32 = arith.constant 0 : i32
    %c0_i32_0 = arith.constant 0 : i32
    %c0_i32_1 = arith.constant 0 : i32
    return %c0_i32, %c0_i32_0 : i32, i32
  }
  func.func @transform_13(%arg0: i32) -> (i32, i32) {
    %c0_i32 = arith.constant 0 : i32
    %c0_i32_0 = arith.constant 0 : i32
    %c0_i32_1 = arith.constant 0 : i32
    return %c0_i32, %c0_i32_0 : i32, i32
  }
  func.func @transform_14(%arg0: i32) -> (i32, i32, i32) {
    %c0_i32 = arith.constant 0 : i32
    %c0_i32_0 = arith.constant 0 : i32
    %c0_i32_1 = arith.constant 0 : i32
    return %arg0, %c0_i32, %c0_i32_0 : i32, i32, i32
  }
}

</mosaic_0001>

<llo_original>
// kernel: tpu_custom_call.1
$region0: #{tpu_custom_call.1}
  #allocation0 [shape = 'u32[]', space=smem, size = 0x4, offset = 0x4, fixed_abs, tag = 'smem constant byte address 0x4 - core index']
  #allocation1 [shape = 'u32[144,128]{1,0:T(1,128)}', space=vmem, size = 0x12000, scoped, tag = 'internal scratch']
  %s0 = inlined_call_operand.hbm [shape: f32[2,8,128], index: 0, kind: input, shape index: {}]
  %s1 = inlined_call_operand.hbm [shape: f32[2,16,128], index: 1, kind: input, shape index: {}]
  %s2 = inlined_call_operand.hbm [shape: s32[2,8,8], index: 2, kind: input, shape index: {}]
  %s3 = inlined_call_operand.hbm [shape: s32[2,8,16], index: 3, kind: input, shape index: {}]
  %s4 = inlined_call_operand.vmem [shape: f32[3,128], index: 4, kind: input, shape index: {}]
  %s5 = inlined_call_operand.vmem [shape: f32[3,128], index: 5, kind: input, shape index: {}]
  %s6 = inlined_call_operand.hbm [shape: f32[4,128,128], index: 6, kind: input, shape index: {}]
  %s7 = inlined_call_operand.vmem [shape: f32[4,128], index: 7, kind: input, shape index: {}]
  %s8 = inlined_call_operand.hbm [shape: f32[4,128,128], index: 8, kind: input, shape index: {}]
  %s9 = inlined_call_operand.vmem [shape: f32[4,128], index: 9, kind: input, shape index: {}]
  %s10 = inlined_call_operand.hbm [shape: f32[128,256], index: 10, kind: input, shape index: {}]
  %s11 = inlined_call_operand.vmem [shape: f32[1,256], index: 11, kind: input, shape index: {}]
  %s12 = inlined_call_operand.hbm [shape: f32[256,128], index: 12, kind: input, shape index: {}]
  %s13 = inlined_call_operand.vmem [shape: f32[1,128], index: 13, kind: input, shape index: {}]
  %s14 = inlined_call_operand.hbm [shape: f32[2,8,128], index: 14, kind: output, shape index: {}]
  %s15 = sld [smem:[#allocation0]]
  $region121: #{tpu_custom_call.1} parent=0
    _
  %s17 = ssub.s32 1, %s15
  %s18 = scalar_select 0, %s17, %s15
  $region1: #{tpu_custom_call.1} parent=0
    #allocation2 [shape = 'u8[8192]{0}', space=vmem, size = 0x2000, scoped, tag = 'input window, operand 0']
    #allocation3 [shape = 's32[2]{0}', space=sflag, size = 0x8, scoped, tag = 'scoped memory for tpu_custom_call.1']
    #allocation4 [shape = 's32[2]{0}', space=sflag, size = 0x8, scoped, tag = 'scoped memory for tpu_custom_call.1']
    #allocation5 [shape = 'u8[16384]{0}', space=vmem, size = 0x4000, scoped, tag = 'input window, operand 1']
    #allocation6 [shape = 's32[2]{0}', space=sflag, size = 0x8, scoped, tag = 'scoped memory for tpu_custom_call.1']
    #allocation7 [shape = 'u8[8192]{0}', space=vmem, size = 0x2000, scoped, tag = 'input window, operand 2']
    #allocation8 [shape = 'u8[8192]{0}', space=vmem, size = 0x2000, scoped, tag = 'input window, operand 3']
    #allocation9 [shape = 's32[2]{0}', space=sflag, size = 0x8, scoped, tag = 'scoped memory for tpu_custom_call.1']
    #allocation10 [shape = 'u8[262144]{0}', space=vmem, size = 0x40000, scoped, tag = 'input window, operand 6, single buffered']
    #allocation11 [shape = 'u8[262144]{0}', space=vmem, size = 0x40000, scoped, tag = 'input window, operand 8, single buffered']
    #allocation12 [shape = 's32[1]{0}', space=sflag, size = 0x4, scoped, tag = 'scoped memory for tpu_custom_call.1']
    #allocation13 [shape = 'u8[131072]{0}', space=vmem, size = 0x20000, scoped, tag = 'input window, operand 10, single buffered']
    #allocation14 [shape = 'u8[131072]{0}', space=vmem, size = 0x20000, scoped, tag = 'input window, operand 12, single buffered']
    #allocation15 [shape = 's32[1]{0}', space=sflag, size = 0x4, scoped, tag = 'scoped memory for tpu_custom_call.1']
    #allocation16 [shape = 'u8[8192]{0}', space=vmem, size = 0x2000, scoped, tag = 'output window, operand 0']
    %19 = vsyncpa [#allocation3], 0
    %s20 = scalar_lea.sflag [#allocation3], 1
    %21 = vsyncpa %s20, 0
    %22 = vsyncpa [#allocation6], 0
    %s23 = scalar_lea.sflag [#allocation6], 1
    %24 = vsyncpa %s23, 0
    %25 = vsyncpa [#allocation9], 0
    %s26 = scalar_lea.sflag [#allocation9], 1
    %27 = vsyncpa %s26, 0
    %28 = vsyncpa [#allocation12], 0
    %29 = vsyncpa [#allocation15], 0
    %30 = vsyncpa [#allocation4], 0
    %s31 = scalar_lea.sflag [#allocation4], 1
    %32 = vsyncpa %s31, 0
    loop: start=0, step=1, limit=4
    $region2: #{tpu_custom_call.1} parent=1 // loop_pre_header
      _
    $region3: #{tpu_custom_call.1} parent=1 // loop_header
      %s34 = sphi 0, %s38
      %p35 = scmp.ge.s32.totalorder %s34, 4
      %s44 = sphi 0, %s46
      %s47 = sphi 0, %s44
      %s48 = sphi 0, %s47
      %s64 = sphi 0, %s48
      %s70 = sphi 0, %s72
      %s73 = sphi 0, %s70
      %s74 = sphi 0, %s73
      %s90 = sphi 0, %s74
      %s96 = sphi 0, %s98
      %s99 = sphi 0, %s96
      %s100 = sphi 0, %s99
      %s116 = sphi 0, %s100
      %s122 = sphi 0, %s124
      %s125 = sphi 0, %s122
      %s126 = sphi 0, %s125
      %s142 = sphi 0, %s126
      %s146 = sphi 0, %s146
      %s148 = sphi 0, %s146
      %s149 = sphi 0, %s148
      %s163 = sphi 0, %s149
      %s167 = sphi 0, %s167
      %s169 = sphi 0, %s167
      %s170 = sphi 0, %s169
      %s184 = sphi 0, %s170
      %s188 = sphi 0, %s188
      %s190 = sphi 0, %s188
      %s191 = sphi 0, %s190
      %s205 = sphi 0, %s191
      %s209 = sphi 0, %s209
      %s211 = sphi 0, %s209
      %s212 = sphi 0, %s211
      %s226 = sphi 0, %s212
      %s230 = sphi 0, %s230
      %s232 = sphi 0, %s230
      %s233 = sphi 0, %s232
      %s247 = sphi 0, %s233
      %s251 = sphi 0, %s251
      %s253 = sphi 0, %s251
      %s254 = sphi 0, %s253
      %s268 = sphi 0, %s254
      %s272 = sphi 0, %s272
      %s274 = sphi 0, %s272
      %s275 = sphi 0, %s274
      %s289 = sphi 0, %s275
      %s293 = sphi 0, %s293
      %s295 = sphi 0, %s293
      %s296 = sphi 0, %s295
      %s310 = sphi 0, %s296
      %s314 = sphi 0, %s314
      %s316 = sphi 0, %s314
      %s317 = sphi 0, %s316
      %s331 = sphi 0, %s317
      %s335 = sphi 0, %s335
      %s337 = sphi 0, %s335
      %s338 = sphi 0, %s337
      %s352 = sphi 0, %s338
      %s358 = sphi 0, %s360
      %s361 = sphi 0, %s358
      %s362 = sphi 0, %s361
      %s378 = sphi 0, %s362
    $region4: #{tpu_custom_call.1} parent=1 // loop_header_branch
      %37 = sbr.rel (%p35) target = $region8
    $region5: #{tpu_custom_call.1} parent=1 // loop_body
      %s39 = ssub.s32 %s34, 1
      %s40 = ssub.s32 %s34, 2
      %s41 = sadd.s32 %s34, 1
      %s42 = ssub.s32 %s34, %s41
      %p43 = scmp.eq.s32.totalorder %s42, 0
      %s45 = sadd.s32 %s44, 1
      %s46 = scalar_select %p43, %s44, %s45
      %p49 = pneg %p43
      %p50 = scmp.eq.s32.totalorder %s34, 1
      %p51 = por %p49, %p50
      %p52 = scmp.ne.s32.totalorder %s44, %s47
      %p53 = scmp.eq.s32.totalorder %s34, 0
      %p54 = por %p52, %p53
      %p55 = scmp.ne.s32.totalorder %s44, %s47
      %p56 = scmp.eq.s32.totalorder %s39, 1
      %p57 = por %p55, %p56
      %p58 = scmp.ne.s32.totalorder %s47, %s48
      %p59 = scmp.eq.s32.totalorder %s39, 0
      %p60 = por %p58, %p59
      %p61 = scmp.ne.s32.totalorder %s47, %s48
      %p62 = scmp.eq.s32.totalorder %s40, 1
      %p63 = por %p61, %p62
      %p65 = scmp.ne.s32.totalorder %s48, %s64
      %p66 = scmp.eq.s32.totalorder %s40, 0
      %p67 = por %p65, %p66
      %s68 = ssub.s32 %s34, %s41
      %p69 = scmp.eq.s32.totalorder %s68, 0
      %s71 = sadd.s32 %s70, 1
      %s72 = scalar_select %p69, %s70, %s71
      %p75 = pneg %p69
      %p76 = scmp.eq.s32.totalorder %s34, 1
      %p77 = por %p75, %p76
      %p78 = scmp.ne.s32.totalorder %s70, %s73
      %p79 = scmp.eq.s32.totalorder %s34, 0
      %p80 = por %p78, %p79
      %p81 = scmp.ne.s32.totalorder %s70, %s73
      %p82 = scmp.eq.s32.totalorder %s39, 1
      %p83 = por %p81, %p82
      %p84 = scmp.ne.s32.totalorder %s73, %s74
      %p85 = scmp.eq.s32.totalorder %s39, 0
      %p86 = por %p84, %p85
      %p87 = scmp.ne.s32.totalorder %s73, %s74
      %p88 = scmp.eq.s32.totalorder %s40, 1
      %p89 = por %p87, %p88
      %p91 = scmp.ne.s32.totalorder %s74, %s90
      %p92 = scmp.eq.s32.totalorder %s40, 0
      %p93 = por %p91, %p92
      %s94 = ssub.s32 %s34, %s41
      %p95 = scmp.eq.s32.totalorder %s94, 0
      %s97 = sadd.s32 %s96, 1
      %s98 = scalar_select %p95, %s96, %s97
      %p101 = pneg %p95
      %p102 = scmp.eq.s32.totalorder %s34, 1
      %p103 = por %p101, %p102
      %p104 = scmp.ne.s32.totalorder %s96, %s99
      %p105 = scmp.eq.s32.totalorder %s34, 0
      %p106 = por %p104, %p105
      %p107 = scmp.ne.s32.totalorder %s96, %s99
      %p108 = scmp.eq.s32.totalorder %s39, 1
      %p109 = por %p107, %p108
      %p110 = scmp.ne.s32.totalorder %s99, %s100
      %p111 = scmp.eq.s32.totalorder %s39, 0
      %p112 = por %p110, %p111
      %p113 = scmp.ne.s32.totalorder %s99, %s100
      %p114 = scmp.eq.s32.totalorder %s40, 1
      %p115 = por %p113, %p114
      %p117 = scmp.ne.s32.totalorder %s100, %s116
      %p118 = scmp.eq.s32.totalorder %s40, 0
      %p119 = por %p117, %p118
      %s120 = ssub.s32 %s34, %s41
      %p121 = scmp.eq.s32.totalorder %s120, 0
      %s123 = sadd.s32 %s122, 1
      %s124 = scalar_select %p121, %s122, %s123
      %p127 = pneg %p121
      %p128 = scmp.eq.s32.totalorder %s34, 1
      %p129 = por %p127, %p128
      %p130 = scmp.ne.s32.totalorder %s122, %s125
      %p131 = scmp.eq.s32.totalorder %s34, 0
      %p132 = por %p130, %p131
      %p133 = scmp.ne.s32.totalorder %s122, %s125
      %p134 = scmp.eq.s32.totalorder %s39, 1
      %p135 = por %p133, %p134
      %p136 = scmp.ne.s32.totalorder %s125, %s126
      %p137 = scmp.eq.s32.totalorder %s39, 0
      %p138 = por %p136, %p137
      %p139 = scmp.ne.s32.totalorder %s125, %s126
      %p140 = scmp.eq.s32.totalorder %s40, 1
      %p141 = por %p139, %p140
      %p143 = scmp.ne.s32.totalorder %s126, %s142
      %p144 = scmp.eq.s32.totalorder %s40, 0
      %p145 = por %p143, %p144
      %s147 = sadd.s32 %s146, 1
      %p150 = scmp.eq.s32.totalorder %s34, 1
      %p151 = scmp.ne.s32.totalorder %s146, %s148
      %p152 = scmp.eq.s32.totalorder %s34, 0
      %p153 = por %p151, %p152
      %p154 = scmp.ne.s32.totalorder %s146, %s148
      %p155 = scmp.eq.s32.totalorder %s39, 1
      %p156 = por %p154, %p155
      %p157 = scmp.ne.s32.totalorder %s148, %s149
      %p158 = scmp.eq.s32.totalorder %s39, 0
      %p159 = por %p157, %p158
      %p160 = scmp.ne.s32.totalorder %s148, %s149
      %p161 = scmp.eq.s32.totalorder %s40, 1
      %p162 = por %p160, %p161
      %p164 = scmp.ne.s32.totalorder %s149, %s163
      %p165 = scmp.eq.s32.totalorder %s40, 0
      %p166 = por %p164, %p165
      %s168 = sadd.s32 %s167, 1
      %p171 = scmp.eq.s32.totalorder %s34, 1
      %p172 = scmp.ne.s32.totalorder %s167, %s169
      %p173 = scmp.eq.s32.totalorder %s34, 0
      %p174 = por %p172, %p173
      %p175 = scmp.ne.s32.totalorder %s167, %s169
      %p176 = scmp.eq.s32.totalorder %s39, 1
      %p177 = por %p175, %p176
      %p178 = scmp.ne.s32.totalorder %s169, %s170
      %p179 = scmp.eq.s32.totalorder %s39, 0
      %p180 = por %p178, %p179
      %p181 = scmp.ne.s32.totalorder %s169, %s170
      %p182 = scmp.eq.s32.totalorder %s40, 1
      %p183 = por %p181, %p182
      %p185 = scmp.ne.s32.totalorder %s170, %s184
      %p186 = scmp.eq.s32.totalorder %s40, 0
      %p187 = por %p185, %p186
      %s189 = sadd.s32 %s188, 1
      %p192 = scmp.eq.s32.totalorder %s34, 1
      %p193 = scmp.ne.s32.totalorder %s188, %s190
      %p194 = scmp.eq.s32.totalorder %s34, 0
      %p195 = por %p193, %p194
      %p196 = scmp.ne.s32.totalorder %s188, %s190
      %p197 = scmp.eq.s32.totalorder %s39, 1
      %p198 = por %p196, %p197
      %p199 = scmp.ne.s32.totalorder %s190, %s191
      %p200 = scmp.eq.s32.totalorder %s39, 0
      %p201 = por %p199, %p200
      %p202 = scmp.ne.s32.totalorder %s190, %s191
      %p203 = scmp.eq.s32.totalorder %s40, 1
      %p204 = por %p202, %p203
      %p206 = scmp.ne.s32.totalorder %s191, %s205
      %p207 = scmp.eq.s32.totalorder %s40, 0
      %p208 = por %p206, %p207
      %s210 = sadd.s32 %s209, 1
      %p213 = scmp.eq.s32.totalorder %s34, 1
      %p214 = scmp.ne.s32.totalorder %s209, %s211
      %p215 = scmp.eq.s32.totalorder %s34, 0
      %p216 = por %p214, %p215
      %p217 = scmp.ne.s32.totalorder %s209, %s211
      %p218 = scmp.eq.s32.totalorder %s39, 1
      %p219 = por %p217, %p218
      %p220 = scmp.ne.s32.totalorder %s211, %s212
      %p221 = scmp.eq.s32.totalorder %s39, 0
      %p222 = por %p220, %p221
      %p223 = scmp.ne.s32.totalorder %s211, %s212
      %p224 = scmp.eq.s32.totalorder %s40, 1
      %p225 = por %p223, %p224
      %p227 = scmp.ne.s32.totalorder %s212, %s226
      %p228 = scmp.eq.s32.totalorder %s40, 0
      %p229 = por %p227, %p228
      %s231 = sadd.s32 %s230, 1
      %p234 = scmp.eq.s32.totalorder %s34, 1
      %p235 = scmp.ne.s32.totalorder %s230, %s232
      %p236 = scmp.eq.s32.totalorder %s34, 0
      %p237 = por %p235, %p236
      %p238 = scmp.ne.s32.totalorder %s230, %s232
      %p239 = scmp.eq.s32.totalorder %s39, 1
      %p240 = por %p238, %p239
      %p241 = scmp.ne.s32.totalorder %s232, %s233
      %p242 = scmp.eq.s32.totalorder %s39, 0
      %p243 = por %p241, %p242
      %p244 = scmp.ne.s32.totalorder %s232, %s233
      %p245 = scmp.eq.s32.totalorder %s40, 1
      %p246 = por %p244, %p245
      %p248 = scmp.ne.s32.totalorder %s233, %s247
      %p249 = scmp.eq.s32.totalorder %s40, 0
      %p250 = por %p248, %p249
      %s252 = sadd.s32 %s251, 1
      %p255 = scmp.eq.s32.totalorder %s34, 1
      %p256 = scmp.ne.s32.totalorder %s251, %s253
      %p257 = scmp.eq.s32.totalorder %s34, 0
      %p258 = por %p256, %p257
      %p259 = scmp.ne.s32.totalorder %s251, %s253
      %p260 = scmp.eq.s32.totalorder %s39, 1
      %p261 = por %p259, %p260
      %p262 = scmp.ne.s32.totalorder %s253, %s254
      %p263 = scmp.eq.s32.totalorder %s39, 0
      %p264 = por %p262, %p263
      %p265 = scmp.ne.s32.totalorder %s253, %s254
      %p266 = scmp.eq.s32.totalorder %s40, 1
      %p267 = por %p265, %p266
      %p269 = scmp.ne.s32.totalorder %s254, %s268
      %p270 = scmp.eq.s32.totalorder %s40, 0
      %p271 = por %p269, %p270
      %s273 = sadd.s32 %s272, 1
      %p276 = scmp.eq.s32.totalorder %s34, 1
      %p277 = scmp.ne.s32.totalorder %s272, %s274
      %p278 = scmp.eq.s32.totalorder %s34, 0
      %p279 = por %p277, %p278
      %p280 = scmp.ne.s32.totalorder %s272, %s274
      %p281 = scmp.eq.s32.totalorder %s39, 1
      %p282 = por %p280, %p281
      %p283 = scmp.ne.s32.totalorder %s274, %s275
      %p284 = scmp.eq.s32.totalorder %s39, 0
      %p285 = por %p283, %p284
      %p286 = scmp.ne.s32.totalorder %s274, %s275
      %p287 = scmp.eq.s32.totalorder %s40, 1
      %p288 = por %p286, %p287
      %p290 = scmp.ne.s32.totalorder %s275, %s289
      %p291 = scmp.eq.s32.totalorder %s40, 0
      %p292 = por %p290, %p291
      %s294 = sadd.s32 %s293, 1
      %p297 = scmp.eq.s32.totalorder %s34, 1
      %p298 = scmp.ne.s32.totalorder %s293, %s295
      %p299 = scmp.eq.s32.totalorder %s34, 0
      %p300 = por %p298, %p299
      %p301 = scmp.ne.s32.totalorder %s293, %s295
      %p302 = scmp.eq.s32.totalorder %s39, 1
      %p303 = por %p301, %p302
      %p304 = scmp.ne.s32.totalorder %s295, %s296
      %p305 = scmp.eq.s32.totalorder %s39, 0
      %p306 = por %p304, %p305
      %p307 = scmp.ne.s32.totalorder %s295, %s296
      %p308 = scmp.eq.s32.totalorder %s40, 1
      %p309 = por %p307, %p308
      %p311 = scmp.ne.s32.totalorder %s296, %s310
      %p312 = scmp.eq.s32.totalorder %s40, 0
      %p313 = por %p311, %p312
      %s315 = sadd.s32 %s314, 1
      %p318 = scmp.eq.s32.totalorder %s34, 1
      %p319 = scmp.ne.s32.totalorder %s314, %s316
      %p320 = scmp.eq.s32.totalorder %s34, 0
      %p321 = por %p319, %p320
      %p322 = scmp.ne.s32.totalorder %s314, %s316
      %p323 = scmp.eq.s32.totalorder %s39, 1
      %p324 = por %p322, %p323
      %p325 = scmp.ne.s32.totalorder %s316, %s317
      %p326 = scmp.eq.s32.totalorder %s39, 0
      %p327 = por %p325, %p326
      %p328 = scmp.ne.s32.totalorder %s316, %s317
      %p329 = scmp.eq.s32.totalorder %s40, 1
      %p330 = por %p328, %p329
      %p332 = scmp.ne.s32.totalorder %s317, %s331
      %p333 = scmp.eq.s32.totalorder %s40, 0
      %p334 = por %p332, %p333
      %s336 = sadd.s32 %s335, 1
      %p339 = scmp.eq.s32.totalorder %s34, 1
      %p340 = scmp.ne.s32.totalorder %s335, %s337
      %p341 = scmp.eq.s32.totalorder %s34, 0
      %p342 = por %p340, %p341
      %p343 = scmp.ne.s32.totalorder %s335, %s337
      %p344 = scmp.eq.s32.totalorder %s39, 1
      %p345 = por %p343, %p344
      %p346 = scmp.ne.s32.totalorder %s337, %s338
      %p347 = scmp.eq.s32.totalorder %s39, 0
      %p348 = por %p346, %p347
      %p349 = scmp.ne.s32.totalorder %s337, %s338
      %p350 = scmp.eq.s32.totalorder %s40, 1
      %p351 = por %p349, %p350
      %p353 = scmp.ne.s32.totalorder %s338, %s352
      %p354 = scmp.eq.s32.totalorder %s40, 0
      %p355 = por %p353, %p354
      %s356 = ssub.s32 %s34, %s41
      %p357 = scmp.eq.s32.totalorder %s356, 0
      %s359 = sadd.s32 %s358, 1
      %s360 = scalar_select %p357, %s358, %s359
      %p363 = pneg %p357
      %p364 = scmp.eq.s32.totalorder %s34, 1
      %p365 = por %p363, %p364
      %p366 = scmp.ne.s32.totalorder %s358, %s361
      %p367 = scmp.eq.s32.totalorder %s34, 0
      %p368 = por %p366, %p367
      %p369 = scmp.ne.s32.totalorder %s358, %s361
      %p370 = scmp.eq.s32.totalorder %s39, 1
      %p371 = por %p369, %p370
      %p372 = scmp.ne.s32.totalorder %s361, %s362
      %p373 = scmp.eq.s32.totalorder %s39, 0
      %p374 = por %p372, %p373
      %p375 = scmp.ne.s32.totalorder %s361, %s362
      %p376 = scmp.eq.s32.totalorder %s40, 1
      %p377 = por %p375, %p376
      %p379 = scmp.ne.s32.totalorder %s362, %s378
      %p380 = scmp.eq.s32.totalorder %s40, 0
      %p381 = por %p379, %p380
      %p382 = scmp.le.s32.totalorder 1, %s34
      %p383 = scmp.lt.s32.totalorder %s34, 3
      %p384 = pnand %p382, %p383
      %p385 = pneg %p384
      // Predicated region
      $region9: #{tpu_custom_call.1} parent=5 // pred_check
        _
      $region10: #{tpu_custom_call.1} parent=5 // pred_check_branch
        %387 = sbr.rel (%p384) target = $region12
      $region11: #{tpu_custom_call.1} parent=5 // pred_region
        %s388 = ssub.s32 %s34, 1
        // Predicated region
        $region13: #{tpu_custom_call.1} parent=11 // pred_check
          %p389 = pneg %p159
        $region14: #{tpu_custom_call.1} parent=11 // pred_check_branch
          %391 = sbr.rel (%p389) target = $region16
        $region15: #{tpu_custom_call.1} parent=11 // pred_region
          _
        $region16: #{tpu_custom_call.1} parent=11 // pred_fallthru
          _
        // Predicated region
        $region17: #{tpu_custom_call.1} parent=11 // pred_check
          %p392 = pneg %p180
        $region18: #{tpu_custom_call.1} parent=11 // pred_check_branch
          %394 = sbr.rel (%p392) target = $region20
        $region19: #{tpu_custom_call.1} parent=11 // pred_region
          _
        $region20: #{tpu_custom_call.1} parent=11 // pred_fallthru
          _
        // Predicated region
        $region21: #{tpu_custom_call.1} parent=11 // pred_check
          %p395 = pneg %p201
        $region22: #{tpu_custom_call.1} parent=11 // pred_check_branch
          %397 = sbr.rel (%p395) target = $region24
        $region23: #{tpu_custom_call.1} parent=11 // pred_region
          %s399 = ssub.s32 8192, 8192
          %400 = vsyncadd [#allocation9], %s399
          %s401 = sshll.u32 [#allocation10], 4
          %s402 = int_to_ptr.vmem [resolvable:$true] %s401
          %407 = dma.hbm_to_vmem [thread:$0]  %s6, 8192, %s402, [#allocation9], 128, 128, 8
        $region24: #{tpu_custom_call.1} parent=11 // pred_fallthru
          _
        // Predicated region
        $region25: #{tpu_custom_call.1} parent=11 // pred_check
          %p408 = pneg %p222
        $region26: #{tpu_custom_call.1} parent=11 // pred_check_branch
          %410 = sbr.rel (%p408) target = $region28
        $region27: #{tpu_custom_call.1} parent=11 // pred_region
          _
        $region28: #{tpu_custom_call.1} parent=11 // pred_fallthru
          _
        // Predicated region
        $region29: #{tpu_custom_call.1} parent=11 // pred_check
          %p411 = pneg %p243
        $region30: #{tpu_custom_call.1} parent=11 // pred_check_branch
          %413 = sbr.rel (%p411) target = $region32
        $region31: #{tpu_custom_call.1} parent=11 // pred_region
          %s415 = ssub.s32 8192, 8192
          %416 = vsyncadd [#allocation12], %s415
          %s417 = sshll.u32 [#allocation11], 4
          %s418 = int_to_ptr.vmem [resolvable:$true] %s417
          %423 = dma.hbm_to_vmem [thread:$0]  %s8, 8192, %s418, [#allocation12], 128, 128, 8
        $region32: #{tpu_custom_call.1} parent=11 // pred_fallthru
          _
        // Predicated region
        $region33: #{tpu_custom_call.1} parent=11 // pred_check
          %p424 = pneg %p264
        $region34: #{tpu_custom_call.1} parent=11 // pred_check_branch
          %426 = sbr.rel (%p424) target = $region36
        $region35: #{tpu_custom_call.1} parent=11 // pred_region
          _
        $region36: #{tpu_custom_call.1} parent=11 // pred_fallthru
          _
        // Predicated region
        $region37: #{tpu_custom_call.1} parent=11 // pred_check
          %p427 = pneg %p285
        $region38: #{tpu_custom_call.1} parent=11 // pred_check_branch
          %429 = sbr.rel (%p427) target = $region40
        $region39: #{tpu_custom_call.1} parent=11 // pred_region
          %s431 = ssub.s32 4096, 4096
          %432 = vsyncadd [#allocation12], %s431
          %s433 = sshll.u32 [#allocation13], 4
          %s434 = int_to_ptr.vmem [resolvable:$true] %s433
          %439 = dma.hbm_to_vmem [thread:$0]  %s10, 4096, %s434, [#allocation12], 256, 256, 16
        $region40: #{tpu_custom_call.1} parent=11 // pred_fallthru
          _
        // Predicated region
        $region41: #{tpu_custom_call.1} parent=11 // pred_check
          %p440 = pneg %p306
        $region42: #{tpu_custom_call.1} parent=11 // pred_check_branch
          %442 = sbr.rel (%p440) target = $region44
        $region43: #{tpu_custom_call.1} parent=11 // pred_region
          _
        $region44: #{tpu_custom_call.1} parent=11 // pred_fallthru
          _
        // Predicated region
        $region45: #{tpu_custom_call.1} parent=11 // pred_check
          %p443 = pneg %p327
        $region46: #{tpu_custom_call.1} parent=11 // pred_check_branch
          %445 = sbr.rel (%p443) target = $region48
        $region47: #{tpu_custom_call.1} parent=11 // pred_region
          %s447 = ssub.s32 4096, 4096
          %448 = vsyncadd [#allocation15], %s447
          %s449 = sshll.u32 [#allocation14], 4
          %s450 = int_to_ptr.vmem [resolvable:$true] %s449
          %455 = dma.hbm_to_vmem [thread:$0]  %s12, 4096, %s450, [#allocation15], 128, 128, 8
        $region48: #{tpu_custom_call.1} parent=11 // pred_fallthru
          _
        // Predicated region
        $region49: #{tpu_custom_call.1} parent=11 // pred_check
          %p456 = pneg %p348
        $region50: #{tpu_custom_call.1} parent=11 // pred_check_branch
          %458 = sbr.rel (%p456) target = $region52
        $region51: #{tpu_custom_call.1} parent=11 // pred_region
          _
        $region52: #{tpu_custom_call.1} parent=11 // pred_fallthru
          _
      $region12: #{tpu_custom_call.1} parent=5 // pred_fallthru
        _
      %p459 = scmp.lt.s32.totalorder %s34, 2
      // Predicated region
      $region53: #{tpu_custom_call.1} parent=5 // pred_check
        %p460 = pneg %p459
      $region54: #{tpu_custom_call.1} parent=5 // pred_check_branch
        %462 = sbr.rel (%p460) target = $region56
      $region55: #{tpu_custom_call.1} parent=5 // pred_region
        // Predicated region
        $region57: #{tpu_custom_call.1} parent=55 // pred_check
          %p463 = pneg %p54
        $region58: #{tpu_custom_call.1} parent=55 // pred_check_branch
          %465 = sbr.rel (%p463) target = $region60
        $region59: #{tpu_custom_call.1} parent=55 // pred_region
          %s466 = sand.u32 %s44, 1
          %s467 = scalar_lea.sflag [#allocation3], %s466
          %s468 = sand.u32 %s44, 1
          %s469 = smul.addr %s468, 8
          %s470 = scalar_lea.vmem [#allocation2], %s469
          %s472 = ssub.s32 128, 128
          %473 = vsyncadd %s467, %s472
          %s474 = smul.addr %s34, 128
          %s475 = scalar_lea.hbm %s0, %s474
          %s477 = sshll.u32 %s470, 4
          %s478 = int_to_ptr.vmem [resolvable:$true] %s477
          %480 = dma.hbm_to_vmem [thread:$0]  %s475, 128, %s478, %s467
        $region60: #{tpu_custom_call.1} parent=55 // pred_fallthru
          _
        // Predicated region
        $region61: #{tpu_custom_call.1} parent=55 // pred_check
          %p481 = pneg %p80
        $region62: #{tpu_custom_call.1} parent=55 // pred_check_branch
          %483 = sbr.rel (%p481) target = $region64
        $region63: #{tpu_custom_call.1} parent=55 // pred_region
          %s484 = sand.u32 %s34, 1
          %s485 = scalar_lea.sflag [#allocation6], %s484
          %s486 = sand.u32 %s70, 1
          %s487 = smul.addr %s486, 16
          %s488 = scalar_lea.vmem [#allocation5], %s487
          %s490 = ssub.s32 256, 256
          %491 = vsyncadd %s485, %s490
          %s492 = smul.addr %s34, 2
          %s493 = smul.addr %s492, 128
          %s494 = scalar_lea.hbm %s1, %s493
          %s495 = sshll.u32 %s488, 4
          %s496 = int_to_ptr.vmem [resolvable:$true] %s495
          %501 = dma.hbm_to_vmem [thread:$0]  %s494, 256, %s496, %s485, 128, 128, 8
        $region64: #{tpu_custom_call.1} parent=55 // pred_fallthru
          _
        // Predicated region
        $region65: #{tpu_custom_call.1} parent=55 // pred_check
          %p502 = pneg %p106
        $region66: #{tpu_custom_call.1} parent=55 // pred_check_branch
          %504 = sbr.rel (%p502) target = $region68
        $region67: #{tpu_custom_call.1} parent=55 // pred_region
          %s505 = sand.u32 %s34, 1
          %s506 = scalar_lea.sflag [#allocation6], %s505
          %s507 = sand.u32 %s96, 1
          %s508 = smul.addr %s507, 8
          %s509 = scalar_lea.vmem [#allocation7], %s508
          %s511 = ssub.s32 128, 128
          %512 = vsyncadd %s506, %s511
          %s513 = smul.addr %s34, 128
          %s514 = scalar_lea.hbm %s2, %s513
          %s516 = sshll.u32 %s509, 4
          %s517 = int_to_ptr.vmem [resolvable:$true] %s516
          %519 = dma.hbm_to_vmem [thread:$0]  %s514, 128, %s517, %s506
        $region68: #{tpu_custom_call.1} parent=55 // pred_fallthru
          _
        // Predicated region
        $region69: #{tpu_custom_call.1} parent=55 // pred_check
          %p520 = pneg %p132
        $region70: #{tpu_custom_call.1} parent=55 // pred_check_branch
          %522 = sbr.rel (%p520) target = $region72
        $region71: #{tpu_custom_call.1} parent=55 // pred_region
          %s523 = sand.u32 %s34, 1
          %s524 = scalar_lea.sflag [#allocation9], %s523
          %s525 = sand.u32 %s122, 1
          %s526 = smul.addr %s525, 8
          %s527 = scalar_lea.vmem [#allocation8], %s526
          %s529 = ssub.s32 128, 128
          %530 = vsyncadd %s524, %s529
          %s531 = smul.addr %s34, 128
          %s532 = scalar_lea.hbm %s3, %s531
          %s534 = sshll.u32 %s527, 4
          %s535 = int_to_ptr.vmem [resolvable:$true] %s534
          %537 = dma.hbm_to_vmem [thread:$0]  %s532, 128, %s535, %s524
        $region72: #{tpu_custom_call.1} parent=55 // pred_fallthru
          _
      $region56: #{tpu_custom_call.1} parent=5 // pred_fallthru
        _
      %p538 = scmp.le.s32.totalorder 1, %s34
      %p539 = scmp.lt.s32.totalorder %s34, 3
      %p540 = pnand %p538, %p539
      %p541 = pneg %p540
      // Predicated region
      $region73: #{tpu_custom_call.1} parent=5 // pred_check
        _
      $region74: #{tpu_custom_call.1} parent=5 // pred_check_branch
        %543 = sbr.rel (%p540) target = $region76
      $region75: #{tpu_custom_call.1} parent=5 // pred_region
        %s544 = ssub.s32 %s34, 1
        %s545 = sand.u32 %s47, 1
        %s546 = scalar_lea.sflag [#allocation3], %s545
        %s547 = sand.u32 %s47, 1
        %s548 = smul.addr %s547, 8
        %s549 = scalar_lea.vmem [#allocation2], %s548
        // Predicated region
        $region77: #{tpu_custom_call.1} parent=75 // pred_check
          %p550 = pneg %p60
        $region78: #{tpu_custom_call.1} parent=75 // pred_check_branch
          %552 = sbr.rel (%p550) target = $region80
        $region79: #{tpu_custom_call.1} parent=75 // pred_region
          %553 = dma.done %s546, 128
        $region80: #{tpu_custom_call.1} parent=75 // pred_fallthru
          _
        %s554 = sand.u32 %s39, 1
        %s555 = scalar_lea.sflag [#allocation6], %s554
        %s556 = sand.u32 %s73, 1
        %s557 = smul.addr %s556, 16
        %s558 = scalar_lea.vmem [#allocation5], %s557
        // Predicated region
        $region81: #{tpu_custom_call.1} parent=75 // pred_check
          %p559 = pneg %p86
        $region82: #{tpu_custom_call.1} parent=75 // pred_check_branch
          %561 = sbr.rel (%p559) target = $region84
        $region83: #{tpu_custom_call.1} parent=75 // pred_region
          %562 = dma.done %s555, 256
        $region84: #{tpu_custom_call.1} parent=75 // pred_fallthru
          _
        %s563 = sand.u32 %s39, 1
        %s564 = scalar_lea.sflag [#allocation6], %s563
        %s565 = sand.u32 %s99, 1
        %s566 = smul.addr %s565, 8
        %s567 = scalar_lea.vmem [#allocation7], %s566
        // Predicated region
        $region85: #{tpu_custom_call.1} parent=75 // pred_check
          %p568 = pneg %p112
        $region86: #{tpu_custom_call.1} parent=75 // pred_check_branch
          %570 = sbr.rel (%p568) target = $region88
        $region87: #{tpu_custom_call.1} parent=75 // pred_region
          %571 = dma.done %s564, 128
        $region88: #{tpu_custom_call.1} parent=75 // pred_fallthru
          _
        %s572 = sand.u32 %s39, 1
        %s573 = scalar_lea.sflag [#allocation9], %s572
        %s574 = sand.u32 %s125, 1
        %s575 = smul.addr %s574, 8
        %s576 = scalar_lea.vmem [#allocation8], %s575
        // Predicated region
        $region89: #{tpu_custom_call.1} parent=75 // pred_check
          %p577 = pneg %p138
        $region90: #{tpu_custom_call.1} parent=75 // pred_check_branch
          %579 = sbr.rel (%p577) target = $region92
        $region91: #{tpu_custom_call.1} parent=75 // pred_region
          %580 = dma.done %s573, 128
        $region92: #{tpu_custom_call.1} parent=75 // pred_fallthru
          _
        // Predicated region
        $region93: #{tpu_custom_call.1} parent=75 // pred_check
          %p581 = pneg %p201
        $region94: #{tpu_custom_call.1} parent=75 // pred_check_branch
          %583 = sbr.rel (%p581) target = $region96
        $region95: #{tpu_custom_call.1} parent=75 // pred_region
          %584 = dma.done [#allocation9], 8192
        $region96: #{tpu_custom_call.1} parent=75 // pred_fallthru
          _
        // Predicated region
        $region97: #{tpu_custom_call.1} parent=75 // pred_check
          %p585 = pneg %p243
        $region98: #{tpu_custom_call.1} parent=75 // pred_check_branch
          %587 = sbr.rel (%p585) target = $region100
        $region99: #{tpu_custom_call.1} parent=75 // pred_region
          %588 = dma.done [#allocation12], 8192
        $region100: #{tpu_custom_call.1} parent=75 // pred_fallthru
          _
        // Predicated region
        $region101: #{tpu_custom_call.1} parent=75 // pred_check
          %p589 = pneg %p285
        $region102: #{tpu_custom_call.1} parent=75 // pred_check_branch
          %591 = sbr.rel (%p589) target = $region104
        $region103: #{tpu_custom_call.1} parent=75 // pred_region
          %592 = dma.done [#allocation12], 4096
        $region104: #{tpu_custom_call.1} parent=75 // pred_fallthru
          _
        // Predicated region
        $region105: #{tpu_custom_call.1} parent=75 // pred_check
          %p593 = pneg %p327
        $region106: #{tpu_custom_call.1} parent=75 // pred_check_branch
          %595 = sbr.rel (%p593) target = $region108
        $region107: #{tpu_custom_call.1} parent=75 // pred_region
          %596 = dma.done [#allocation15], 4096
        $region108: #{tpu_custom_call.1} parent=75 // pred_fallthru
          _
        %s597 = sand.u32 %s47, 1
        %s598 = scalar_lea.sflag [#allocation3], %s597
        %s599 = sand.u32 %s47, 1
        %s600 = smul.addr %s599, 8
        %s601 = scalar_lea.vmem [#allocation2], %s600
        %p602 = pneg %p60
        %p603 = pneg %p57
        %s604 = sand.u32 %s39, 1
        %s605 = scalar_lea.sflag [#allocation6], %s604
        %s606 = sand.u32 %s73, 1
        %s607 = smul.addr %s606, 16
        %s608 = scalar_lea.vmem [#allocation5], %s607
        %p609 = pneg %p86
        %p610 = pneg %p83
        %s611 = sand.u32 %s39, 1
        %s612 = scalar_lea.sflag [#allocation6], %s611
        %s613 = sand.u32 %s99, 1
        %s614 = smul.addr %s613, 8
        %s615 = scalar_lea.vmem [#allocation7], %s614
        %p616 = pneg %p112
        %p617 = pneg %p109
        %s618 = sand.u32 %s39, 1
        %s619 = scalar_lea.sflag [#allocation9], %s618
        %s620 = sand.u32 %s125, 1
        %s621 = smul.addr %s620, 8
        %s622 = scalar_lea.vmem [#allocation8], %s621
        %p623 = pneg %p138
        %p624 = pneg %p135
        %p625 = pneg %p159
        %p626 = pneg %p156
        %p627 = pneg %p180
        %p628 = pneg %p177
        %p629 = pneg %p201
        %p630 = pneg %p198
        %p631 = pneg %p222
        %p632 = pneg %p219
        %p633 = pneg %p243
        %p634 = pneg %p240
        %p635 = pneg %p264
        %p636 = pneg %p261
        %p637 = pneg %p285
        %p638 = pneg %p282
        %p639 = pneg %p306
        %p640 = pneg %p303
        %p641 = pneg %p327
        %p642 = pneg %p324
        %p643 = pneg %p348
        %p644 = pneg %p345
        %p645 = pneg %p374
        %p646 = pneg %p371
        %s647 = sand.u32 %s361, 1
        %s648 = scalar_lea.sflag [#allocation4], %s647
        %s649 = sand.u32 %s361, 1
        %s650 = smul.addr %s649, 8
        %s651 = scalar_lea.vmem [#allocation16], %s650
        %v652 = vld [vmem:[%s549] sm:$0xff]
        %v653 = vld [vmem:[%s558] sm:$0xff]
        %v654 = vld [vmem:[%s558 + $0x8] sm:$0xff]
        %v655 = vld [vmem:[%s567] sm:$0xff]
        %v656 = vld [vmem:[%s576] sm:$0xff]
        %v657 = vld [vmem:[%s4] sm:$0x1]
        %v658 = vld [vmem:[%s5] sm:$0x1]
        %659 = vadd.xlane.f32.xlu0 %v652
        %v660 = vpop.xlane.xlu0 %659
        %v661 = vrcp.pop 128.0
        %v662 = vmul.f32 %v660, %v661
        %v663 = vsub.f32 %v652, %v662
        %v664 = vmul.f32 %v663, %v663
        %665 = vadd.xlane.f32.xlu0 %v664
        %v666 = vpop.xlane.xlu0 %665
        %v667 = vrcp.pop 127.0
        %v668 = vmul.f32 %v666, %v667
        %v669 = vrsqrt.pop %v668
        %v670 = vmul.f32 %v668, %v669
        %vm671 = vcmp.eq.f32.partialorder %v668, inf
        %v672 = vsel %vm671, %v668, %v670
        %vm673 = vcmp.eq.f32.partialorder %v668, 0.0
        %v674 = vand.u32 %v668, 2147483648
        %v675 = vsel %vm673, %v674, %v672
        %v676 = vlaneseq
        %v677 = vshrl.u32 %v676, 7
        %v678 = vsub.s32 0, %v677
        %v679 = vrot.slane %v657, %v678
        %v680 = vmul.f32 %v679, %v663
        %v681 = vadd.f32 %v675, 1e-06
        %v682 = vrcp.pop %v681
        %v683 = vmul.f32 %v680, %v682
        %v684 = vlaneseq
        %v685 = vshrl.u32 %v684, 7
        %v686 = vsub.s32 0, %v685
        %v687 = vrot.slane %v658, %v686
        %v688 = vadd.f32 %v683, %v687
        %v689 = vld [vmem:[#allocation10] sm:$0xff]
        %v690 = vld [vmem:[#allocation10 + $0x8] sm:$0xff]
        %v691 = vld [vmem:[#allocation10 + $0x10] sm:$0xff]
        %v692 = vld [vmem:[#allocation10 + $0x18] sm:$0xff]
        %v693 = vld [vmem:[#allocation10 + $0x20] sm:$0xff]
        %v694 = vld [vmem:[#allocation10 + $0x28] sm:$0xff]
        %v695 = vld [vmem:[#allocation10 + $0x30] sm:$0xff]
        %v696 = vld [vmem:[#allocation10 + $0x38] sm:$0xff]
        %v697 = vld [vmem:[#allocation10 + $0x40] sm:$0xff]
        %v698 = vld [vmem:[#allocation10 + $0x48] sm:$0xff]
        %v699 = vld [vmem:[#allocation10 + $0x50] sm:$0xff]
        %v700 = vld [vmem:[#allocation10 + $0x58] sm:$0xff]
        %v701 = vld [vmem:[#allocation10 + $0x60] sm:$0xff]
        %v702 = vld [vmem:[#allocation10 + $0x68] sm:$0xff]
        %v703 = vld [vmem:[#allocation10 + $0x70] sm:$0xff]
        %v704 = vld [vmem:[#allocation10 + $0x78] sm:$0xff]
        %v705 = vld [vmem:[%s7] sm:$0x1]
        %v706 = vlaneseq
        %v707 = vshrl.u32 %v706, 7
        %v708 = vsub.s32 0, %v707
        %v709 = vrot.slane %v705, %v708
        %710 = vmatprep.subr.mxu0 0.0
        %711 = vmatpush1.msra.mxu0 %v689
        %712 = vmatprep.subr.mxu0 0.0
        %713 = vmatpush1.msra.mxu0 %v690
        %714 = vmatprep.subr.mxu0 0.0
        %715 = vmatpush1.msra.mxu0 %v691
        %716 = vmatprep.subr.mxu0 0.0
        %717 = vmatpush1.msra.mxu0 %v692
        %718 = vmatprep.subr.mxu0 0.0
        %719 = vmatpush1.msra.mxu0 %v693
        %720 = vmatprep.subr.mxu0 0.0
        %721 = vmatpush1.msra.mxu0 %v694
        %722 = vmatprep.subr.mxu0 0.0
        %723 = vmatpush1.msra.mxu0 %v695
        %724 = vmatprep.subr.mxu0 0.0
        %725 = vmatpush1.msra.mxu0 %v696
        %726 = vmatprep.subr.mxu0 0.0
        %727 = vmatpush1.msra.mxu0 %v697
        %728 = vmatprep.subr.mxu0 0.0
        %729 = vmatpush1.msra.mxu0 %v698
        %730 = vmatprep.subr.mxu0 0.0
        %731 = vmatpush1.msra.mxu0 %v699
        %732 = vmatprep.subr.mxu0 0.0
        %733 = vmatpush1.msra.mxu0 %v700
        %734 = vmatprep.subr.mxu0 0.0
        %735 = vmatpush1.msra.mxu0 %v701
        %736 = vmatprep.subr.mxu0 0.0
        %737 = vmatpush1.msra.mxu0 %v702
        %738 = vmatprep.subr.mxu0 0.0
        %739 = vmatpush1.msra.mxu0 %v703
        %740 = vmatprep.subr.mxu0 0.0
        %741 = vmatpush1.msra.mxu0 %v704
        %742 = vmatprep.subr.mxu0 0.0
        %743 = vmatpush1.msra.mxu0 0.0
        %744 = vmatprep.subr.mxu0 0.0
        %745 = vmatpush1.msra.mxu0 0.0
        %746 = vmatprep.subr.mxu0 0.0
        %747 = vmatpush1.msra.mxu0 0.0
        %748 = vmatprep.subr.mxu0 0.0
        %749 = vmatpush1.msra.mxu0 0.0
        %750 = vmatprep.subr.mxu0 0.0
        %751 = vmatpush1.msra.mxu0 0.0
        %752 = vmatprep.subr.mxu0 0.0
        %753 = vmatpush1.msra.mxu0 0.0
        %754 = vmatprep.subr.mxu0 0.0
        %755 = vmatpush1.msra.mxu0 0.0
        %756 = vmatprep.subr.mxu0 0.0
        %757 = vmatpush1.msra.mxu0 0.0
        %758 = vmatprep.subr.mxu0 0.0
        %759 = vmatpush1.msra.mxu0 0.0
        %760 = vmatprep.subr.mxu0 0.0
        %761 = vmatpush1.msra.mxu0 0.0
        %762 = vmatprep.subr.mxu0 0.0
        %763 = vmatpush1.msra.mxu0 0.0
        %764 = vmatprep.subr.mxu0 0.0
        %765 = vmatpush1.msra.mxu0 0.0
        %766 = vmatprep.subr.mxu0 0.0
        %767 = vmatpush1.msra.mxu0 0.0
        %768 = vmatprep.subr.mxu0 0.0
        %769 = vmatpush1.msra.mxu0 0.0
        %770 = vmatprep.subr.mxu0 0.0
        %771 = vmatpush1.msra.mxu0 0.0
        %772 = vmatprep.subr.mxu0 0.0
        %773 = vmatpush1.msra.mxu0 0.0
        %774 = vmatprep.mubr.f32.mxu0 0.0
        %775 = vmatmul.mubr.f32.gmra.mrb[0].mxu0 %v688
        %v776 = vpop.f32.mrb[0].mxu0
        %v777 = vadd.f32 %v709, %v776
        %v778 = vpop.f32.mrb[0].mxu0
        %779 = vdwg.mxu0
        %s780 = scalar_lea.vmem [#allocation10], 128
        %v781 = vld [vmem:[%s780] sm:$0xff]
        %v782 = vld [vmem:[%s780 + $0x8] sm:$0xff]
        %v783 = vld [vmem:[%s780 + $0x10] sm:$0xff]
        %v784 = vld [vmem:[%s780 + $0x18] sm:$0xff]
        %v785 = vld [vmem:[%s780 + $0x20] sm:$0xff]
        %v786 = vld [vmem:[%s780 + $0x28] sm:$0xff]
        %v787 = vld [vmem:[%s780 + $0x30] sm:$0xff]
        %v788 = vld [vmem:[%s780 + $0x38] sm:$0xff]
        %v789 = vld [vmem:[%s780 + $0x40] sm:$0xff]
        %v790 = vld [vmem:[%s780 + $0x48] sm:$0xff]
        %v791 = vld [vmem:[%s780 + $0x50] sm:$0xff]
        %v792 = vld [vmem:[%s780 + $0x58] sm:$0xff]
        %v793 = vld [vmem:[%s780 + $0x60] sm:$0xff]
        %v794 = vld [vmem:[%s780 + $0x68] sm:$0xff]
        %v795 = vld [vmem:[%s780 + $0x70] sm:$0xff]
        %v796 = vld [vmem:[%s780 + $0x78] sm:$0xff]
        %v797 = vld [vmem:[%s7 + $0x1] sm:$0x1]
        %v798 = vlaneseq
        %v799 = vshrl.u32 %v798, 7
        %v800 = vsub.s32 0, %v799
        %v801 = vrot.slane %v797, %v800
        %802 = vmatprep.subr.mxu0 0.0
        %803 = vmatpush1.msra.mxu0 %v781
        %804 = vmatprep.subr.mxu0 0.0
        %805 = vmatpush1.msra.mxu0 %v782
        %806 = vmatprep.subr.mxu0 0.0
        %807 = vmatpush1.msra.mxu0 %v783
        %808 = vmatprep.subr.mxu0 0.0
        %809 = vmatpush1.msra.mxu0 %v784
        %810 = vmatprep.subr.mxu0 0.0
        %811 = vmatpush1.msra.mxu0 %v785
        %812 = vmatprep.subr.mxu0 0.0
        %813 = vmatpush1.msra.mxu0 %v786
        %814 = vmatprep.subr.mxu0 0.0
        %815 = vmatpush1.msra.mxu0 %v787
        %816 = vmatprep.subr.mxu0 0.0
        %817 = vmatpush1.msra.mxu0 %v788
        %818 = vmatprep.subr.mxu0 0.0
        %819 = vmatpush1.msra.mxu0 %v789
        %820 = vmatprep.subr.mxu0 0.0
        %821 = vmatpush1.msra.mxu0 %v790
        %822 = vmatprep.subr.mxu0 0.0
        %823 = vmatpush1.msra.mxu0 %v791
        %824 = vmatprep.subr.mxu0 0.0
        %825 = vmatpush1.msra.mxu0 %v792
        %826 = vmatprep.subr.mxu0 0.0
        %827 = vmatpush1.msra.mxu0 %v793
        %828 = vmatprep.subr.mxu0 0.0
        %829 = vmatpush1.msra.mxu0 %v794
        %830 = vmatprep.subr.mxu0 0.0
        %831 = vmatpush1.msra.mxu0 %v795
        %832 = vmatprep.subr.mxu0 0.0
        %833 = vmatpush1.msra.mxu0 %v796
        %834 = vmatprep.subr.mxu0 0.0
        %835 = vmatpush1.msra.mxu0 0.0
        %836 = vmatprep.subr.mxu0 0.0
        %837 = vmatpush1.msra.mxu0 0.0
        %838 = vmatprep.subr.mxu0 0.0
        %839 = vmatpush1.msra.mxu0 0.0
        %840 = vmatprep.subr.mxu0 0.0
        %841 = vmatpush1.msra.mxu0 0.0
        %842 = vmatprep.subr.mxu0 0.0
        %843 = vmatpush1.msra.mxu0 0.0
        %844 = vmatprep.subr.mxu0 0.0
        %845 = vmatpush1.msra.mxu0 0.0
        %846 = vmatprep.subr.mxu0 0.0
        %847 = vmatpush1.msra.mxu0 0.0
        %848 = vmatprep.subr.mxu0 0.0
        %849 = vmatpush1.msra.mxu0 0.0
        %850 = vmatprep.subr.mxu0 0.0
        %851 = vmatpush1.msra.mxu0 0.0
        %852 = vmatprep.subr.mxu0 0.0
        %853 = vmatpush1.msra.mxu0 0.0
        %854 = vmatprep.subr.mxu0 0.0
        %855 = vmatpush1.msra.mxu0 0.0
        %856 = vmatprep.subr.mxu0 0.0
        %857 = vmatpush1.msra.mxu0 0.0
        %858 = vmatprep.subr.mxu0 0.0
        %859 = vmatpush1.msra.mxu0 0.0
        %860 = vmatprep.subr.mxu0 0.0
        %861 = vmatpush1.msra.mxu0 0.0
        %862 = vmatprep.subr.mxu0 0.0
        %863 = vmatpush1.msra.mxu0 0.0
        %864 = vmatprep.subr.mxu0 0.0
        %865 = vmatpush1.msra.mxu0 0.0
        %866 = vmatprep.mubr.f32.mxu0 0.0
        %867 = vmatmul.mubr.f32.gmra.mrb[0].mxu0 %v688
        %v868 = vpop.f32.mrb[0].mxu0
        %v869 = vadd.f32 %v801, %v868
        %v870 = vpop.f32.mrb[0].mxu0
        %871 = vdwg.mxu0
        %s872 = scalar_lea.vmem [#allocation10], 256
        %v873 = vld [vmem:[%s872] sm:$0xff]
        %v874 = vld [vmem:[%s872 + $0x8] sm:$0xff]
        %v875 = vld [vmem:[%s872 + $0x10] sm:$0xff]
        %v876 = vld [vmem:[%s872 + $0x18] sm:$0xff]
        %v877 = vld [vmem:[%s872 + $0x20] sm:$0xff]
        %v878 = vld [vmem:[%s872 + $0x28] sm:$0xff]
        %v879 = vld [vmem:[%s872 + $0x30] sm:$0xff]
        %v880 = vld [vmem:[%s872 + $0x38] sm:$0xff]
        %v881 = vld [vmem:[%s872 + $0x40] sm:$0xff]
        %v882 = vld [vmem:[%s872 + $0x48] sm:$0xff]
        %v883 = vld [vmem:[%s872 + $0x50] sm:$0xff]
        %v884 = vld [vmem:[%s872 + $0x58] sm:$0xff]
        %v885 = vld [vmem:[%s872 + $0x60] sm:$0xff]
        %v886 = vld [vmem:[%s872 + $0x68] sm:$0xff]
        %v887 = vld [vmem:[%s872 + $0x70] sm:$0xff]
        %v888 = vld [vmem:[%s872 + $0x78] sm:$0xff]
        %v889 = vld [vmem:[%s7 + $0x2] sm:$0x1]
        %v890 = vlaneseq
        %v891 = vshrl.u32 %v890, 7
        %v892 = vsub.s32 0, %v891
        %v893 = vrot.slane %v889, %v892
        %894 = vmatprep.subr.mxu0 0.0
        %895 = vmatpush1.msra.mxu0 %v873
        %896 = vmatprep.subr.mxu0 0.0
        %897 = vmatpush1.msra.mxu0 %v874
        %898 = vmatprep.subr.mxu0 0.0
        %899 = vmatpush1.msra.mxu0 %v875
        %900 = vmatprep.subr.mxu0 0.0
        %901 = vmatpush1.msra.mxu0 %v876
        %902 = vmatprep.subr.mxu0 0.0
        %903 = vmatpush1.msra.mxu0 %v877
        %904 = vmatprep.subr.mxu0 0.0
        %905 = vmatpush1.msra.mxu0 %v878
        %906 = vmatprep.subr.mxu0 0.0
        %907 = vmatpush1.msra.mxu0 %v879
        %908 = vmatprep.subr.mxu0 0.0
        %909 = vmatpush1.msra.mxu0 %v880
        %910 = vmatprep.subr.mxu0 0.0
        %911 = vmatpush1.msra.mxu0 %v881
        %912 = vmatprep.subr.mxu0 0.0
        %913 = vmatpush1.msra.mxu0 %v882
        %914 = vmatprep.subr.mxu0 0.0
        %915 = vmatpush1.msra.mxu0 %v883
        %916 = vmatprep.subr.mxu0 0.0
        %917 = vmatpush1.msra.mxu0 %v884
        %918 = vmatprep.subr.mxu0 0.0
        %919 = vmatpush1.msra.mxu0 %v885
        %920 = vmatprep.subr.mxu0 0.0
        %921 = vmatpush1.msra.mxu0 %v886
        %922 = vmatprep.subr.mxu0 0.0
        %923 = vmatpush1.msra.mxu0 %v887
        %924 = vmatprep.subr.mxu0 0.0
        %925 = vmatpush1.msra.mxu0 %v888
        %926 = vmatprep.subr.mxu0 0.0
        %927 = vmatpush1.msra.mxu0 0.0
        %928 = vmatprep.subr.mxu0 0.0
        %929 = vmatpush1.msra.mxu0 0.0
        %930 = vmatprep.subr.mxu0 0.0
        %931 = vmatpush1.msra.mxu0 0.0
        %932 = vmatprep.subr.mxu0 0.0
        %933 = vmatpush1.msra.mxu0 0.0
        %934 = vmatprep.subr.mxu0 0.0
        %935 = vmatpush1.msra.mxu0 0.0
        %936 = vmatprep.subr.mxu0 0.0
        %937 = vmatpush1.msra.mxu0 0.0
        %938 = vmatprep.subr.mxu0 0.0
        %939 = vmatpush1.msra.mxu0 0.0
        %940 = vmatprep.subr.mxu0 0.0
        %941 = vmatpush1.msra.mxu0 0.0
        %942 = vmatprep.subr.mxu0 0.0
        %943 = vmatpush1.msra.mxu0 0.0
        %944 = vmatprep.subr.mxu0 0.0
        %945 = vmatpush1.msra.mxu0 0.0
        %946 = vmatprep.subr.mxu0 0.0
        %947 = vmatpush1.msra.mxu0 0.0
        %948 = vmatprep.subr.mxu0 0.0
        %949 = vmatpush1.msra.mxu0 0.0
        %950 = vmatprep.subr.mxu0 0.0
        %951 = vmatpush1.msra.mxu0 0.0
        %952 = vmatprep.subr.mxu0 0.0
        %953 = vmatpush1.msra.mxu0 0.0
        %954 = vmatprep.subr.mxu0 0.0
        %955 = vmatpush1.msra.mxu0 0.0
        %956 = vmatprep.subr.mxu0 0.0
        %957 = vmatpush1.msra.mxu0 0.0
        %958 = vmatprep.mubr.f32.mxu0 0.0
        %959 = vmatmul.mubr.f32.gmra.mrb[0].mxu0 %v688
        %v960 = vpop.f32.mrb[0].mxu0
        %v961 = vadd.f32 %v893, %v960
        %v962 = vpop.f32.mrb[0].mxu0
        %963 = vdwg.mxu0
        %vm964 = vcmask 261120
        %v966 = vsel %vm964, %v777, 0
        %v969 = vsel %vm964, %v869, 0
        %971 = vmatprep.subr.mxu0 0.0
        %972 = vmatpush1.xpose.msra.mxu0 %v969
        %973 = vmatprep.subr.mxu0 0.0
        %974 = vmatpush1.xpose.msra.mxu0 0.0
        %975 = vmatprep.subr.mxu0 0.0
        %976 = vmatpush1.xpose.msra.mxu0 0.0
        %977 = vmatprep.subr.mxu0 0.0
        %978 = vmatpush1.xpose.msra.mxu0 0.0
        %979 = vmatprep.subr.mxu0 0.0
        %980 = vmatpush1.xpose.msra.mxu0 0.0
        %981 = vmatprep.subr.mxu0 0.0
        %982 = vmatpush1.xpose.msra.mxu0 0.0
        %983 = vmatprep.subr.mxu0 0.0
        %984 = vmatpush1.xpose.msra.mxu0 0.0
        %985 = vmatprep.subr.mxu0 0.0
        %986 = vmatpush1.xpose.msra.mxu0 0.0
        %987 = vmatprep.subr.mxu0 0.0
        %988 = vmatpush1.xpose.msra.mxu0 0.0
        %989 = vmatprep.subr.mxu0 0.0
        %990 = vmatpush1.xpose.msra.mxu0 0.0
        %991 = vmatprep.subr.mxu0 0.0
        %992 = vmatpush1.xpose.msra.mxu0 0.0
        %993 = vmatprep.subr.mxu0 0.0
        %994 = vmatpush1.xpose.msra.mxu0 0.0
        %995 = vmatprep.subr.mxu0 0.0
        %996 = vmatpush1.xpose.msra.mxu0 0.0
        %997 = vmatprep.subr.mxu0 0.0
        %998 = vmatpush1.xpose.msra.mxu0 0.0
        %999 = vmatprep.subr.mxu0 0.0
        %1000 = vmatpush1.xpose.msra.mxu0 0.0
        %1001 = vmatprep.subr.mxu0 0.0
        %1002 = vmatpush1.xpose.msra.mxu0 0.0
        %1003 = vmatprep.subr.mxu0 0.0
        %1004 = vmatpush1.xpose.msra.mxu0 0.0
        %1005 = vmatprep.subr.mxu0 0.0
        %1006 = vmatpush1.xpose.msra.mxu0 0.0
        %1007 = vmatprep.subr.mxu0 0.0
        %1008 = vmatpush1.xpose.msra.mxu0 0.0
        %1009 = vmatprep.subr.mxu0 0.0
        %1010 = vmatpush1.xpose.msra.mxu0 0.0
        %1011 = vmatprep.subr.mxu0 0.0
        %1012 = vmatpush1.xpose.msra.mxu0 0.0
        %1013 = vmatprep.subr.mxu0 0.0
        %1014 = vmatpush1.xpose.msra.mxu0 0.0
        %1015 = vmatprep.subr.mxu0 0.0
        %1016 = vmatpush1.xpose.msra.mxu0 0.0
        %1017 = vmatprep.subr.mxu0 0.0
        %1018 = vmatpush1.xpose.msra.mxu0 0.0
        %1019 = vmatprep.subr.mxu0 0.0
        %1020 = vmatpush1.xpose.msra.mxu0 0.0
        %1021 = vmatprep.subr.mxu0 0.0
        %1022 = vmatpush1.xpose.msra.mxu0 0.0
        %1023 = vmatprep.subr.mxu0 0.0
        %1024 = vmatpush1.xpose.msra.mxu0 0.0
        %1025 = vmatprep.subr.mxu0 0.0
        %1026 = vmatpush1.xpose.msra.mxu0 0.0
        %1027 = vmatprep.subr.mxu0 0.0
        %1028 = vmatpush1.xpose.msra.mxu0 0.0
        %1029 = vmatprep.subr.mxu0 0.0
        %1030 = vmatpush1.xpose.msra.mxu0 0.0
        %1031 = vmatprep.subr.mxu0 0.0
        %1032 = vmatpush1.xpose.msra.mxu0 0.0
        %1033 = vmatprep.subr.mxu0 0.0
        %1034 = vmatpush1.xpose.msra.mxu0 0.0
        %1035 = vmatprep.mubr.f32.mxu0 0.0
        %1036 = vmatmul.mubr.f32.gmra.mrb[0].mxu0 %v966
        %v1037 = vpop.f32.mrb[0].mxu0
        %v1038 = vadd.f32 0.0, %v1037
        %v1039 = vpop.f32.mrb[0].mxu0
        %1040 = vdwg.mxu0
        %v1041 = vmul.f32 %v1038, 0.17677669
        %vm1042 = vcmp.eq.s32.totalorder %v655, 0
        %v1043 = vsel %vm1042, -1e+09, %v1041
        %vm1044 = vcmask 64512
        %v1045 = vsel %vm1044, %v1043, -inf
        %1046 = vmax.xlane.f32.xlu0 %v1045
        %v1047 = vpop.xlane.xlu0 %1046
        %v1048 = vsub.f32 %v1043, %v1047
        %v1049 = vmul.f32 %v1048, 1.442695
        %v1050 = vpow.pop %v1049
        %v1051 = vsel %vm1044, %v1050, 0.0
        %1052 = vadd.xlane.f32.xlu0 %v1051
        %v1053 = vpop.xlane.xlu0 %1052
        %v1054 = vrcp.pop %v1053
        %v1055 = vmul.f32 %v1050, %v1054
        %v1057 = vsel %vm1044, %v1055, 0
        %1059 = vmatprep.subr.mxu0 0.0
        %1060 = vmatpush1.msra.mxu0 %v961
        %1061 = vmatprep.subr.mxu0 0.0
        %1062 = vmatpush1.msra.mxu0 0.0
        %1063 = vmatprep.subr.mxu0 0.0
        %1064 = vmatpush1.msra.mxu0 0.0
        %1065 = vmatprep.subr.mxu0 0.0
        %1066 = vmatpush1.msra.mxu0 0.0
        %1067 = vmatprep.subr.mxu0 0.0
        %1068 = vmatpush1.msra.mxu0 0.0
        %1069 = vmatprep.subr.mxu0 0.0
        %1070 = vmatpush1.msra.mxu0 0.0
        %1071 = vmatprep.subr.mxu0 0.0
        %1072 = vmatpush1.msra.mxu0 0.0
        %1073 = vmatprep.subr.mxu0 0.0
        %1074 = vmatpush1.msra.mxu0 0.0
        %1075 = vmatprep.subr.mxu0 0.0
        %1076 = vmatpush1.msra.mxu0 0.0
        %1077 = vmatprep.subr.mxu0 0.0
        %1078 = vmatpush1.msra.mxu0 0.0
        %1079 = vmatprep.subr.mxu0 0.0
        %1080 = vmatpush1.msra.mxu0 0.0
        %1081 = vmatprep.subr.mxu0 0.0
        %1082 = vmatpush1.msra.mxu0 0.0
        %1083 = vmatprep.subr.mxu0 0.0
        %1084 = vmatpush1.msra.mxu0 0.0
        %1085 = vmatprep.subr.mxu0 0.0
        %1086 = vmatpush1.msra.mxu0 0.0
        %1087 = vmatprep.subr.mxu0 0.0
        %1088 = vmatpush1.msra.mxu0 0.0
        %1089 = vmatprep.subr.mxu0 0.0
        %1090 = vmatpush1.msra.mxu0 0.0
        %1091 = vmatprep.subr.mxu0 0.0
        %1092 = vmatpush1.msra.mxu0 0.0
        %1093 = vmatprep.subr.mxu0 0.0
        %1094 = vmatpush1.msra.mxu0 0.0
        %1095 = vmatprep.subr.mxu0 0.0
        %1096 = vmatpush1.msra.mxu0 0.0
        %1097 = vmatprep.subr.mxu0 0.0
        %1098 = vmatpush1.msra.mxu0 0.0
        %1099 = vmatprep.subr.mxu0 0.0
        %1100 = vmatpush1.msra.mxu0 0.0
        %1101 = vmatprep.subr.mxu0 0.0
        %1102 = vmatpush1.msra.mxu0 0.0
        %1103 = vmatprep.subr.mxu0 0.0
        %1104 = vmatpush1.msra.mxu0 0.0
        %1105 = vmatprep.subr.mxu0 0.0
        %1106 = vmatpush1.msra.mxu0 0.0
        %1107 = vmatprep.subr.mxu0 0.0
        %1108 = vmatpush1.msra.mxu0 0.0
        %1109 = vmatprep.subr.mxu0 0.0
        %1110 = vmatpush1.msra.mxu0 0.0
        %1111 = vmatprep.subr.mxu0 0.0
        %1112 = vmatpush1.msra.mxu0 0.0
        %1113 = vmatprep.subr.mxu0 0.0
        %1114 = vmatpush1.msra.mxu0 0.0
        %1115 = vmatprep.subr.mxu0 0.0
        %1116 = vmatpush1.msra.mxu0 0.0
        %1117 = vmatprep.subr.mxu0 0.0
        %1118 = vmatpush1.msra.mxu0 0.0
        %1119 = vmatprep.subr.mxu0 0.0
        %1120 = vmatpush1.msra.mxu0 0.0
        %1121 = vmatprep.subr.mxu0 0.0
        %1122 = vmatpush1.msra.mxu0 0.0
        %1123 = vmatprep.mubr.f32.mxu0 0.0
        %1124 = vmatmul.mubr.f32.gmra.mrb[0].mxu0 %v1057
        %v1125 = vpop.f32.mrb[0].mxu0
        %v1126 = vadd.f32 0.0, %v1125
        %v1127 = vpop.f32.mrb[0].mxu0
        %1128 = vdwg.mxu0
        %1129 = vrot.lane.b32.xlu0 %v777, 96
        %v1130 = vpop.permute.xlu0 %1129
        %1131 = vrot.lane.b32.xlu0 %v869, 96
        %v1132 = vpop.permute.xlu0 %1131
        %v1133 = vsel %vm964, %v1130, 0
        %v1135 = vsel %vm964, %v1132, 0
        %1137 = vmatprep.subr.mxu0 0.0
        %1138 = vmatpush1.xpose.msra.mxu0 %v1135
        %1139 = vmatprep.subr.mxu0 0.0
        %1140 = vmatpush1.xpose.msra.mxu0 0.0
        %1141 = vmatprep.subr.mxu0 0.0
        %1142 = vmatpush1.xpose.msra.mxu0 0.0
        %1143 = vmatprep.subr.mxu0 0.0
        %1144 = vmatpush1.xpose.msra.mxu0 0.0
        %1145 = vmatprep.subr.mxu0 0.0
        %1146 = vmatpush1.xpose.msra.mxu0 0.0
        %1147 = vmatprep.subr.mxu0 0.0
        %1148 = vmatpush1.xpose.msra.mxu0 0.0
        %1149 = vmatprep.subr.mxu0 0.0
        %1150 = vmatpush1.xpose.msra.mxu0 0.0
        %1151 = vmatprep.subr.mxu0 0.0
        %1152 = vmatpush1.xpose.msra.mxu0 0.0
        %1153 = vmatprep.subr.mxu0 0.0
        %1154 = vmatpush1.xpose.msra.mxu0 0.0
        %1155 = vmatprep.subr.mxu0 0.0
        %1156 = vmatpush1.xpose.msra.mxu0 0.0
        %1157 = vmatprep.subr.mxu0 0.0
        %1158 = vmatpush1.xpose.msra.mxu0 0.0
        %1159 = vmatprep.subr.mxu0 0.0
        %1160 = vmatpush1.xpose.msra.mxu0 0.0
        %1161 = vmatprep.subr.mxu0 0.0
        %1162 = vmatpush1.xpose.msra.mxu0 0.0
        %1163 = vmatprep.subr.mxu0 0.0
        %1164 = vmatpush1.xpose.msra.mxu0 0.0
        %1165 = vmatprep.subr.mxu0 0.0
        %1166 = vmatpush1.xpose.msra.mxu0 0.0
        %1167 = vmatprep.subr.mxu0 0.0
        %1168 = vmatpush1.xpose.msra.mxu0 0.0
        %1169 = vmatprep.subr.mxu0 0.0
        %1170 = vmatpush1.xpose.msra.mxu0 0.0
        %1171 = vmatprep.subr.mxu0 0.0
        %1172 = vmatpush1.xpose.msra.mxu0 0.0
        %1173 = vmatprep.subr.mxu0 0.0
        %1174 = vmatpush1.xpose.msra.mxu0 0.0
        %1175 = vmatprep.subr.mxu0 0.0
        %1176 = vmatpush1.xpose.msra.mxu0 0.0
        %1177 = vmatprep.subr.mxu0 0.0
        %1178 = vmatpush1.xpose.msra.mxu0 0.0
        %1179 = vmatprep.subr.mxu0 0.0
        %1180 = vmatpush1.xpose.msra.mxu0 0.0
        %1181 = vmatprep.subr.mxu0 0.0
        %1182 = vmatpush1.xpose.msra.mxu0 0.0
        %1183 = vmatprep.subr.mxu0 0.0
        %1184 = vmatpush1.xpose.msra.mxu0 0.0
        %1185 = vmatprep.subr.mxu0 0.0
        %1186 = vmatpush1.xpose.msra.mxu0 0.0
        %1187 = vmatprep.subr.mxu0 0.0
        %1188 = vmatpush1.xpose.msra.mxu0 0.0
        %1189 = vmatprep.subr.mxu0 0.0
        %1190 = vmatpush1.xpose.msra.mxu0 0.0
        %1191 = vmatprep.subr.mxu0 0.0
        %1192 = vmatpush1.xpose.msra.mxu0 0.0
        %1193 = vmatprep.subr.mxu0 0.0
        %1194 = vmatpush1.xpose.msra.mxu0 0.0
        %1195 = vmatprep.subr.mxu0 0.0
        %1196 = vmatpush1.xpose.msra.mxu0 0.0
        %1197 = vmatprep.subr.mxu0 0.0
        %1198 = vmatpush1.xpose.msra.mxu0 0.0
        %1199 = vmatprep.subr.mxu0 0.0
        %1200 = vmatpush1.xpose.msra.mxu0 0.0
        %1201 = vmatprep.mubr.f32.mxu0 0.0
        %1202 = vmatmul.mubr.f32.gmra.mrb[0].mxu0 %v1133
        %v1203 = vpop.f32.mrb[0].mxu0
        %v1204 = vadd.f32 0.0, %v1203
        %v1205 = vpop.f32.mrb[0].mxu0
        %1206 = vdwg.mxu0
        %v1207 = vmul.f32 %v1204, 0.17677669
        %v1208 = vsel %vm1042, -1e+09, %v1207
        %v1209 = vsel %vm1044, %v1208, -inf
        %1210 = vmax.xlane.f32.xlu0 %v1209
        %v1211 = vpop.xlane.xlu0 %1210
        %v1212 = vsub.f32 %v1208, %v1211
        %v1213 = vmul.f32 %v1212, 1.442695
        %v1214 = vpow.pop %v1213
        %v1215 = vsel %vm1044, %v1214, 0.0
        %1216 = vadd.xlane.f32.xlu0 %v1215
        %v1217 = vpop.xlane.xlu0 %1216
        %v1218 = vrcp.pop %v1217
        %v1219 = vmul.f32 %v1214, %v1218
        %1221 = vrot.lane.b32.xlu0 %v961, 96
        %v1222 = vpop.permute.xlu0 %1221
        %v1225 = vsel %vm1044, %v1219, 0
        %1227 = vmatprep.subr.mxu0 0.0
        %1228 = vmatpush1.msra.mxu0 %v1222
        %1229 = vmatprep.subr.mxu0 0.0
        %1230 = vmatpush1.msra.mxu0 0.0
        %1231 = vmatprep.subr.mxu0 0.0
        %1232 = vmatpush1.msra.mxu0 0.0
        %1233 = vmatprep.subr.mxu0 0.0
        %1234 = vmatpush1.msra.mxu0 0.0
        %1235 = vmatprep.subr.mxu0 0.0
        %1236 = vmatpush1.msra.mxu0 0.0
        %1237 = vmatprep.subr.mxu0 0.0
        %1238 = vmatpush1.msra.mxu0 0.0
        %1239 = vmatprep.subr.mxu0 0.0
        %1240 = vmatpush1.msra.mxu0 0.0
        %1241 = vmatprep.subr.mxu0 0.0
        %1242 = vmatpush1.msra.mxu0 0.0
        %1243 = vmatprep.subr.mxu0 0.0
        %1244 = vmatpush1.msra.mxu0 0.0
        %1245 = vmatprep.subr.mxu0 0.0
        %1246 = vmatpush1.msra.mxu0 0.0
        %1247 = vmatprep.subr.mxu0 0.0
        %1248 = vmatpush1.msra.mxu0 0.0
        %1249 = vmatprep.subr.mxu0 0.0
        %1250 = vmatpush1.msra.mxu0 0.0
        %1251 = vmatprep.subr.mxu0 0.0
        %1252 = vmatpush1.msra.mxu0 0.0
        %1253 = vmatprep.subr.mxu0 0.0
        %1254 = vmatpush1.msra.mxu0 0.0
        %1255 = vmatprep.subr.mxu0 0.0
        %1256 = vmatpush1.msra.mxu0 0.0
        %1257 = vmatprep.subr.mxu0 0.0
        %1258 = vmatpush1.msra.mxu0 0.0
        %1259 = vmatprep.subr.mxu0 0.0
        %1260 = vmatpush1.msra.mxu0 0.0
        %1261 = vmatprep.subr.mxu0 0.0
        %1262 = vmatpush1.msra.mxu0 0.0
        %1263 = vmatprep.subr.mxu0 0.0
        %1264 = vmatpush1.msra.mxu0 0.0
        %1265 = vmatprep.subr.mxu0 0.0
        %1266 = vmatpush1.msra.mxu0 0.0
        %1267 = vmatprep.subr.mxu0 0.0
        %1268 = vmatpush1.msra.mxu0 0.0
        %1269 = vmatprep.subr.mxu0 0.0
        %1270 = vmatpush1.msra.mxu0 0.0
        %1271 = vmatprep.subr.mxu0 0.0
        %1272 = vmatpush1.msra.mxu0 0.0
        %1273 = vmatprep.subr.mxu0 0.0
        %1274 = vmatpush1.msra.mxu0 0.0
        %1275 = vmatprep.subr.mxu0 0.0
        %1276 = vmatpush1.msra.mxu0 0.0
        %1277 = vmatprep.subr.mxu0 0.0
        %1278 = vmatpush1.msra.mxu0 0.0
        %1279 = vmatprep.subr.mxu0 0.0
        %1280 = vmatpush1.msra.mxu0 0.0
        %1281 = vmatprep.subr.mxu0 0.0
        %1282 = vmatpush1.msra.mxu0 0.0
        %1283 = vmatprep.subr.mxu0 0.0
        %1284 = vmatpush1.msra.mxu0 0.0
        %1285 = vmatprep.subr.mxu0 0.0
        %1286 = vmatpush1.msra.mxu0 0.0
        %1287 = vmatprep.subr.mxu0 0.0
        %1288 = vmatpush1.msra.mxu0 0.0
        %1289 = vmatprep.subr.mxu0 0.0
        %1290 = vmatpush1.msra.mxu0 0.0
        %1291 = vmatprep.mubr.f32.mxu0 0.0
        %1292 = vmatmul.mubr.f32.gmra.mrb[0].mxu0 %v1225
        %v1293 = vpop.f32.mrb[0].mxu0
        %v1294 = vadd.f32 0.0, %v1293
        %v1295 = vpop.f32.mrb[0].mxu0
        %1296 = vdwg.mxu0
        %1297 = vrot.lane.b32.xlu0 %v777, 64
        %v1298 = vpop.permute.xlu0 %1297
        %1299 = vrot.lane.b32.xlu0 %v869, 64
        %v1300 = vpop.permute.xlu0 %1299
        %v1301 = vsel %vm964, %v1298, 0
        %v1303 = vsel %vm964, %v1300, 0
        %1305 = vmatprep.subr.mxu0 0.0
        %1306 = vmatpush1.xpose.msra.mxu0 %v1303
        %1307 = vmatprep.subr.mxu0 0.0
        %1308 = vmatpush1.xpose.msra.mxu0 0.0
        %1309 = vmatprep.subr.mxu0 0.0
        %1310 = vmatpush1.xpose.msra.mxu0 0.0
        %1311 = vmatprep.subr.mxu0 0.0
        %1312 = vmatpush1.xpose.msra.mxu0 0.0
        %1313 = vmatprep.subr.mxu0 0.0
        %1314 = vmatpush1.xpose.msra.mxu0 0.0
        %1315 = vmatprep.subr.mxu0 0.0
        %1316 = vmatpush1.xpose.msra.mxu0 0.0
        %1317 = vmatprep.subr.mxu0 0.0
        %1318 = vmatpush1.xpose.msra.mxu0 0.0
        %1319 = vmatprep.subr.mxu0 0.0
        %1320 = vmatpush1.xpose.msra.mxu0 0.0
        %1321 = vmatprep.subr.mxu0 0.0
        %1322 = vmatpush1.xpose.msra.mxu0 0.0
        %1323 = vmatprep.subr.mxu0 0.0
        %1324 = vmatpush1.xpose.msra.mxu0 0.0
        %1325 = vmatprep.subr.mxu0 0.0
        %1326 = vmatpush1.xpose.msra.mxu0 0.0
        %1327 = vmatprep.subr.mxu0 0.0
        %1328 = vmatpush1.xpose.msra.mxu0 0.0
        %1329 = vmatprep.subr.mxu0 0.0
        %1330 = vmatpush1.xpose.msra.mxu0 0.0
        %1331 = vmatprep.subr.mxu0 0.0
        %1332 = vmatpush1.xpose.msra.mxu0 0.0
        %1333 = vmatprep.subr.mxu0 0.0
        %1334 = vmatpush1.xpose.msra.mxu0 0.0
        %1335 = vmatprep.subr.mxu0 0.0
        %1336 = vmatpush1.xpose.msra.mxu0 0.0
        %1337 = vmatprep.subr.mxu0 0.0
        %1338 = vmatpush1.xpose.msra.mxu0 0.0
        %1339 = vmatprep.subr.mxu0 0.0
        %1340 = vmatpush1.xpose.msra.mxu0 0.0
        %1341 = vmatprep.subr.mxu0 0.0
        %1342 = vmatpush1.xpose.msra.mxu0 0.0
        %1343 = vmatprep.subr.mxu0 0.0
        %1344 = vmatpush1.xpose.msra.mxu0 0.0
        %1345 = vmatprep.subr.mxu0 0.0
        %1346 = vmatpush1.xpose.msra.mxu0 0.0
        %1347 = vmatprep.subr.mxu0 0.0
        %1348 = vmatpush1.xpose.msra.mxu0 0.0
        %1349 = vmatprep.subr.mxu0 0.0
        %1350 = vmatpush1.xpose.msra.mxu0 0.0
        %1351 = vmatprep.subr.mxu0 0.0
        %1352 = vmatpush1.xpose.msra.mxu0 0.0
        %1353 = vmatprep.subr.mxu0 0.0
        %1354 = vmatpush1.xpose.msra.mxu0 0.0
        %1355 = vmatprep.subr.mxu0 0.0
        %1356 = vmatpush1.xpose.msra.mxu0 0.0
        %1357 = vmatprep.subr.mxu0 0.0
        %1358 = vmatpush1.xpose.msra.mxu0 0.0
        %1359 = vmatprep.subr.mxu0 0.0
        %1360 = vmatpush1.xpose.msra.mxu0 0.0
        %1361 = vmatprep.subr.mxu0 0.0
        %1362 = vmatpush1.xpose.msra.mxu0 0.0
        %1363 = vmatprep.subr.mxu0 0.0
        %1364 = vmatpush1.xpose.msra.mxu0 0.0
        %1365 = vmatprep.subr.mxu0 0.0
        %1366 = vmatpush1.xpose.msra.mxu0 0.0
        %1367 = vmatprep.subr.mxu0 0.0
        %1368 = vmatpush1.xpose.msra.mxu0 0.0
        %1369 = vmatprep.mubr.f32.mxu0 0.0
        %1370 = vmatmul.mubr.f32.gmra.mrb[0].mxu0 %v1301
        %v1371 = vpop.f32.mrb[0].mxu0
        %v1372 = vadd.f32 0.0, %v1371
        %v1373 = vpop.f32.mrb[0].mxu0
        %1374 = vdwg.mxu0
        %v1375 = vmul.f32 %v1372, 0.17677669
        %v1376 = vsel %vm1042, -1e+09, %v1375
        %v1377 = vsel %vm1044, %v1376, -inf
        %1378 = vmax.xlane.f32.xlu0 %v1377
        %v1379 = vpop.xlane.xlu0 %1378
        %v1380 = vsub.f32 %v1376, %v1379
        %v1381 = vmul.f32 %v1380, 1.442695
        %v1382 = vpow.pop %v1381
        %v1383 = vsel %vm1044, %v1382, 0.0
        %1384 = vadd.xlane.f32.xlu0 %v1383
        %v1385 = vpop.xlane.xlu0 %1384
        %v1386 = vrcp.pop %v1385
        %v1387 = vmul.f32 %v1382, %v1386
        %1388 = vrot.lane.b32.xlu0 %v961, 64
        %v1389 = vpop.permute.xlu0 %1388
        %v1392 = vsel %vm1044, %v1387, 0
        %1394 = vmatprep.subr.mxu0 0.0
        %1395 = vmatpush1.msra.mxu0 %v1389
        %1396 = vmatprep.subr.mxu0 0.0
        %1397 = vmatpush1.msra.mxu0 0.0
        %1398 = vmatprep.subr.mxu0 0.0
        %1399 = vmatpush1.msra.mxu0 0.0
        %1400 = vmatprep.subr.mxu0 0.0
        %1401 = vmatpush1.msra.mxu0 0.0
        %1402 = vmatprep.subr.mxu0 0.0
        %1403 = vmatpush1.msra.mxu0 0.0
        %1404 = vmatprep.subr.mxu0 0.0
        %1405 = vmatpush1.msra.mxu0 0.0
        %1406 = vmatprep.subr.mxu0 0.0
        %1407 = vmatpush1.msra.mxu0 0.0
        %1408 = vmatprep.subr.mxu0 0.0
        %1409 = vmatpush1.msra.mxu0 0.0
        %1410 = vmatprep.subr.mxu0 0.0
        %1411 = vmatpush1.msra.mxu0 0.0
        %1412 = vmatprep.subr.mxu0 0.0
        %1413 = vmatpush1.msra.mxu0 0.0
        %1414 = vmatprep.subr.mxu0 0.0
        %1415 = vmatpush1.msra.mxu0 0.0
        %1416 = vmatprep.subr.mxu0 0.0
        %1417 = vmatpush1.msra.mxu0 0.0
        %1418 = vmatprep.subr.mxu0 0.0
        %1419 = vmatpush1.msra.mxu0 0.0
        %1420 = vmatprep.subr.mxu0 0.0
        %1421 = vmatpush1.msra.mxu0 0.0
        %1422 = vmatprep.subr.mxu0 0.0
        %1423 = vmatpush1.msra.mxu0 0.0
        %1424 = vmatprep.subr.mxu0 0.0
        %1425 = vmatpush1.msra.mxu0 0.0
        %1426 = vmatprep.subr.mxu0 0.0
        %1427 = vmatpush1.msra.mxu0 0.0
        %1428 = vmatprep.subr.mxu0 0.0
        %1429 = vmatpush1.msra.mxu0 0.0
        %1430 = vmatprep.subr.mxu0 0.0
        %1431 = vmatpush1.msra.mxu0 0.0
        %1432 = vmatprep.subr.mxu0 0.0
        %1433 = vmatpush1.msra.mxu0 0.0
        %1434 = vmatprep.subr.mxu0 0.0
        %1435 = vmatpush1.msra.mxu0 0.0
        %1436 = vmatprep.subr.mxu0 0.0
        %1437 = vmatpush1.msra.mxu0 0.0
        %1438 = vmatprep.subr.mxu0 0.0
        %1439 = vmatpush1.msra.mxu0 0.0
        %1440 = vmatprep.subr.mxu0 0.0
        %1441 = vmatpush1.msra.mxu0 0.0
        %1442 = vmatprep.subr.mxu0 0.0
        %1443 = vmatpush1.msra.mxu0 0.0
        %1444 = vmatprep.subr.mxu0 0.0
        %1445 = vmatpush1.msra.mxu0 0.0
        %1446 = vmatprep.subr.mxu0 0.0
        %1447 = vmatpush1.msra.mxu0 0.0
        %1448 = vmatprep.subr.mxu0 0.0
        %1449 = vmatpush1.msra.mxu0 0.0
        %1450 = vmatprep.subr.mxu0 0.0
        %1451 = vmatpush1.msra.mxu0 0.0
        %1452 = vmatprep.subr.mxu0 0.0
        %1453 = vmatpush1.msra.mxu0 0.0
        %1454 = vmatprep.subr.mxu0 0.0
        %1455 = vmatpush1.msra.mxu0 0.0
        %1456 = vmatprep.subr.mxu0 0.0
        %1457 = vmatpush1.msra.mxu0 0.0
        %1458 = vmatprep.mubr.f32.mxu0 0.0
        %1459 = vmatmul.mubr.f32.gmra.mrb[0].mxu0 %v1392
        %v1460 = vpop.f32.mrb[0].mxu0
        %v1461 = vadd.f32 0.0, %v1460
        %v1462 = vpop.f32.mrb[0].mxu0
        %1463 = vdwg.mxu0
        %1464 = vrot.lane.b32.xlu0 %v777, 32
        %v1465 = vpop.permute.xlu0 %1464
        %1466 = vrot.lane.b32.xlu0 %v869, 32
        %v1467 = vpop.permute.xlu0 %1466
        %v1468 = vsel %vm964, %v1465, 0
        %v1470 = vsel %vm964, %v1467, 0
        %1472 = vmatprep.subr.mxu0 0.0
        %1473 = vmatpush1.xpose.msra.mxu0 %v1470
        %1474 = vmatprep.subr.mxu0 0.0
        %1475 = vmatpush1.xpose.msra.mxu0 0.0
        %1476 = vmatprep.subr.mxu0 0.0
        %1477 = vmatpush1.xpose.msra.mxu0 0.0
        %1478 = vmatprep.subr.mxu0 0.0
        %1479 = vmatpush1.xpose.msra.mxu0 0.0
        %1480 = vmatprep.subr.mxu0 0.0
        %1481 = vmatpush1.xpose.msra.mxu0 0.0
        %1482 = vmatprep.subr.mxu0 0.0
        %1483 = vmatpush1.xpose.msra.mxu0 0.0
        %1484 = vmatprep.subr.mxu0 0.0
        %1485 = vmatpush1.xpose.msra.mxu0 0.0
        %1486 = vmatprep.subr.mxu0 0.0
        %1487 = vmatpush1.xpose.msra.mxu0 0.0
        %1488 = vmatprep.subr.mxu0 0.0
        %1489 = vmatpush1.xpose.msra.mxu0 0.0
        %1490 = vmatprep.subr.mxu0 0.0
        %1491 = vmatpush1.xpose.msra.mxu0 0.0
        %1492 = vmatprep.subr.mxu0 0.0
        %1493 = vmatpush1.xpose.msra.mxu0 0.0
        %1494 = vmatprep.subr.mxu0 0.0
        %1495 = vmatpush1.xpose.msra.mxu0 0.0
        %1496 = vmatprep.subr.mxu0 0.0
        %1497 = vmatpush1.xpose.msra.mxu0 0.0
        %1498 = vmatprep.subr.mxu0 0.0
        %1499 = vmatpush1.xpose.msra.mxu0 0.0
        %1500 = vmatprep.subr.mxu0 0.0
        %1501 = vmatpush1.xpose.msra.mxu0 0.0
        %1502 = vmatprep.subr.mxu0 0.0
        %1503 = vmatpush1.xpose.msra.mxu0 0.0
        %1504 = vmatprep.subr.mxu0 0.0
        %1505 = vmatpush1.xpose.msra.mxu0 0.0
        %1506 = vmatprep.subr.mxu0 0.0
        %1507 = vmatpush1.xpose.msra.mxu0 0.0
        %1508 = vmatprep.subr.mxu0 0.0
        %1509 = vmatpush1.xpose.msra.mxu0 0.0
        %1510 = vmatprep.subr.mxu0 0.0
        %1511 = vmatpush1.xpose.msra.mxu0 0.0
        %1512 = vmatprep.subr.mxu0 0.0
        %1513 = vmatpush1.xpose.msra.mxu0 0.0
        %1514 = vmatprep.subr.mxu0 0.0
        %1515 = vmatpush1.xpose.msra.mxu0 0.0
        %1516 = vmatprep.subr.mxu0 0.0
        %1517 = vmatpush1.xpose.msra.mxu0 0.0
        %1518 = vmatprep.subr.mxu0 0.0
        %1519 = vmatpush1.xpose.msra.mxu0 0.0
        %1520 = vmatprep.subr.mxu0 0.0
        %1521 = vmatpush1.xpose.msra.mxu0 0.0
        %1522 = vmatprep.subr.mxu0 0.0
        %1523 = vmatpush1.xpose.msra.mxu0 0.0
        %1524 = vmatprep.subr.mxu0 0.0
        %1525 = vmatpush1.xpose.msra.mxu0 0.0
        %1526 = vmatprep.subr.mxu0 0.0
        %1527 = vmatpush1.xpose.msra.mxu0 0.0
        %1528 = vmatprep.subr.mxu0 0.0
        %1529 = vmatpush1.xpose.msra.mxu0 0.0
        %1530 = vmatprep.subr.mxu0 0.0
        %1531 = vmatpush1.xpose.msra.mxu0 0.0
        %1532 = vmatprep.subr.mxu0 0.0
        %1533 = vmatpush1.xpose.msra.mxu0 0.0
        %1534 = vmatprep.subr.mxu0 0.0
        %1535 = vmatpush1.xpose.msra.mxu0 0.0
        %1536 = vmatprep.mubr.f32.mxu0 0.0
        %1537 = vmatmul.mubr.f32.gmra.mrb[0].mxu0 %v1468
        %v1538 = vpop.f32.mrb[0].mxu0
        %v1539 = vadd.f32 0.0, %v1538
        %v1540 = vpop.f32.mrb[0].mxu0
        %1541 = vdwg.mxu0
        %v1542 = vmul.f32 %v1539, 0.17677669
        %v1543 = vsel %vm1042, -1e+09, %v1542
        %v1544 = vsel %vm1044, %v1543, -inf
        %1545 = vmax.xlane.f32.xlu0 %v1544
        %v1546 = vpop.xlane.xlu0 %1545
        %v1547 = vsub.f32 %v1543, %v1546
        %v1548 = vmul.f32 %v1547, 1.442695
        %v1549 = vpow.pop %v1548
        %v1550 = vsel %vm1044, %v1549, 0.0
        %1551 = vadd.xlane.f32.xlu0 %v1550
        %v1552 = vpop.xlane.xlu0 %1551
        %v1553 = vrcp.pop %v1552
        %v1554 = vmul.f32 %v1549, %v1553
        %1555 = vrot.lane.b32.xlu0 %v961, 32
        %v1556 = vpop.permute.xlu0 %1555
        %v1559 = vsel %vm1044, %v1554, 0
        %1561 = vmatprep.subr.mxu0 0.0
        %1562 = vmatpush1.msra.mxu0 %v1556
        %1563 = vmatprep.subr.mxu0 0.0
        %1564 = vmatpush1.msra.mxu0 0.0
        %1565 = vmatprep.subr.mxu0 0.0
        %1566 = vmatpush1.msra.mxu0 0.0
        %1567 = vmatprep.subr.mxu0 0.0
        %1568 = vmatpush1.msra.mxu0 0.0
        %1569 = vmatprep.subr.mxu0 0.0
        %1570 = vmatpush1.msra.mxu0 0.0
        %1571 = vmatprep.subr.mxu0 0.0
        %1572 = vmatpush1.msra.mxu0 0.0
        %1573 = vmatprep.subr.mxu0 0.0
        %1574 = vmatpush1.msra.mxu0 0.0
        %1575 = vmatprep.subr.mxu0 0.0
        %1576 = vmatpush1.msra.mxu0 0.0
        %1577 = vmatprep.subr.mxu0 0.0
        %1578 = vmatpush1.msra.mxu0 0.0
        %1579 = vmatprep.subr.mxu0 0.0
        %1580 = vmatpush1.msra.mxu0 0.0
        %1581 = vmatprep.subr.mxu0 0.0
        %1582 = vmatpush1.msra.mxu0 0.0
        %1583 = vmatprep.subr.mxu0 0.0
        %1584 = vmatpush1.msra.mxu0 0.0
        %1585 = vmatprep.subr.mxu0 0.0
        %1586 = vmatpush1.msra.mxu0 0.0
        %1587 = vmatprep.subr.mxu0 0.0
        %1588 = vmatpush1.msra.mxu0 0.0
        %1589 = vmatprep.subr.mxu0 0.0
        %1590 = vmatpush1.msra.mxu0 0.0
        %1591 = vmatprep.subr.mxu0 0.0
        %1592 = vmatpush1.msra.mxu0 0.0
        %1593 = vmatprep.subr.mxu0 0.0
        %1594 = vmatpush1.msra.mxu0 0.0
        %1595 = vmatprep.subr.mxu0 0.0
        %1596 = vmatpush1.msra.mxu0 0.0
        %1597 = vmatprep.subr.mxu0 0.0
        %1598 = vmatpush1.msra.mxu0 0.0
        %1599 = vmatprep.subr.mxu0 0.0
        %1600 = vmatpush1.msra.mxu0 0.0
        %1601 = vmatprep.subr.mxu0 0.0
        %1602 = vmatpush1.msra.mxu0 0.0
        %1603 = vmatprep.subr.mxu0 0.0
        %1604 = vmatpush1.msra.mxu0 0.0
        %1605 = vmatprep.subr.mxu0 0.0
        %1606 = vmatpush1.msra.mxu0 0.0
        %1607 = vmatprep.subr.mxu0 0.0
        %1608 = vmatpush1.msra.mxu0 0.0
        %1609 = vmatprep.subr.mxu0 0.0
        %1610 = vmatpush1.msra.mxu0 0.0
        %1611 = vmatprep.subr.mxu0 0.0
        %1612 = vmatpush1.msra.mxu0 0.0
        %1613 = vmatprep.subr.mxu0 0.0
        %1614 = vmatpush1.msra.mxu0 0.0
        %1615 = vmatprep.subr.mxu0 0.0
        %1616 = vmatpush1.msra.mxu0 0.0
        %1617 = vmatprep.subr.mxu0 0.0
        %1618 = vmatpush1.msra.mxu0 0.0
        %1619 = vmatprep.subr.mxu0 0.0
        %1620 = vmatpush1.msra.mxu0 0.0
        %1621 = vmatprep.subr.mxu0 0.0
        %1622 = vmatpush1.msra.mxu0 0.0
        %1623 = vmatprep.subr.mxu0 0.0
        %1624 = vmatpush1.msra.mxu0 0.0
        %1625 = vmatprep.mubr.f32.mxu0 0.0
        %1626 = vmatmul.mubr.f32.gmra.mrb[0].mxu0 %v1559
        %v1627 = vpop.f32.mrb[0].mxu0
        %v1628 = vadd.f32 0.0, %v1627
        %v1629 = vpop.f32.mrb[0].mxu0
        %1630 = vdwg.mxu0
        %1632 = vrot.lane.b32.xlu0 %v1294, 32
        %v1633 = vpop.permute.xlu0 %1632
        %1636 = vrot.lane.b32.xlu0 %v1461, 64
        %v1637 = vpop.permute.xlu0 %1636
        %1640 = vrot.lane.b32.xlu0 %v1628, 96
        %v1641 = vpop.permute.xlu0 %1640
        %v1643 = vsel %vm964, %v1126, %v1633
        %vm1644 = vcmask 523264
        %v1645 = vsel %vm1644, %v1643, %v1637
        %vm1646 = vcmask 785408
        %v1647 = vsel %vm1646, %v1645, %v1641
        %s1648 = scalar_lea.vmem [#allocation10], 384
        %v1649 = vld [vmem:[%s1648] sm:$0xff]
        %v1650 = vld [vmem:[%s1648 + $0x8] sm:$0xff]
        %v1651 = vld [vmem:[%s1648 + $0x10] sm:$0xff]
        %v1652 = vld [vmem:[%s1648 + $0x18] sm:$0xff]
        %v1653 = vld [vmem:[%s1648 + $0x20] sm:$0xff]
        %v1654 = vld [vmem:[%s1648 + $0x28] sm:$0xff]
        %v1655 = vld [vmem:[%s1648 + $0x30] sm:$0xff]
        %v1656 = vld [vmem:[%s1648 + $0x38] sm:$0xff]
        %v1657 = vld [vmem:[%s1648 + $0x40] sm:$0xff]
        %v1658 = vld [vmem:[%s1648 + $0x48] sm:$0xff]
        %v1659 = vld [vmem:[%s1648 + $0x50] sm:$0xff]
        %v1660 = vld [vmem:[%s1648 + $0x58] sm:$0xff]
        %v1661 = vld [vmem:[%s1648 + $0x60] sm:$0xff]
        %v1662 = vld [vmem:[%s1648 + $0x68] sm:$0xff]
        %v1663 = vld [vmem:[%s1648 + $0x70] sm:$0xff]
        %v1664 = vld [vmem:[%s1648 + $0x78] sm:$0xff]
        %v1665 = vld [vmem:[%s7 + $0x3] sm:$0x1]
        %v1666 = vlaneseq
        %v1667 = vshrl.u32 %v1666, 7
        %v1668 = vsub.s32 0, %v1667
        %v1669 = vrot.slane %v1665, %v1668
        %1670 = vmatprep.subr.mxu0 0.0
        %1671 = vmatpush1.msra.mxu0 %v1649
        %1672 = vmatprep.subr.mxu0 0.0
        %1673 = vmatpush1.msra.mxu0 %v1650
        %1674 = vmatprep.subr.mxu0 0.0
        %1675 = vmatpush1.msra.mxu0 %v1651
        %1676 = vmatprep.subr.mxu0 0.0
        %1677 = vmatpush1.msra.mxu0 %v1652
        %1678 = vmatprep.subr.mxu0 0.0
        %1679 = vmatpush1.msra.mxu0 %v1653
        %1680 = vmatprep.subr.mxu0 0.0
        %1681 = vmatpush1.msra.mxu0 %v1654
        %1682 = vmatprep.subr.mxu0 0.0
        %1683 = vmatpush1.msra.mxu0 %v1655
        %1684 = vmatprep.subr.mxu0 0.0
        %1685 = vmatpush1.msra.mxu0 %v1656
        %1686 = vmatprep.subr.mxu0 0.0
        %1687 = vmatpush1.msra.mxu0 %v1657
        %1688 = vmatprep.subr.mxu0 0.0
        %1689 = vmatpush1.msra.mxu0 %v1658
        %1690 = vmatprep.subr.mxu0 0.0
        %1691 = vmatpush1.msra.mxu0 %v1659
        %1692 = vmatprep.subr.mxu0 0.0
        %1693 = vmatpush1.msra.mxu0 %v1660
        %1694 = vmatprep.subr.mxu0 0.0
        %1695 = vmatpush1.msra.mxu0 %v1661
        %1696 = vmatprep.subr.mxu0 0.0
        %1697 = vmatpush1.msra.mxu0 %v1662
        %1698 = vmatprep.subr.mxu0 0.0
        %1699 = vmatpush1.msra.mxu0 %v1663
        %1700 = vmatprep.subr.mxu0 0.0
        %1701 = vmatpush1.msra.mxu0 %v1664
        %1702 = vmatprep.subr.mxu0 0.0
        %1703 = vmatpush1.msra.mxu0 0.0
        %1704 = vmatprep.subr.mxu0 0.0
        %1705 = vmatpush1.msra.mxu0 0.0
        %1706 = vmatprep.subr.mxu0 0.0
        %1707 = vmatpush1.msra.mxu0 0.0
        %1708 = vmatprep.subr.mxu0 0.0
        %1709 = vmatpush1.msra.mxu0 0.0
        %1710 = vmatprep.subr.mxu0 0.0
        %1711 = vmatpush1.msra.mxu0 0.0
        %1712 = vmatprep.subr.mxu0 0.0
        %1713 = vmatpush1.msra.mxu0 0.0
        %1714 = vmatprep.subr.mxu0 0.0
        %1715 = vmatpush1.msra.mxu0 0.0
        %1716 = vmatprep.subr.mxu0 0.0
        %1717 = vmatpush1.msra.mxu0 0.0
        %1718 = vmatprep.subr.mxu0 0.0
        %1719 = vmatpush1.msra.mxu0 0.0
        %1720 = vmatprep.subr.mxu0 0.0
        %1721 = vmatpush1.msra.mxu0 0.0
        %1722 = vmatprep.subr.mxu0 0.0
        %1723 = vmatpush1.msra.mxu0 0.0
        %1724 = vmatprep.subr.mxu0 0.0
        %1725 = vmatpush1.msra.mxu0 0.0
        %1726 = vmatprep.subr.mxu0 0.0
        %1727 = vmatpush1.msra.mxu0 0.0
        %1728 = vmatprep.subr.mxu0 0.0
        %1729 = vmatpush1.msra.mxu0 0.0
        %1730 = vmatprep.subr.mxu0 0.0
        %1731 = vmatpush1.msra.mxu0 0.0
        %1732 = vmatprep.subr.mxu0 0.0
        %1733 = vmatpush1.msra.mxu0 0.0
        %1734 = vmatprep.mubr.f32.mxu0 0.0
        %1735 = vmatmul.mubr.f32.gmra.mrb[0].mxu0 %v1647
        %v1736 = vpop.f32.mrb[0].mxu0
        %v1737 = vadd.f32 %v1669, %v1736
        %v1738 = vpop.f32.mrb[0].mxu0
        %1739 = vdwg.mxu0
        %v1740 = vadd.f32 %v652, %v1737
        %v1741 = vld [vmem:[%s4 + $0x1] sm:$0x1]
        %v1742 = vld [vmem:[%s5 + $0x1] sm:$0x1]
        %1743 = vadd.xlane.f32.xlu0 %v1740
        %v1744 = vpop.xlane.xlu0 %1743
        %v1745 = vmul.f32 %v1744, %v661
        %v1746 = vsub.f32 %v1740, %v1745
        %v1747 = vmul.f32 %v1746, %v1746
        %1748 = vadd.xlane.f32.xlu0 %v1747
        %v1749 = vpop.xlane.xlu0 %1748
        %v1750 = vmul.f32 %v1749, %v667
        %v1751 = vrsqrt.pop %v1750
        %v1752 = vmul.f32 %v1750, %v1751
        %vm1753 = vcmp.eq.f32.partialorder %v1750, inf
        %v1754 = vsel %vm1753, %v1750, %v1752
        %vm1755 = vcmp.eq.f32.partialorder %v1750, 0.0
        %v1756 = vand.u32 %v1750, 2147483648
        %v1757 = vsel %vm1755, %v1756, %v1754
        %v1758 = vlaneseq
        %v1759 = vshrl.u32 %v1758, 7
        %v1760 = vsub.s32 0, %v1759
        %v1761 = vrot.slane %v1741, %v1760
        %v1762 = vmul.f32 %v1761, %v1746
        %v1763 = vadd.f32 %v1757, 1e-06
        %v1764 = vrcp.pop %v1763
        %v1765 = vmul.f32 %v1762, %v1764
        %v1766 = vlaneseq
        %v1767 = vshrl.u32 %v1766, 7
        %v1768 = vsub.s32 0, %v1767
        %v1769 = vrot.slane %v1742, %v1768
        %v1770 = vadd.f32 %v1765, %v1769
        %v1771 = vld [vmem:[#allocation11] sm:$0xff]
        %v1772 = vld [vmem:[#allocation11 + $0x8] sm:$0xff]
        %v1773 = vld [vmem:[#allocation11 + $0x10] sm:$0xff]
        %v1774 = vld [vmem:[#allocation11 + $0x18] sm:$0xff]
        %v1775 = vld [vmem:[#allocation11 + $0x20] sm:$0xff]
        %v1776 = vld [vmem:[#allocation11 + $0x28] sm:$0xff]
        %v1777 = vld [vmem:[#allocation11 + $0x30] sm:$0xff]
        %v1778 = vld [vmem:[#allocation11 + $0x38] sm:$0xff]
        %v1779 = vld [vmem:[#allocation11 + $0x40] sm:$0xff]
        %v1780 = vld [vmem:[#allocation11 + $0x48] sm:$0xff]
        %v1781 = vld [vmem:[#allocation11 + $0x50] sm:$0xff]
        %v1782 = vld [vmem:[#allocation11 + $0x58] sm:$0xff]
        %v1783 = vld [vmem:[#allocation11 + $0x60] sm:$0xff]
        %v1784 = vld [vmem:[#allocation11 + $0x68] sm:$0xff]
        %v1785 = vld [vmem:[#allocation11 + $0x70] sm:$0xff]
        %v1786 = vld [vmem:[#allocation11 + $0x78] sm:$0xff]
        %v1787 = vld [vmem:[%s9] sm:$0x1]
        %v1788 = vlaneseq
        %v1789 = vshrl.u32 %v1788, 7
        %v1790 = vsub.s32 0, %v1789
        %v1791 = vrot.slane %v1787, %v1790
        %1792 = vmatprep.subr.mxu0 0.0
        %1793 = vmatpush1.msra.mxu0 %v1771
        %1794 = vmatprep.subr.mxu0 0.0
        %1795 = vmatpush1.msra.mxu0 %v1772
        %1796 = vmatprep.subr.mxu0 0.0
        %1797 = vmatpush1.msra.mxu0 %v1773
        %1798 = vmatprep.subr.mxu0 0.0
        %1799 = vmatpush1.msra.mxu0 %v1774
        %1800 = vmatprep.subr.mxu0 0.0
        %1801 = vmatpush1.msra.mxu0 %v1775
        %1802 = vmatprep.subr.mxu0 0.0
        %1803 = vmatpush1.msra.mxu0 %v1776
        %1804 = vmatprep.subr.mxu0 0.0
        %1805 = vmatpush1.msra.mxu0 %v1777
        %1806 = vmatprep.subr.mxu0 0.0
        %1807 = vmatpush1.msra.mxu0 %v1778
        %1808 = vmatprep.subr.mxu0 0.0
        %1809 = vmatpush1.msra.mxu0 %v1779
        %1810 = vmatprep.subr.mxu0 0.0
        %1811 = vmatpush1.msra.mxu0 %v1780
        %1812 = vmatprep.subr.mxu0 0.0
        %1813 = vmatpush1.msra.mxu0 %v1781
        %1814 = vmatprep.subr.mxu0 0.0
        %1815 = vmatpush1.msra.mxu0 %v1782
        %1816 = vmatprep.subr.mxu0 0.0
        %1817 = vmatpush1.msra.mxu0 %v1783
        %1818 = vmatprep.subr.mxu0 0.0
        %1819 = vmatpush1.msra.mxu0 %v1784
        %1820 = vmatprep.subr.mxu0 0.0
        %1821 = vmatpush1.msra.mxu0 %v1785
        %1822 = vmatprep.subr.mxu0 0.0
        %1823 = vmatpush1.msra.mxu0 %v1786
        %1824 = vmatprep.subr.mxu0 0.0
        %1825 = vmatpush1.msra.mxu0 0.0
        %1826 = vmatprep.subr.mxu0 0.0
        %1827 = vmatpush1.msra.mxu0 0.0
        %1828 = vmatprep.subr.mxu0 0.0
        %1829 = vmatpush1.msra.mxu0 0.0
        %1830 = vmatprep.subr.mxu0 0.0
        %1831 = vmatpush1.msra.mxu0 0.0
        %1832 = vmatprep.subr.mxu0 0.0
        %1833 = vmatpush1.msra.mxu0 0.0
        %1834 = vmatprep.subr.mxu0 0.0
        %1835 = vmatpush1.msra.mxu0 0.0
        %1836 = vmatprep.subr.mxu0 0.0
        %1837 = vmatpush1.msra.mxu0 0.0
        %1838 = vmatprep.subr.mxu0 0.0
        %1839 = vmatpush1.msra.mxu0 0.0
        %1840 = vmatprep.subr.mxu0 0.0
        %1841 = vmatpush1.msra.mxu0 0.0
        %1842 = vmatprep.subr.mxu0 0.0
        %1843 = vmatpush1.msra.mxu0 0.0
        %1844 = vmatprep.subr.mxu0 0.0
        %1845 = vmatpush1.msra.mxu0 0.0
        %1846 = vmatprep.subr.mxu0 0.0
        %1847 = vmatpush1.msra.mxu0 0.0
        %1848 = vmatprep.subr.mxu0 0.0
        %1849 = vmatpush1.msra.mxu0 0.0
        %1850 = vmatprep.subr.mxu0 0.0
        %1851 = vmatpush1.msra.mxu0 0.0
        %1852 = vmatprep.subr.mxu0 0.0
        %1853 = vmatpush1.msra.mxu0 0.0
        %1854 = vmatprep.subr.mxu0 0.0
        %1855 = vmatpush1.msra.mxu0 0.0
        %1856 = vmatprep.mubr.f32.mxu0 0.0
        %1857 = vmatmul.mubr.f32.gmra.mrb[0].mxu0 %v1770
        %v1858 = vpop.f32.mrb[0].mxu0
        %v1859 = vadd.f32 %v1791, %v1858
        %v1860 = vpop.f32.mrb[0].mxu0
        %1861 = vdwg.mxu0
        %s1862 = scalar_lea.vmem [#allocation11], 128
        %v1863 = vld [vmem:[%s1862] sm:$0xff]
        %v1864 = vld [vmem:[%s1862 + $0x8] sm:$0xff]
        %v1865 = vld [vmem:[%s1862 + $0x10] sm:$0xff]
        %v1866 = vld [vmem:[%s1862 + $0x18] sm:$0xff]
        %v1867 = vld [vmem:[%s1862 + $0x20] sm:$0xff]
        %v1868 = vld [vmem:[%s1862 + $0x28] sm:$0xff]
        %v1869 = vld [vmem:[%s1862 + $0x30] sm:$0xff]
        %v1870 = vld [vmem:[%s1862 + $0x38] sm:$0xff]
        %v1871 = vld [vmem:[%s1862 + $0x40] sm:$0xff]
        %v1872 = vld [vmem:[%s1862 + $0x48] sm:$0xff]
        %v1873 = vld [vmem:[%s1862 + $0x50] sm:$0xff]
        %v1874 = vld [vmem:[%s1862 + $0x58] sm:$0xff]
        %v1875 = vld [vmem:[%s1862 + $0x60] sm:$0xff]
        %v1876 = vld [vmem:[%s1862 + $0x68] sm:$0xff]
        %v1877 = vld [vmem:[%s1862 + $0x70] sm:$0xff]
        %v1878 = vld [vmem:[%s1862 + $0x78] sm:$0xff]
        %v1879 = vld [vmem:[%s9 + $0x1] sm:$0x1]
        %v1880 = vlaneseq
        %v1881 = vshrl.u32 %v1880, 7
        %v1882 = vsub.s32 0, %v1881
        %v1883 = vrot.slane %v1879, %v1882
        %1884 = vmatprep.subr.mxu0 0.0
        %1885 = vmatpush1.msra.mxu0 %v1863
        %1886 = vmatprep.subr.mxu0 0.0
        %1887 = vmatpush1.msra.mxu0 %v1864
        %1888 = vmatprep.subr.mxu0 0.0
        %1889 = vmatpush1.msra.mxu0 %v1865
        %1890 = vmatprep.subr.mxu0 0.0
        %1891 = vmatpush1.msra.mxu0 %v1866
        %1892 = vmatprep.subr.mxu0 0.0
        %1893 = vmatpush1.msra.mxu0 %v1867
        %1894 = vmatprep.subr.mxu0 0.0
        %1895 = vmatpush1.msra.mxu0 %v1868
        %1896 = vmatprep.subr.mxu0 0.0
        %1897 = vmatpush1.msra.mxu0 %v1869
        %1898 = vmatprep.subr.mxu0 0.0
        %1899 = vmatpush1.msra.mxu0 %v1870
        %1900 = vmatprep.subr.mxu0 0.0
        %1901 = vmatpush1.msra.mxu0 %v1871
        %1902 = vmatprep.subr.mxu0 0.0
        %1903 = vmatpush1.msra.mxu0 %v1872
        %1904 = vmatprep.subr.mxu0 0.0
        %1905 = vmatpush1.msra.mxu0 %v1873
        %1906 = vmatprep.subr.mxu0 0.0
        %1907 = vmatpush1.msra.mxu0 %v1874
        %1908 = vmatprep.subr.mxu0 0.0
        %1909 = vmatpush1.msra.mxu0 %v1875
        %1910 = vmatprep.subr.mxu0 0.0
        %1911 = vmatpush1.msra.mxu0 %v1876
        %1912 = vmatprep.subr.mxu0 0.0
        %1913 = vmatpush1.msra.mxu0 %v1877
        %1914 = vmatprep.subr.mxu0 0.0
        %1915 = vmatpush1.msra.mxu0 %v1878
        %1916 = vmatprep.subr.mxu0 0.0
        %1917 = vmatpush1.msra.mxu0 0.0
        %1918 = vmatprep.subr.mxu0 0.0
        %1919 = vmatpush1.msra.mxu0 0.0
        %1920 = vmatprep.subr.mxu0 0.0
        %1921 = vmatpush1.msra.mxu0 0.0
        %1922 = vmatprep.subr.mxu0 0.0
        %1923 = vmatpush1.msra.mxu0 0.0
        %1924 = vmatprep.subr.mxu0 0.0
        %1925 = vmatpush1.msra.mxu0 0.0
        %1926 = vmatprep.subr.mxu0 0.0
        %1927 = vmatpush1.msra.mxu0 0.0
        %1928 = vmatprep.subr.mxu0 0.0
        %1929 = vmatpush1.msra.mxu0 0.0
        %1930 = vmatprep.subr.mxu0 0.0
        %1931 = vmatpush1.msra.mxu0 0.0
        %1932 = vmatprep.subr.mxu0 0.0
        %1933 = vmatpush1.msra.mxu0 0.0
        %1934 = vmatprep.subr.mxu0 0.0
        %1935 = vmatpush1.msra.mxu0 0.0
        %1936 = vmatprep.subr.mxu0 0.0
        %1937 = vmatpush1.msra.mxu0 0.0
        %1938 = vmatprep.subr.mxu0 0.0
        %1939 = vmatpush1.msra.mxu0 0.0
        %1940 = vmatprep.subr.mxu0 0.0
        %1941 = vmatpush1.msra.mxu0 0.0
        %1942 = vmatprep.subr.mxu0 0.0
        %1943 = vmatpush1.msra.mxu0 0.0
        %1944 = vmatprep.subr.mxu0 0.0
        %1945 = vmatpush1.msra.mxu0 0.0
        %1946 = vmatprep.subr.mxu0 0.0
        %1947 = vmatpush1.msra.mxu0 0.0
        %1948 = vmatprep.mubr.f32.mxu0 0.0
        %1949 = vmatmul.mubr.f32.gmra.mrb[0].mxu0 %v653
        %v1950 = vpop.f32.mrb[0].mxu0
        %v1951 = vadd.f32 %v1883, %v1950
        %v1952 = vpop.f32.mrb[0].mxu0
        %1953 = vmatprep.mubr.f32.mxu0 0.0
        %1954 = vmatmul.mubr.f32.gmra.mrb[0].mxu0 %v654
        %v1955 = vpop.f32.mrb[0].mxu0
        %v1956 = vadd.f32 %v1883, %v1955
        %v1957 = vpop.f32.mrb[0].mxu0
        %1958 = vdwg.mxu0
        %s1959 = scalar_lea.vmem [#allocation11], 256
        %v1960 = vld [vmem:[%s1959] sm:$0xff]
        %v1961 = vld [vmem:[%s1959 + $0x8] sm:$0xff]
        %v1962 = vld [vmem:[%s1959 + $0x10] sm:$0xff]
        %v1963 = vld [vmem:[%s1959 + $0x18] sm:$0xff]
        %v1964 = vld [vmem:[%s1959 + $0x20] sm:$0xff]
        %v1965 = vld [vmem:[%s1959 + $0x28] sm:$0xff]
        %v1966 = vld [vmem:[%s1959 + $0x30] sm:$0xff]
        %v1967 = vld [vmem:[%s1959 + $0x38] sm:$0xff]
        %v1968 = vld [vmem:[%s1959 + $0x40] sm:$0xff]
        %v1969 = vld [vmem:[%s1959 + $0x48] sm:$0xff]
        %v1970 = vld [vmem:[%s1959 + $0x50] sm:$0xff]
        %v1971 = vld [vmem:[%s1959 + $0x58] sm:$0xff]
        %v1972 = vld [vmem:[%s1959 + $0x60] sm:$0xff]
        %v1973 = vld [vmem:[%s1959 + $0x68] sm:$0xff]
        %v1974 = vld [vmem:[%s1959 + $0x70] sm:$0xff]
        %v1975 = vld [vmem:[%s1959 + $0x78] sm:$0xff]
        %v1976 = vld [vmem:[%s9 + $0x2] sm:$0x1]
        %v1977 = vlaneseq
        %v1978 = vshrl.u32 %v1977, 7
        %v1979 = vsub.s32 0, %v1978
        %v1980 = vrot.slane %v1976, %v1979
        %1981 = vmatprep.subr.mxu0 0.0
        %1982 = vmatpush1.msra.mxu0 %v1960
        %1983 = vmatprep.subr.mxu0 0.0
        %1984 = vmatpush1.msra.mxu0 %v1961
        %1985 = vmatprep.subr.mxu0 0.0
        %1986 = vmatpush1.msra.mxu0 %v1962
        %1987 = vmatprep.subr.mxu0 0.0
        %1988 = vmatpush1.msra.mxu0 %v1963
        %1989 = vmatprep.subr.mxu0 0.0
        %1990 = vmatpush1.msra.mxu0 %v1964
        %1991 = vmatprep.subr.mxu0 0.0
        %1992 = vmatpush1.msra.mxu0 %v1965
        %1993 = vmatprep.subr.mxu0 0.0
        %1994 = vmatpush1.msra.mxu0 %v1966
        %1995 = vmatprep.subr.mxu0 0.0
        %1996 = vmatpush1.msra.mxu0 %v1967
        %1997 = vmatprep.subr.mxu0 0.0
        %1998 = vmatpush1.msra.mxu0 %v1968
        %1999 = vmatprep.subr.mxu0 0.0
        %2000 = vmatpush1.msra.mxu0 %v1969
        %2001 = vmatprep.subr.mxu0 0.0
        %2002 = vmatpush1.msra.mxu0 %v1970
        %2003 = vmatprep.subr.mxu0 0.0
        %2004 = vmatpush1.msra.mxu0 %v1971
        %2005 = vmatprep.subr.mxu0 0.0
        %2006 = vmatpush1.msra.mxu0 %v1972
        %2007 = vmatprep.subr.mxu0 0.0
        %2008 = vmatpush1.msra.mxu0 %v1973
        %2009 = vmatprep.subr.mxu0 0.0
        %2010 = vmatpush1.msra.mxu0 %v1974
        %2011 = vmatprep.subr.mxu0 0.0
        %2012 = vmatpush1.msra.mxu0 %v1975
        %2013 = vmatprep.subr.mxu0 0.0
        %2014 = vmatpush1.msra.mxu0 0.0
        %2015 = vmatprep.subr.mxu0 0.0
        %2016 = vmatpush1.msra.mxu0 0.0
        %2017 = vmatprep.subr.mxu0 0.0
        %2018 = vmatpush1.msra.mxu0 0.0
        %2019 = vmatprep.subr.mxu0 0.0
        %2020 = vmatpush1.msra.mxu0 0.0
        %2021 = vmatprep.subr.mxu0 0.0
        %2022 = vmatpush1.msra.mxu0 0.0
        %2023 = vmatprep.subr.mxu0 0.0
        %2024 = vmatpush1.msra.mxu0 0.0
        %2025 = vmatprep.subr.mxu0 0.0
        %2026 = vmatpush1.msra.mxu0 0.0
        %2027 = vmatprep.subr.mxu0 0.0
        %2028 = vmatpush1.msra.mxu0 0.0
        %2029 = vmatprep.subr.mxu0 0.0
        %2030 = vmatpush1.msra.mxu0 0.0
        %2031 = vmatprep.subr.mxu0 0.0
        %2032 = vmatpush1.msra.mxu0 0.0
        %2033 = vmatprep.subr.mxu0 0.0
        %2034 = vmatpush1.msra.mxu0 0.0
        %2035 = vmatprep.subr.mxu0 0.0
        %2036 = vmatpush1.msra.mxu0 0.0
        %2037 = vmatprep.subr.mxu0 0.0
        %2038 = vmatpush1.msra.mxu0 0.0
        %2039 = vmatprep.subr.mxu0 0.0
        %2040 = vmatpush1.msra.mxu0 0.0
        %2041 = vmatprep.subr.mxu0 0.0
        %2042 = vmatpush1.msra.mxu0 0.0
        %2043 = vmatprep.subr.mxu0 0.0
        %2044 = vmatpush1.msra.mxu0 0.0
        %2045 = vmatprep.mubr.f32.mxu0 0.0
        %2046 = vmatmul.mubr.f32.gmra.mrb[0].mxu0 %v653
        %v2047 = vpop.f32.mrb[0].mxu0
        %v2048 = vadd.f32 %v1980, %v2047
        %v2049 = vpop.f32.mrb[0].mxu0
        %2050 = vmatprep.mubr.f32.mxu0 0.0
        %2051 = vmatmul.mubr.f32.gmra.mrb[0].mxu0 %v654
        %v2052 = vpop.f32.mrb[0].mxu0
        %v2053 = vadd.f32 %v1980, %v2052
        %v2054 = vpop.f32.mrb[0].mxu0
        %2055 = vdwg.mxu0
        %v2057 = vsel %vm964, %v1859, 0
        %v2060 = vsel %vm964, %v1951, 0
        %v2063 = vsel %vm964, %v1956, 0
        %2065 = vmatprep.subr.mxu0 0.0
        %2066 = vmatpush1.xpose.msra.mxu0 %v2060
        %2067 = vmatprep.subr.mxu0 0.0
        %2068 = vmatpush1.xpose.msra.mxu0 %v2063
        %2069 = vmatprep.subr.mxu0 0.0
        %2070 = vmatpush1.xpose.msra.mxu0 0.0
        %2071 = vmatprep.subr.mxu0 0.0
        %2072 = vmatpush1.xpose.msra.mxu0 0.0
        %2073 = vmatprep.subr.mxu0 0.0
        %2074 = vmatpush1.xpose.msra.mxu0 0.0
        %2075 = vmatprep.subr.mxu0 0.0
        %2076 = vmatpush1.xpose.msra.mxu0 0.0
        %2077 = vmatprep.subr.mxu0 0.0
        %2078 = vmatpush1.xpose.msra.mxu0 0.0
        %2079 = vmatprep.subr.mxu0 0.0
        %2080 = vmatpush1.xpose.msra.mxu0 0.0
        %2081 = vmatprep.subr.mxu0 0.0
        %2082 = vmatpush1.xpose.msra.mxu0 0.0
        %2083 = vmatprep.subr.mxu0 0.0
        %2084 = vmatpush1.xpose.msra.mxu0 0.0
        %2085 = vmatprep.subr.mxu0 0.0
        %2086 = vmatpush1.xpose.msra.mxu0 0.0
        %2087 = vmatprep.subr.mxu0 0.0
        %2088 = vmatpush1.xpose.msra.mxu0 0.0
        %2089 = vmatprep.subr.mxu0 0.0
        %2090 = vmatpush1.xpose.msra.mxu0 0.0
        %2091 = vmatprep.subr.mxu0 0.0
        %2092 = vmatpush1.xpose.msra.mxu0 0.0
        %2093 = vmatprep.subr.mxu0 0.0
        %2094 = vmatpush1.xpose.msra.mxu0 0.0
        %2095 = vmatprep.subr.mxu0 0.0
        %2096 = vmatpush1.xpose.msra.mxu0 0.0
        %2097 = vmatprep.subr.mxu0 0.0
        %2098 = vmatpush1.xpose.msra.mxu0 0.0
        %2099 = vmatprep.subr.mxu0 0.0
        %2100 = vmatpush1.xpose.msra.mxu0 0.0
        %2101 = vmatprep.subr.mxu0 0.0
        %2102 = vmatpush1.xpose.msra.mxu0 0.0
        %2103 = vmatprep.subr.mxu0 0.0
        %2104 = vmatpush1.xpose.msra.mxu0 0.0
        %2105 = vmatprep.subr.mxu0 0.0
        %2106 = vmatpush1.xpose.msra.mxu0 0.0
        %2107 = vmatprep.subr.mxu0 0.0
        %2108 = vmatpush1.xpose.msra.mxu0 0.0
        %2109 = vmatprep.subr.mxu0 0.0
        %2110 = vmatpush1.xpose.msra.mxu0 0.0
        %2111 = vmatprep.subr.mxu0 0.0
        %2112 = vmatpush1.xpose.msra.mxu0 0.0
        %2113 = vmatprep.subr.mxu0 0.0
        %2114 = vmatpush1.xpose.msra.mxu0 0.0
        %2115 = vmatprep.subr.mxu0 0.0
        %2116 = vmatpush1.xpose.msra.mxu0 0.0
        %2117 = vmatprep.subr.mxu0 0.0
        %2118 = vmatpush1.xpose.msra.mxu0 0.0
        %2119 = vmatprep.subr.mxu0 0.0
        %2120 = vmatpush1.xpose.msra.mxu0 0.0
        %2121 = vmatprep.subr.mxu0 0.0
        %2122 = vmatpush1.xpose.msra.mxu0 0.0
        %2123 = vmatprep.subr.mxu0 0.0
        %2124 = vmatpush1.xpose.msra.mxu0 0.0
        %2125 = vmatprep.subr.mxu0 0.0
        %2126 = vmatpush1.xpose.msra.mxu0 0.0
        %2127 = vmatprep.subr.mxu0 0.0
        %2128 = vmatpush1.xpose.msra.mxu0 0.0
        %2129 = vmatprep.mubr.f32.mxu0 0.0
        %2130 = vmatmul.mubr.f32.gmra.mrb[0].mxu0 %v2057
        %v2131 = vpop.f32.mrb[0].mxu0
        %v2132 = vadd.f32 0.0, %v2131
        %v2133 = vpop.f32.mrb[0].mxu0
        %2134 = vdwg.mxu0
        %v2135 = vmul.f32 %v2132, 0.17677669
        %vm2136 = vcmp.eq.s32.totalorder %v656, 0
        %v2137 = vsel %vm2136, -1e+09, %v2135
        %vm2138 = vcmask 130048
        %v2139 = vsel %vm2138, %v2137, -inf
        %2140 = vmax.xlane.f32.xlu0 %v2139
        %v2141 = vpop.xlane.xlu0 %2140
        %v2142 = vsub.f32 %v2137, %v2141
        %v2143 = vmul.f32 %v2142, 1.442695
        %v2144 = vpow.pop %v2143
        %v2145 = vsel %vm2138, %v2144, 0.0
        %2146 = vadd.xlane.f32.xlu0 %v2145
        %v2147 = vpop.xlane.xlu0 %2146
        %v2148 = vrcp.pop %v2147
        %v2149 = vmul.f32 %v2144, %v2148
        %v2151 = vsel %vm2138, %v2149, 0
        %2153 = vmatprep.subr.mxu0 0.0
        %2154 = vmatpush1.msra.mxu0 %v2048
        %2155 = vmatprep.subr.mxu0 0.0
        %2156 = vmatpush1.msra.mxu0 %v2053
        %2157 = vmatprep.subr.mxu0 0.0
        %2158 = vmatpush1.msra.mxu0 0.0
        %2159 = vmatprep.subr.mxu0 0.0
        %2160 = vmatpush1.msra.mxu0 0.0
        %2161 = vmatprep.subr.mxu0 0.0
        %2162 = vmatpush1.msra.mxu0 0.0
        %2163 = vmatprep.subr.mxu0 0.0
        %2164 = vmatpush1.msra.mxu0 0.0
        %2165 = vmatprep.subr.mxu0 0.0
        %2166 = vmatpush1.msra.mxu0 0.0
        %2167 = vmatprep.subr.mxu0 0.0
        %2168 = vmatpush1.msra.mxu0 0.0
        %2169 = vmatprep.subr.mxu0 0.0
        %2170 = vmatpush1.msra.mxu0 0.0
        %2171 = vmatprep.subr.mxu0 0.0
        %2172 = vmatpush1.msra.mxu0 0.0
        %2173 = vmatprep.subr.mxu0 0.0
        %2174 = vmatpush1.msra.mxu0 0.0
        %2175 = vmatprep.subr.mxu0 0.0
        %2176 = vmatpush1.msra.mxu0 0.0
        %2177 = vmatprep.subr.mxu0 0.0
        %2178 = vmatpush1.msra.mxu0 0.0
        %2179 = vmatprep.subr.mxu0 0.0
        %2180 = vmatpush1.msra.mxu0 0.0
        %2181 = vmatprep.subr.mxu0 0.0
        %2182 = vmatpush1.msra.mxu0 0.0
        %2183 = vmatprep.subr.mxu0 0.0
        %2184 = vmatpush1.msra.mxu0 0.0
        %2185 = vmatprep.subr.mxu0 0.0
        %2186 = vmatpush1.msra.mxu0 0.0
        %2187 = vmatprep.subr.mxu0 0.0
        %2188 = vmatpush1.msra.mxu0 0.0
        %2189 = vmatprep.subr.mxu0 0.0
        %2190 = vmatpush1.msra.mxu0 0.0
        %2191 = vmatprep.subr.mxu0 0.0
        %2192 = vmatpush1.msra.mxu0 0.0
        %2193 = vmatprep.subr.mxu0 0.0
        %2194 = vmatpush1.msra.mxu0 0.0
        %2195 = vmatprep.subr.mxu0 0.0
        %2196 = vmatpush1.msra.mxu0 0.0
        %2197 = vmatprep.subr.mxu0 0.0
        %2198 = vmatpush1.msra.mxu0 0.0
        %2199 = vmatprep.subr.mxu0 0.0
        %2200 = vmatpush1.msra.mxu0 0.0
        %2201 = vmatprep.subr.mxu0 0.0
        %2202 = vmatpush1.msra.mxu0 0.0
        %2203 = vmatprep.subr.mxu0 0.0
        %2204 = vmatpush1.msra.mxu0 0.0
        %2205 = vmatprep.subr.mxu0 0.0
        %2206 = vmatpush1.msra.mxu0 0.0
        %2207 = vmatprep.subr.mxu0 0.0
        %2208 = vmatpush1.msra.mxu0 0.0
        %2209 = vmatprep.subr.mxu0 0.0
        %2210 = vmatpush1.msra.mxu0 0.0
        %2211 = vmatprep.subr.mxu0 0.0
        %2212 = vmatpush1.msra.mxu0 0.0
        %2213 = vmatprep.subr.mxu0 0.0
        %2214 = vmatpush1.msra.mxu0 0.0
        %2215 = vmatprep.subr.mxu0 0.0
        %2216 = vmatpush1.msra.mxu0 0.0
        %2217 = vmatprep.mubr.f32.mxu0 0.0
        %2218 = vmatmul.mubr.f32.gmra.mrb[0].mxu0 %v2151
        %v2219 = vpop.f32.mrb[0].mxu0
        %v2220 = vadd.f32 0.0, %v2219
        %v2221 = vpop.f32.mrb[0].mxu0
        %2222 = vdwg.mxu0
        %2223 = vrot.lane.b32.xlu0 %v1859, 96
        %v2224 = vpop.permute.xlu0 %2223
        %2225 = vrot.lane.b32.xlu0 %v1951, 96
        %v2226 = vpop.permute.xlu0 %2225
        %2227 = vrot.lane.b32.xlu0 %v1956, 96
        %v2228 = vpop.permute.xlu0 %2227
        %v2229 = vsel %vm964, %v2224, 0
        %v2231 = vsel %vm964, %v2226, 0
        %v2233 = vsel %vm964, %v2228, 0
        %2235 = vmatprep.subr.mxu0 0.0
        %2236 = vmatpush1.xpose.msra.mxu0 %v2231
        %2237 = vmatprep.subr.mxu0 0.0
        %2238 = vmatpush1.xpose.msra.mxu0 %v2233
        %2239 = vmatprep.subr.mxu0 0.0
        %2240 = vmatpush1.xpose.msra.mxu0 0.0
        %2241 = vmatprep.subr.mxu0 0.0
        %2242 = vmatpush1.xpose.msra.mxu0 0.0
        %2243 = vmatprep.subr.mxu0 0.0
        %2244 = vmatpush1.xpose.msra.mxu0 0.0
        %2245 = vmatprep.subr.mxu0 0.0
        %2246 = vmatpush1.xpose.msra.mxu0 0.0
        %2247 = vmatprep.subr.mxu0 0.0
        %2248 = vmatpush1.xpose.msra.mxu0 0.0
        %2249 = vmatprep.subr.mxu0 0.0
        %2250 = vmatpush1.xpose.msra.mxu0 0.0
        %2251 = vmatprep.subr.mxu0 0.0
        %2252 = vmatpush1.xpose.msra.mxu0 0.0
        %2253 = vmatprep.subr.mxu0 0.0
        %2254 = vmatpush1.xpose.msra.mxu0 0.0
        %2255 = vmatprep.subr.mxu0 0.0
        %2256 = vmatpush1.xpose.msra.mxu0 0.0
        %2257 = vmatprep.subr.mxu0 0.0
        %2258 = vmatpush1.xpose.msra.mxu0 0.0
        %2259 = vmatprep.subr.mxu0 0.0
        %2260 = vmatpush1.xpose.msra.mxu0 0.0
        %2261 = vmatprep.subr.mxu0 0.0
        %2262 = vmatpush1.xpose.msra.mxu0 0.0
        %2263 = vmatprep.subr.mxu0 0.0
        %2264 = vmatpush1.xpose.msra.mxu0 0.0
        %2265 = vmatprep.subr.mxu0 0.0
        %2266 = vmatpush1.xpose.msra.mxu0 0.0
        %2267 = vmatprep.subr.mxu0 0.0
        %2268 = vmatpush1.xpose.msra.mxu0 0.0
        %2269 = vmatprep.subr.mxu0 0.0
        %2270 = vmatpush1.xpose.msra.mxu0 0.0
        %2271 = vmatprep.subr.mxu0 0.0
        %2272 = vmatpush1.xpose.msra.mxu0 0.0
        %2273 = vmatprep.subr.mxu0 0.0
        %2274 = vmatpush1.xpose.msra.mxu0 0.0
        %2275 = vmatprep.subr.mxu0 0.0
        %2276 = vmatpush1.xpose.msra.mxu0 0.0
        %2277 = vmatprep.subr.mxu0 0.0
        %2278 = vmatpush1.xpose.msra.mxu0 0.0
        %2279 = vmatprep.subr.mxu0 0.0
        %2280 = vmatpush1.xpose.msra.mxu0 0.0
        %2281 = vmatprep.subr.mxu0 0.0
        %2282 = vmatpush1.xpose.msra.mxu0 0.0
        %2283 = vmatprep.subr.mxu0 0.0
        %2284 = vmatpush1.xpose.msra.mxu0 0.0
        %2285 = vmatprep.subr.mxu0 0.0
        %2286 = vmatpush1.xpose.msra.mxu0 0.0
        %2287 = vmatprep.subr.mxu0 0.0
        %2288 = vmatpush1.xpose.msra.mxu0 0.0
        %2289 = vmatprep.subr.mxu0 0.0
        %2290 = vmatpush1.xpose.msra.mxu0 0.0
        %2291 = vmatprep.subr.mxu0 0.0
        %2292 = vmatpush1.xpose.msra.mxu0 0.0
        %2293 = vmatprep.subr.mxu0 0.0
        %2294 = vmatpush1.xpose.msra.mxu0 0.0
        %2295 = vmatprep.subr.mxu0 0.0
        %2296 = vmatpush1.xpose.msra.mxu0 0.0
        %2297 = vmatprep.subr.mxu0 0.0
        %2298 = vmatpush1.xpose.msra.mxu0 0.0
        %2299 = vmatprep.mubr.f32.mxu0 0.0
        %2300 = vmatmul.mubr.f32.gmra.mrb[0].mxu0 %v2229
        %v2301 = vpop.f32.mrb[0].mxu0
        %v2302 = vadd.f32 0.0, %v2301
        %v2303 = vpop.f32.mrb[0].mxu0
        %2304 = vdwg.mxu0
        %v2305 = vmul.f32 %v2302, 0.17677669
        %v2306 = vsel %vm2136, -1e+09, %v2305
        %v2307 = vsel %vm2138, %v2306, -inf
        %2308 = vmax.xlane.f32.xlu0 %v2307
        %v2309 = vpop.xlane.xlu0 %2308
        %v2310 = vsub.f32 %v2306, %v2309
        %v2311 = vmul.f32 %v2310, 1.442695
        %v2312 = vpow.pop %v2311
        %v2313 = vsel %vm2138, %v2312, 0.0
        %2314 = vadd.xlane.f32.xlu0 %v2313
        %v2315 = vpop.xlane.xlu0 %2314
        %v2316 = vrcp.pop %v2315
        %v2317 = vmul.f32 %v2312, %v2316
        %2320 = vrot.lane.b32.xlu0 %v2048, 96
        %v2321 = vpop.permute.xlu0 %2320
        %2322 = vrot.lane.b32.xlu0 %v2053, 96
        %v2323 = vpop.permute.xlu0 %2322
        %v2327 = vsel %vm2138, %v2317, 0
        %2329 = vmatprep.subr.mxu0 0.0
        %2330 = vmatpush1.msra.mxu0 %v2321
        %2331 = vmatprep.subr.mxu0 0.0
        %2332 = vmatpush1.msra.mxu0 %v2323
        %2333 = vmatprep.subr.mxu0 0.0
        %2334 = vmatpush1.msra.mxu0 0.0
        %2335 = vmatprep.subr.mxu0 0.0
        %2336 = vmatpush1.msra.mxu0 0.0
        %2337 = vmatprep.subr.mxu0 0.0
        %2338 = vmatpush1.msra.mxu0 0.0
        %2339 = vmatprep.subr.mxu0 0.0
        %2340 = vmatpush1.msra.mxu0 0.0
        %2341 = vmatprep.subr.mxu0 0.0
        %2342 = vmatpush1.msra.mxu0 0.0
        %2343 = vmatprep.subr.mxu0 0.0
        %2344 = vmatpush1.msra.mxu0 0.0
        %2345 = vmatprep.subr.mxu0 0.0
        %2346 = vmatpush1.msra.mxu0 0.0
        %2347 = vmatprep.subr.mxu0 0.0
        %2348 = vmatpush1.msra.mxu0 0.0
        %2349 = vmatprep.subr.mxu0 0.0
        %2350 = vmatpush1.msra.mxu0 0.0
        %2351 = vmatprep.subr.mxu0 0.0
        %2352 = vmatpush1.msra.mxu0 0.0
        %2353 = vmatprep.subr.mxu0 0.0
        %2354 = vmatpush1.msra.mxu0 0.0
        %2355 = vmatprep.subr.mxu0 0.0
        %2356 = vmatpush1.msra.mxu0 0.0
        %2357 = vmatprep.subr.mxu0 0.0
        %2358 = vmatpush1.msra.mxu0 0.0
        %2359 = vmatprep.subr.mxu0 0.0
        %2360 = vmatpush1.msra.mxu0 0.0
        %2361 = vmatprep.subr.mxu0 0.0
        %2362 = vmatpush1.msra.mxu0 0.0
        %2363 = vmatprep.subr.mxu0 0.0
        %2364 = vmatpush1.msra.mxu0 0.0
        %2365 = vmatprep.subr.mxu0 0.0
        %2366 = vmatpush1.msra.mxu0 0.0
        %2367 = vmatprep.subr.mxu0 0.0
        %2368 = vmatpush1.msra.mxu0 0.0
        %2369 = vmatprep.subr.mxu0 0.0
        %2370 = vmatpush1.msra.mxu0 0.0
        %2371 = vmatprep.subr.mxu0 0.0
        %2372 = vmatpush1.msra.mxu0 0.0
        %2373 = vmatprep.subr.mxu0 0.0
        %2374 = vmatpush1.msra.mxu0 0.0
        %2375 = vmatprep.subr.mxu0 0.0
        %2376 = vmatpush1.msra.mxu0 0.0
        %2377 = vmatprep.subr.mxu0 0.0
        %2378 = vmatpush1.msra.mxu0 0.0
        %2379 = vmatprep.subr.mxu0 0.0
        %2380 = vmatpush1.msra.mxu0 0.0
        %2381 = vmatprep.subr.mxu0 0.0
        %2382 = vmatpush1.msra.mxu0 0.0
        %2383 = vmatprep.subr.mxu0 0.0
        %2384 = vmatpush1.msra.mxu0 0.0
        %2385 = vmatprep.subr.mxu0 0.0
        %2386 = vmatpush1.msra.mxu0 0.0
        %2387 = vmatprep.subr.mxu0 0.0
        %2388 = vmatpush1.msra.mxu0 0.0
        %2389 = vmatprep.subr.mxu0 0.0
        %2390 = vmatpush1.msra.mxu0 0.0
        %2391 = vmatprep.subr.mxu0 0.0
        %2392 = vmatpush1.msra.mxu0 0.0
        %2393 = vmatprep.mubr.f32.mxu0 0.0
        %2394 = vmatmul.mubr.f32.gmra.mrb[0].mxu0 %v2327
        %v2395 = vpop.f32.mrb[0].mxu0
        %v2396 = vadd.f32 0.0, %v2395
        %v2397 = vpop.f32.mrb[0].mxu0
        %2398 = vdwg.mxu0
        %2399 = vrot.lane.b32.xlu0 %v1859, 64
        %v2400 = vpop.permute.xlu0 %2399
        %2401 = vrot.lane.b32.xlu0 %v1951, 64
        %v2402 = vpop.permute.xlu0 %2401
        %2403 = vrot.lane.b32.xlu0 %v1956, 64
        %v2404 = vpop.permute.xlu0 %2403
        %v2405 = vsel %vm964, %v2400, 0
        %v2407 = vsel %vm964, %v2402, 0
        %v2409 = vsel %vm964, %v2404, 0
        %2411 = vmatprep.subr.mxu0 0.0
        %2412 = vmatpush1.xpose.msra.mxu0 %v2407
        %2413 = vmatprep.subr.mxu0 0.0
        %2414 = vmatpush1.xpose.msra.mxu0 %v2409
        %2415 = vmatprep.subr.mxu0 0.0
        %2416 = vmatpush1.xpose.msra.mxu0 0.0
        %2417 = vmatprep.subr.mxu0 0.0
        %2418 = vmatpush1.xpose.msra.mxu0 0.0
        %2419 = vmatprep.subr.mxu0 0.0
        %2420 = vmatpush1.xpose.msra.mxu0 0.0
        %2421 = vmatprep.subr.mxu0 0.0
        %2422 = vmatpush1.xpose.msra.mxu0 0.0
        %2423 = vmatprep.subr.mxu0 0.0
        %2424 = vmatpush1.xpose.msra.mxu0 0.0
        %2425 = vmatprep.subr.mxu0 0.0
        %2426 = vmatpush1.xpose.msra.mxu0 0.0
        %2427 = vmatprep.subr.mxu0 0.0
        %2428 = vmatpush1.xpose.msra.mxu0 0.0
        %2429 = vmatprep.subr.mxu0 0.0
        %2430 = vmatpush1.xpose.msra.mxu0 0.0
        %2431 = vmatprep.subr.mxu0 0.0
        %2432 = vmatpush1.xpose.msra.mxu0 0.0
        %2433 = vmatprep.subr.mxu0 0.0
        %2434 = vmatpush1.xpose.msra.mxu0 0.0
        %2435 = vmatprep.subr.mxu0 0.0
        %2436 = vmatpush1.xpose.msra.mxu0 0.0
        %2437 = vmatprep.subr.mxu0 0.0
        %2438 = vmatpush1.xpose.msra.mxu0 0.0
        %2439 = vmatprep.subr.mxu0 0.0
        %2440 = vmatpush1.xpose.msra.mxu0 0.0
        %2441 = vmatprep.subr.mxu0 0.0
        %2442 = vmatpush1.xpose.msra.mxu0 0.0
        %2443 = vmatprep.subr.mxu0 0.0
        %2444 = vmatpush1.xpose.msra.mxu0 0.0
        %2445 = vmatprep.subr.mxu0 0.0
        %2446 = vmatpush1.xpose.msra.mxu0 0.0
        %2447 = vmatprep.subr.mxu0 0.0
        %2448 = vmatpush1.xpose.msra.mxu0 0.0
        %2449 = vmatprep.subr.mxu0 0.0
        %2450 = vmatpush1.xpose.msra.mxu0 0.0
        %2451 = vmatprep.subr.mxu0 0.0
        %2452 = vmatpush1.xpose.msra.mxu0 0.0
        %2453 = vmatprep.subr.mxu0 0.0
        %2454 = vmatpush1.xpose.msra.mxu0 0.0
        %2455 = vmatprep.subr.mxu0 0.0
        %2456 = vmatpush1.xpose.msra.mxu0 0.0
        %2457 = vmatprep.subr.mxu0 0.0
        %2458 = vmatpush1.xpose.msra.mxu0 0.0
        %2459 = vmatprep.subr.mxu0 0.0
        %2460 = vmatpush1.xpose.msra.mxu0 0.0
        %2461 = vmatprep.subr.mxu0 0.0
        %2462 = vmatpush1.xpose.msra.mxu0 0.0
        %2463 = vmatprep.subr.mxu0 0.0
        %2464 = vmatpush1.xpose.msra.mxu0 0.0
        %2465 = vmatprep.subr.mxu0 0.0
        %2466 = vmatpush1.xpose.msra.mxu0 0.0
        %2467 = vmatprep.subr.mxu0 0.0
        %2468 = vmatpush1.xpose.msra.mxu0 0.0
        %2469 = vmatprep.subr.mxu0 0.0
        %2470 = vmatpush1.xpose.msra.mxu0 0.0
        %2471 = vmatprep.subr.mxu0 0.0
        %2472 = vmatpush1.xpose.msra.mxu0 0.0
        %2473 = vmatprep.subr.mxu0 0.0
        %2474 = vmatpush1.xpose.msra.mxu0 0.0
        %2475 = vmatprep.mubr.f32.mxu0 0.0
        %2476 = vmatmul.mubr.f32.gmra.mrb[0].mxu0 %v2405
        %v2477 = vpop.f32.mrb[0].mxu0
        %v2478 = vadd.f32 0.0, %v2477
        %v2479 = vpop.f32.mrb[0].mxu0
        %2480 = vdwg.mxu0
        %v2481 = vmul.f32 %v2478, 0.17677669
        %v2482 = vsel %vm2136, -1e+09, %v2481
        %v2483 = vsel %vm2138, %v2482, -inf
        %2484 = vmax.xlane.f32.xlu0 %v2483
        %v2485 = vpop.xlane.xlu0 %2484
        %v2486 = vsub.f32 %v2482, %v2485
        %v2487 = vmul.f32 %v2486, 1.442695
        %v2488 = vpow.pop %v2487
        %v2489 = vsel %vm2138, %v2488, 0.0
        %2490 = vadd.xlane.f32.xlu0 %v2489
        %v2491 = vpop.xlane.xlu0 %2490
        %v2492 = vrcp.pop %v2491
        %v2493 = vmul.f32 %v2488, %v2492
        %2494 = vrot.lane.b32.xlu0 %v2048, 64
        %v2495 = vpop.permute.xlu0 %2494
        %2496 = vrot.lane.b32.xlu0 %v2053, 64
        %v2497 = vpop.permute.xlu0 %2496
        %v2501 = vsel %vm2138, %v2493, 0
        %2503 = vmatprep.subr.mxu0 0.0
        %2504 = vmatpush1.msra.mxu0 %v2495
        %2505 = vmatprep.subr.mxu0 0.0
        %2506 = vmatpush1.msra.mxu0 %v2497
        %2507 = vmatprep.subr.mxu0 0.0
        %2508 = vmatpush1.msra.mxu0 0.0
        %2509 = vmatprep.subr.mxu0 0.0
        %2510 = vmatpush1.msra.mxu0 0.0
        %2511 = vmatprep.subr.mxu0 0.0
        %2512 = vmatpush1.msra.mxu0 0.0
        %2513 = vmatprep.subr.mxu0 0.0
        %2514 = vmatpush1.msra.mxu0 0.0
        %2515 = vmatprep.subr.mxu0 0.0
        %2516 = vmatpush1.msra.mxu0 0.0
        %2517 = vmatprep.subr.mxu0 0.0
        %2518 = vmatpush1.msra.mxu0 0.0
        %2519 = vmatprep.subr.mxu0 0.0
        %2520 = vmatpush1.msra.mxu0 0.0
        %2521 = vmatprep.subr.mxu0 0.0
        %2522 = vmatpush1.msra.mxu0 0.0
        %2523 = vmatprep.subr.mxu0 0.0
        %2524 = vmatpush1.msra.mxu0 0.0
        %2525 = vmatprep.subr.mxu0 0.0
        %2526 = vmatpush1.msra.mxu0 0.0
        %2527 = vmatprep.subr.mxu0 0.0
        %2528 = vmatpush1.msra.mxu0 0.0
        %2529 = vmatprep.subr.mxu0 0.0
        %2530 = vmatpush1.msra.mxu0 0.0
        %2531 = vmatprep.subr.mxu0 0.0
        %2532 = vmatpush1.msra.mxu0 0.0
        %2533 = vmatprep.subr.mxu0 0.0
        %2534 = vmatpush1.msra.mxu0 0.0
        %2535 = vmatprep.subr.mxu0 0.0
        %2536 = vmatpush1.msra.mxu0 0.0
        %2537 = vmatprep.subr.mxu0 0.0
        %2538 = vmatpush1.msra.mxu0 0.0
        %2539 = vmatprep.subr.mxu0 0.0
        %2540 = vmatpush1.msra.mxu0 0.0
        %2541 = vmatprep.subr.mxu0 0.0
        %2542 = vmatpush1.msra.mxu0 0.0
        %2543 = vmatprep.subr.mxu0 0.0
        %2544 = vmatpush1.msra.mxu0 0.0
        %2545 = vmatprep.subr.mxu0 0.0
        %2546 = vmatpush1.msra.mxu0 0.0
        %2547 = vmatprep.subr.mxu0 0.0
        %2548 = vmatpush1.msra.mxu0 0.0
        %2549 = vmatprep.subr.mxu0 0.0
        %2550 = vmatpush1.msra.mxu0 0.0
        %2551 = vmatprep.subr.mxu0 0.0
        %2552 = vmatpush1.msra.mxu0 0.0
        %2553 = vmatprep.subr.mxu0 0.0
        %2554 = vmatpush1.msra.mxu0 0.0
        %2555 = vmatprep.subr.mxu0 0.0
        %2556 = vmatpush1.msra.mxu0 0.0
        %2557 = vmatprep.subr.mxu0 0.0
        %2558 = vmatpush1.msra.mxu0 0.0
        %2559 = vmatprep.subr.mxu0 0.0
        %2560 = vmatpush1.msra.mxu0 0.0
        %2561 = vmatprep.subr.mxu0 0.0
        %2562 = vmatpush1.msra.mxu0 0.0
        %2563 = vmatprep.subr.mxu0 0.0
        %2564 = vmatpush1.msra.mxu0 0.0
        %2565 = vmatprep.subr.mxu0 0.0
        %2566 = vmatpush1.msra.mxu0 0.0
        %2567 = vmatprep.mubr.f32.mxu0 0.0
        %2568 = vmatmul.mubr.f32.gmra.mrb[0].mxu0 %v2501
        %v2569 = vpop.f32.mrb[0].mxu0
        %v2570 = vadd.f32 0.0, %v2569
        %v2571 = vpop.f32.mrb[0].mxu0
        %2572 = vdwg.mxu0
        %2573 = vrot.lane.b32.xlu0 %v1859, 32
        %v2574 = vpop.permute.xlu0 %2573
        %2575 = vrot.lane.b32.xlu0 %v1951, 32
        %v2576 = vpop.permute.xlu0 %2575
        %2577 = vrot.lane.b32.xlu0 %v1956, 32
        %v2578 = vpop.permute.xlu0 %2577
        %v2579 = vsel %vm964, %v2574, 0
        %v2581 = vsel %vm964, %v2576, 0
        %v2583 = vsel %vm964, %v2578, 0
        %2585 = vmatprep.subr.mxu0 0.0
        %2586 = vmatpush1.xpose.msra.mxu0 %v2581
        %2587 = vmatprep.subr.mxu0 0.0
        %2588 = vmatpush1.xpose.msra.mxu0 %v2583
        %2589 = vmatprep.subr.mxu0 0.0
        %2590 = vmatpush1.xpose.msra.mxu0 0.0
        %2591 = vmatprep.subr.mxu0 0.0
        %2592 = vmatpush1.xpose.msra.mxu0 0.0
        %2593 = vmatprep.subr.mxu0 0.0
        %2594 = vmatpush1.xpose.msra.mxu0 0.0
        %2595 = vmatprep.subr.mxu0 0.0
        %2596 = vmatpush1.xpose.msra.mxu0 0.0
        %2597 = vmatprep.subr.mxu0 0.0
        %2598 = vmatpush1.xpose.msra.mxu0 0.0
        %2599 = vmatprep.subr.mxu0 0.0
        %2600 = vmatpush1.xpose.msra.mxu0 0.0
        %2601 = vmatprep.subr.mxu0 0.0
        %2602 = vmatpush1.xpose.msra.mxu0 0.0
        %2603 = vmatprep.subr.mxu0 0.0
        %2604 = vmatpush1.xpose.msra.mxu0 0.0
        %2605 = vmatprep.subr.mxu0 0.0
        %2606 = vmatpush1.xpose.msra.mxu0 0.0
        %2607 = vmatprep.subr.mxu0 0.0
        %2608 = vmatpush1.xpose.msra.mxu0 0.0
        %2609 = vmatprep.subr.mxu0 0.0
        %2610 = vmatpush1.xpose.msra.mxu0 0.0
        %2611 = vmatprep.subr.mxu0 0.0
        %2612 = vmatpush1.xpose.msra.mxu0 0.0
        %2613 = vmatprep.subr.mxu0 0.0
        %2614 = vmatpush1.xpose.msra.mxu0 0.0
        %2615 = vmatprep.subr.mxu0 0.0
        %2616 = vmatpush1.xpose.msra.mxu0 0.0
        %2617 = vmatprep.subr.mxu0 0.0
        %2618 = vmatpush1.xpose.msra.mxu0 0.0
        %2619 = vmatprep.subr.mxu0 0.0
        %2620 = vmatpush1.xpose.msra.mxu0 0.0
        %2621 = vmatprep.subr.mxu0 0.0
        %2622 = vmatpush1.xpose.msra.mxu0 0.0
        %2623 = vmatprep.subr.mxu0 0.0
        %2624 = vmatpush1.xpose.msra.mxu0 0.0
        %2625 = vmatprep.subr.mxu0 0.0
        %2626 = vmatpush1.xpose.msra.mxu0 0.0
        %2627 = vmatprep.subr.mxu0 0.0
        %2628 = vmatpush1.xpose.msra.mxu0 0.0
        %2629 = vmatprep.subr.mxu0 0.0
        %2630 = vmatpush1.xpose.msra.mxu0 0.0
        %2631 = vmatprep.subr.mxu0 0.0
        %2632 = vmatpush1.xpose.msra.mxu0 0.0
        %2633 = vmatprep.subr.mxu0 0.0
        %2634 = vmatpush1.xpose.msra.mxu0 0.0
        %2635 = vmatprep.subr.mxu0 0.0
        %2636 = vmatpush1.xpose.msra.mxu0 0.0
        %2637 = vmatprep.subr.mxu0 0.0
        %2638 = vmatpush1.xpose.msra.mxu0 0.0
        %2639 = vmatprep.subr.mxu0 0.0
        %2640 = vmatpush1.xpose.msra.mxu0 0.0
        %2641 = vmatprep.subr.mxu0 0.0
        %2642 = vmatpush1.xpose.msra.mxu0 0.0
        %2643 = vmatprep.subr.mxu0 0.0
        %2644 = vmatpush1.xpose.msra.mxu0 0.0
        %2645 = vmatprep.subr.mxu0 0.0
        %2646 = vmatpush1.xpose.msra.mxu0 0.0
        %2647 = vmatprep.subr.mxu0 0.0
        %2648 = vmatpush1.xpose.msra.mxu0 0.0
        %2649 = vmatprep.mubr.f32.mxu0 0.0
        %2650 = vmatmul.mubr.f32.gmra.mrb[0].mxu0 %v2579
        %v2651 = vpop.f32.mrb[0].mxu0
        %v2652 = vadd.f32 0.0, %v2651
        %v2653 = vpop.f32.mrb[0].mxu0
        %2654 = vdwg.mxu0
        %v2655 = vmul.f32 %v2652, 0.17677669
        %v2656 = vsel %vm2136, -1e+09, %v2655
        %v2657 = vsel %vm2138, %v2656, -inf
        %2658 = vmax.xlane.f32.xlu0 %v2657
        %v2659 = vpop.xlane.xlu0 %2658
        %v2660 = vsub.f32 %v2656, %v2659
        %v2661 = vmul.f32 %v2660, 1.442695
        %v2662 = vpow.pop %v2661
        %v2663 = vsel %vm2138, %v2662, 0.0
        %2664 = vadd.xlane.f32.xlu0 %v2663
        %v2665 = vpop.xlane.xlu0 %2664
        %v2666 = vrcp.pop %v2665
        %v2667 = vmul.f32 %v2662, %v2666
        %2668 = vrot.lane.b32.xlu0 %v2048, 32
        %v2669 = vpop.permute.xlu0 %2668
        %2670 = vrot.lane.b32.xlu0 %v2053, 32
        %v2671 = vpop.permute.xlu0 %2670
        %v2675 = vsel %vm2138, %v2667, 0
        %2677 = vmatprep.subr.mxu0 0.0
        %2678 = vmatpush1.msra.mxu0 %v2669
        %2679 = vmatprep.subr.mxu0 0.0
        %2680 = vmatpush1.msra.mxu0 %v2671
        %2681 = vmatprep.subr.mxu0 0.0
        %2682 = vmatpush1.msra.mxu0 0.0
        %2683 = vmatprep.subr.mxu0 0.0
        %2684 = vmatpush1.msra.mxu0 0.0
        %2685 = vmatprep.subr.mxu0 0.0
        %2686 = vmatpush1.msra.mxu0 0.0
        %2687 = vmatprep.subr.mxu0 0.0
        %2688 = vmatpush1.msra.mxu0 0.0
        %2689 = vmatprep.subr.mxu0 0.0
        %2690 = vmatpush1.msra.mxu0 0.0
        %2691 = vmatprep.subr.mxu0 0.0
        %2692 = vmatpush1.msra.mxu0 0.0
        %2693 = vmatprep.subr.mxu0 0.0
        %2694 = vmatpush1.msra.mxu0 0.0
        %2695 = vmatprep.subr.mxu0 0.0
        %2696 = vmatpush1.msra.mxu0 0.0
        %2697 = vmatprep.subr.mxu0 0.0
        %2698 = vmatpush1.msra.mxu0 0.0
        %2699 = vmatprep.subr.mxu0 0.0
        %2700 = vmatpush1.msra.mxu0 0.0
        %2701 = vmatprep.subr.mxu0 0.0
        %2702 = vmatpush1.msra.mxu0 0.0
        %2703 = vmatprep.subr.mxu0 0.0
        %2704 = vmatpush1.msra.mxu0 0.0
        %2705 = vmatprep.subr.mxu0 0.0
        %2706 = vmatpush1.msra.mxu0 0.0
        %2707 = vmatprep.subr.mxu0 0.0
        %2708 = vmatpush1.msra.mxu0 0.0
        %2709 = vmatprep.subr.mxu0 0.0
        %2710 = vmatpush1.msra.mxu0 0.0
        %2711 = vmatprep.subr.mxu0 0.0
        %2712 = vmatpush1.msra.mxu0 0.0
        %2713 = vmatprep.subr.mxu0 0.0
        %2714 = vmatpush1.msra.mxu0 0.0
        %2715 = vmatprep.subr.mxu0 0.0
        %2716 = vmatpush1.msra.mxu0 0.0
        %2717 = vmatprep.subr.mxu0 0.0
        %2718 = vmatpush1.msra.mxu0 0.0
        %2719 = vmatprep.subr.mxu0 0.0
        %2720 = vmatpush1.msra.mxu0 0.0
        %2721 = vmatprep.subr.mxu0 0.0
        %2722 = vmatpush1.msra.mxu0 0.0
        %2723 = vmatprep.subr.mxu0 0.0
        %2724 = vmatpush1.msra.mxu0 0.0
        %2725 = vmatprep.subr.mxu0 0.0
        %2726 = vmatpush1.msra.mxu0 0.0
        %2727 = vmatprep.subr.mxu0 0.0
        %2728 = vmatpush1.msra.mxu0 0.0
        %2729 = vmatprep.subr.mxu0 0.0
        %2730 = vmatpush1.msra.mxu0 0.0
        %2731 = vmatprep.subr.mxu0 0.0
        %2732 = vmatpush1.msra.mxu0 0.0
        %2733 = vmatprep.subr.mxu0 0.0
        %2734 = vmatpush1.msra.mxu0 0.0
        %2735 = vmatprep.subr.mxu0 0.0
        %2736 = vmatpush1.msra.mxu0 0.0
        %2737 = vmatprep.subr.mxu0 0.0
        %2738 = vmatpush1.msra.mxu0 0.0
        %2739 = vmatprep.subr.mxu0 0.0
        %2740 = vmatpush1.msra.mxu0 0.0
        %2741 = vmatprep.mubr.f32.mxu0 0.0
        %2742 = vmatmul.mubr.f32.gmra.mrb[0].mxu0 %v2675
        %v2743 = vpop.f32.mrb[0].mxu0
        %v2744 = vadd.f32 0.0, %v2743
        %v2745 = vpop.f32.mrb[0].mxu0
        %2746 = vdwg.mxu0
        %2748 = vrot.lane.b32.xlu0 %v2396, 32
        %v2749 = vpop.permute.xlu0 %2748
        %2752 = vrot.lane.b32.xlu0 %v2570, 64
        %v2753 = vpop.permute.xlu0 %2752
        %2756 = vrot.lane.b32.xlu0 %v2744, 96
        %v2757 = vpop.permute.xlu0 %2756
        %v2759 = vsel %vm964, %v2220, %v2749
        %v2760 = vsel %vm1644, %v2759, %v2753
        %v2761 = vsel %vm1646, %v2760, %v2757
        %s2762 = scalar_lea.vmem [#allocation11], 384
        %v2763 = vld [vmem:[%s2762] sm:$0xff]
        %v2764 = vld [vmem:[%s2762 + $0x8] sm:$0xff]
        %v2765 = vld [vmem:[%s2762 + $0x10] sm:$0xff]
        %v2766 = vld [vmem:[%s2762 + $0x18] sm:$0xff]
        %v2767 = vld [vmem:[%s2762 + $0x20] sm:$0xff]
        %v2768 = vld [vmem:[%s2762 + $0x28] sm:$0xff]
        %v2769 = vld [vmem:[%s2762 + $0x30] sm:$0xff]
        %v2770 = vld [vmem:[%s2762 + $0x38] sm:$0xff]
        %v2771 = vld [vmem:[%s2762 + $0x40] sm:$0xff]
        %v2772 = vld [vmem:[%s2762 + $0x48] sm:$0xff]
        %v2773 = vld [vmem:[%s2762 + $0x50] sm:$0xff]
        %v2774 = vld [vmem:[%s2762 + $0x58] sm:$0xff]
        %v2775 = vld [vmem:[%s2762 + $0x60] sm:$0xff]
        %v2776 = vld [vmem:[%s2762 + $0x68] sm:$0xff]
        %v2777 = vld [vmem:[%s2762 + $0x70] sm:$0xff]
        %v2778 = vld [vmem:[%s2762 + $0x78] sm:$0xff]
        %v2779 = vld [vmem:[%s9 + $0x3] sm:$0x1]
        %v2780 = vlaneseq
        %v2781 = vshrl.u32 %v2780, 7
        %v2782 = vsub.s32 0, %v2781
        %v2783 = vrot.slane %v2779, %v2782
        %2784 = vmatprep.subr.mxu0 0.0
        %2785 = vmatpush1.msra.mxu0 %v2763
        %2786 = vmatprep.subr.mxu0 0.0
        %2787 = vmatpush1.msra.mxu0 %v2764
        %2788 = vmatprep.subr.mxu0 0.0
        %2789 = vmatpush1.msra.mxu0 %v2765
        %2790 = vmatprep.subr.mxu0 0.0
        %2791 = vmatpush1.msra.mxu0 %v2766
        %2792 = vmatprep.subr.mxu0 0.0
        %2793 = vmatpush1.msra.mxu0 %v2767
        %2794 = vmatprep.subr.mxu0 0.0
        %2795 = vmatpush1.msra.mxu0 %v2768
        %2796 = vmatprep.subr.mxu0 0.0
        %2797 = vmatpush1.msra.mxu0 %v2769
        %2798 = vmatprep.subr.mxu0 0.0
        %2799 = vmatpush1.msra.mxu0 %v2770
        %2800 = vmatprep.subr.mxu0 0.0
        %2801 = vmatpush1.msra.mxu0 %v2771
        %2802 = vmatprep.subr.mxu0 0.0
        %2803 = vmatpush1.msra.mxu0 %v2772
        %2804 = vmatprep.subr.mxu0 0.0
        %2805 = vmatpush1.msra.mxu0 %v2773
        %2806 = vmatprep.subr.mxu0 0.0
        %2807 = vmatpush1.msra.mxu0 %v2774
        %2808 = vmatprep.subr.mxu0 0.0
        %2809 = vmatpush1.msra.mxu0 %v2775
        %2810 = vmatprep.subr.mxu0 0.0
        %2811 = vmatpush1.msra.mxu0 %v2776
        %2812 = vmatprep.subr.mxu0 0.0
        %2813 = vmatpush1.msra.mxu0 %v2777
        %2814 = vmatprep.subr.mxu0 0.0
        %2815 = vmatpush1.msra.mxu0 %v2778
        %2816 = vmatprep.subr.mxu0 0.0
        %2817 = vmatpush1.msra.mxu0 0.0
        %2818 = vmatprep.subr.mxu0 0.0
        %2819 = vmatpush1.msra.mxu0 0.0
        %2820 = vmatprep.subr.mxu0 0.0
        %2821 = vmatpush1.msra.mxu0 0.0
        %2822 = vmatprep.subr.mxu0 0.0
        %2823 = vmatpush1.msra.mxu0 0.0
        %2824 = vmatprep.subr.mxu0 0.0
        %2825 = vmatpush1.msra.mxu0 0.0
        %2826 = vmatprep.subr.mxu0 0.0
        %2827 = vmatpush1.msra.mxu0 0.0
        %2828 = vmatprep.subr.mxu0 0.0
        %2829 = vmatpush1.msra.mxu0 0.0
        %2830 = vmatprep.subr.mxu0 0.0
        %2831 = vmatpush1.msra.mxu0 0.0
        %2832 = vmatprep.subr.mxu0 0.0
        %2833 = vmatpush1.msra.mxu0 0.0
        %2834 = vmatprep.subr.mxu0 0.0
        %2835 = vmatpush1.msra.mxu0 0.0
        %2836 = vmatprep.subr.mxu0 0.0
        %2837 = vmatpush1.msra.mxu0 0.0
        %2838 = vmatprep.subr.mxu0 0.0
        %2839 = vmatpush1.msra.mxu0 0.0
        %2840 = vmatprep.subr.mxu0 0.0
        %2841 = vmatpush1.msra.mxu0 0.0
        %2842 = vmatprep.subr.mxu0 0.0
        %2843 = vmatpush1.msra.mxu0 0.0
        %2844 = vmatprep.subr.mxu0 0.0
        %2845 = vmatpush1.msra.mxu0 0.0
        %2846 = vmatprep.subr.mxu0 0.0
        %2847 = vmatpush1.msra.mxu0 0.0
        %2848 = vmatprep.mubr.f32.mxu0 0.0
        %2849 = vmatmul.mubr.f32.gmra.mrb[0].mxu0 %v2761
        %v2850 = vpop.f32.mrb[0].mxu0
        %v2851 = vadd.f32 %v2783, %v2850
        %v2852 = vpop.f32.mrb[0].mxu0
        %2853 = vdwg.mxu0
        %v2854 = vadd.f32 %v1740, %v2851
        %v2855 = vld [vmem:[%s4 + $0x2] sm:$0x1]
        %v2856 = vld [vmem:[%s5 + $0x2] sm:$0x1]
        %2857 = vadd.xlane.f32.xlu0 %v2854
        %v2858 = vpop.xlane.xlu0 %2857
        %v2859 = vmul.f32 %v2858, %v661
        %v2860 = vsub.f32 %v2854, %v2859
        %v2861 = vmul.f32 %v2860, %v2860
        %2862 = vadd.xlane.f32.xlu0 %v2861
        %v2863 = vpop.xlane.xlu0 %2862
        %v2864 = vmul.f32 %v2863, %v667
        %v2865 = vrsqrt.pop %v2864
        %v2866 = vmul.f32 %v2864, %v2865
        %vm2867 = vcmp.eq.f32.partialorder %v2864, inf
        %v2868 = vsel %vm2867, %v2864, %v2866
        %vm2869 = vcmp.eq.f32.partialorder %v2864, 0.0
        %v2870 = vand.u32 %v2864, 2147483648
        %v2871 = vsel %vm2869, %v2870, %v2868
        %v2872 = vlaneseq
        %v2873 = vshrl.u32 %v2872, 7
        %v2874 = vsub.s32 0, %v2873
        %v2875 = vrot.slane %v2855, %v2874
        %v2876 = vmul.f32 %v2875, %v2860
        %v2877 = vadd.f32 %v2871, 1e-06
        %v2878 = vrcp.pop %v2877
        %v2879 = vmul.f32 %v2876, %v2878
        %v2880 = vlaneseq
        %v2881 = vshrl.u32 %v2880, 7
        %v2882 = vsub.s32 0, %v2881
        %v2883 = vrot.slane %v2856, %v2882
        %v2884 = vadd.f32 %v2879, %v2883
        %v2885 = vld [vmem:[#allocation13] sm:$0xff]
        %v2886 = vld [vmem:[#allocation13 + $0x8] sm:$0xff]
        %v2887 = vld [vmem:[#allocation13 + $0x10] sm:$0xff]
        %v2888 = vld [vmem:[#allocation13 + $0x18] sm:$0xff]
        %v2889 = vld [vmem:[#allocation13 + $0x20] sm:$0xff]
        %v2890 = vld [vmem:[#allocation13 + $0x28] sm:$0xff]
        %v2891 = vld [vmem:[#allocation13 + $0x30] sm:$0xff]
        %v2892 = vld [vmem:[#allocation13 + $0x38] sm:$0xff]
        %v2893 = vld [vmem:[#allocation13 + $0x40] sm:$0xff]
        %v2894 = vld [vmem:[#allocation13 + $0x48] sm:$0xff]
        %v2895 = vld [vmem:[#allocation13 + $0x50] sm:$0xff]
        %v2896 = vld [vmem:[#allocation13 + $0x58] sm:$0xff]
        %v2897 = vld [vmem:[#allocation13 + $0x60] sm:$0xff]
        %v2898 = vld [vmem:[#allocation13 + $0x68] sm:$0xff]
        %v2899 = vld [vmem:[#allocation13 + $0x70] sm:$0xff]
        %v2900 = vld [vmem:[#allocation13 + $0x78] sm:$0xff]
        %v2901 = vld [vmem:[#allocation13 + $0x80] sm:$0xff]
        %v2902 = vld [vmem:[#allocation13 + $0x88] sm:$0xff]
        %v2903 = vld [vmem:[#allocation13 + $0x90] sm:$0xff]
        %v2904 = vld [vmem:[#allocation13 + $0x98] sm:$0xff]
        %v2905 = vld [vmem:[#allocation13 + $0xa0] sm:$0xff]
        %v2906 = vld [vmem:[#allocation13 + $0xa8] sm:$0xff]
        %v2907 = vld [vmem:[#allocation13 + $0xb0] sm:$0xff]
        %v2908 = vld [vmem:[#allocation13 + $0xb8] sm:$0xff]
        %v2909 = vld [vmem:[#allocation13 + $0xc0] sm:$0xff]
        %v2910 = vld [vmem:[#allocation13 + $0xc8] sm:$0xff]
        %v2911 = vld [vmem:[#allocation13 + $0xd0] sm:$0xff]
        %v2912 = vld [vmem:[#allocation13 + $0xd8] sm:$0xff]
        %v2913 = vld [vmem:[#allocation13 + $0xe0] sm:$0xff]
        %v2914 = vld [vmem:[#allocation13 + $0xe8] sm:$0xff]
        %v2915 = vld [vmem:[#allocation13 + $0xf0] sm:$0xff]
        %v2916 = vld [vmem:[#allocation13 + $0xf8] sm:$0xff]
        %v2917 = vld [vmem:[%s11] sm:$0x3]
        %v2919 = vlaneseq
        %v2920 = vshrl.u32 %v2919, 7
        %v2921 = vsub.s32 0, %v2920
        %v2922 = vrot.slane %v2917, %v2921
        %v2923 = vlaneseq
        %v2924 = vshrl.u32 %v2923, 7
        %v2925 = vsub.s32 1, %v2924
        %v2926 = vrot.slane %v2917, %v2925
        %2929 = vmatprep.subr.mxu0 %v2886
        %2930 = vmatpush1.msra.mxu0 %v2885
        %2931 = vmatprep.subr.mxu0 %v2888
        %2932 = vmatpush1.msra.mxu0 %v2887
        %2933 = vmatprep.subr.mxu0 %v2890
        %2934 = vmatpush1.msra.mxu0 %v2889
        %2935 = vmatprep.subr.mxu0 %v2892
        %2936 = vmatpush1.msra.mxu0 %v2891
        %2937 = vmatprep.subr.mxu0 %v2894
        %2938 = vmatpush1.msra.mxu0 %v2893
        %2939 = vmatprep.subr.mxu0 %v2896
        %2940 = vmatpush1.msra.mxu0 %v2895
        %2941 = vmatprep.subr.mxu0 %v2898
        %2942 = vmatpush1.msra.mxu0 %v2897
        %2943 = vmatprep.subr.mxu0 %v2900
        %2944 = vmatpush1.msra.mxu0 %v2899
        %2945 = vmatprep.subr.mxu0 %v2902
        %2946 = vmatpush1.msra.mxu0 %v2901
        %2947 = vmatprep.subr.mxu0 %v2904
        %2948 = vmatpush1.msra.mxu0 %v2903
        %2949 = vmatprep.subr.mxu0 %v2906
        %2950 = vmatpush1.msra.mxu0 %v2905
        %2951 = vmatprep.subr.mxu0 %v2908
        %2952 = vmatpush1.msra.mxu0 %v2907
        %2953 = vmatprep.subr.mxu0 %v2910
        %2954 = vmatpush1.msra.mxu0 %v2909
        %2955 = vmatprep.subr.mxu0 %v2912
        %2956 = vmatpush1.msra.mxu0 %v2911
        %2957 = vmatprep.subr.mxu0 %v2914
        %2958 = vmatpush1.msra.mxu0 %v2913
        %2959 = vmatprep.subr.mxu0 %v2916
        %2960 = vmatpush1.msra.mxu0 %v2915
        %2961 = vmatprep.subr.mxu0 0.0
        %2962 = vmatpush1.msra.mxu0 0.0
        %2963 = vmatprep.subr.mxu0 0.0
        %2964 = vmatpush1.msra.mxu0 0.0
        %2965 = vmatprep.subr.mxu0 0.0
        %2966 = vmatpush1.msra.mxu0 0.0
        %2967 = vmatprep.subr.mxu0 0.0
        %2968 = vmatpush1.msra.mxu0 0.0
        %2969 = vmatprep.subr.mxu0 0.0
        %2970 = vmatpush1.msra.mxu0 0.0
        %2971 = vmatprep.subr.mxu0 0.0
        %2972 = vmatpush1.msra.mxu0 0.0
        %2973 = vmatprep.subr.mxu0 0.0
        %2974 = vmatpush1.msra.mxu0 0.0
        %2975 = vmatprep.subr.mxu0 0.0
        %2976 = vmatpush1.msra.mxu0 0.0
        %2977 = vmatprep.subr.mxu0 0.0
        %2978 = vmatpush1.msra.mxu0 0.0
        %2979 = vmatprep.subr.mxu0 0.0
        %2980 = vmatpush1.msra.mxu0 0.0
        %2981 = vmatprep.subr.mxu0 0.0
        %2982 = vmatpush1.msra.mxu0 0.0
        %2983 = vmatprep.subr.mxu0 0.0
        %2984 = vmatpush1.msra.mxu0 0.0
        %2985 = vmatprep.subr.mxu0 0.0
        %2986 = vmatpush1.msra.mxu0 0.0
        %2987 = vmatprep.subr.mxu0 0.0
        %2988 = vmatpush1.msra.mxu0 0.0
        %2989 = vmatprep.subr.mxu0 0.0
        %2990 = vmatpush1.msra.mxu0 0.0
        %2991 = vmatprep.subr.mxu0 0.0
        %2992 = vmatpush1.msra.mxu0 0.0
        %2993 = vmatprep.mubr.f32.mxu0 0.0
        %2994 = vmatmul.mubr.f32.gmra.mrb[0].mxu0 %v2884
        %v2995 = vpop.f32.mrb[0].mxu0
        %v2996 = vadd.f32 %v2922, %v2995
        %v2997 = vpop.f32.mrb[0].mxu0
        %v2998 = vadd.f32 %v2926, %v2997
        %2999 = vdwg.mxu0
        %v3000 = vmax.f32 %v2996, 0.0
        %v3001 = vmax.f32 %v2998, 0.0
        %v3002 = vld [vmem:[#allocation14] sm:$0xff]
        %v3003 = vld [vmem:[#allocation14 + $0x8] sm:$0xff]
        %v3004 = vld [vmem:[#allocation14 + $0x10] sm:$0xff]
        %v3005 = vld [vmem:[#allocation14 + $0x18] sm:$0xff]
        %v3006 = vld [vmem:[#allocation14 + $0x20] sm:$0xff]
        %v3007 = vld [vmem:[#allocation14 + $0x28] sm:$0xff]
        %v3008 = vld [vmem:[#allocation14 + $0x30] sm:$0xff]
        %v3009 = vld [vmem:[#allocation14 + $0x38] sm:$0xff]
        %v3010 = vld [vmem:[#allocation14 + $0x40] sm:$0xff]
        %v3011 = vld [vmem:[#allocation14 + $0x48] sm:$0xff]
        %v3012 = vld [vmem:[#allocation14 + $0x50] sm:$0xff]
        %v3013 = vld [vmem:[#allocation14 + $0x58] sm:$0xff]
        %v3014 = vld [vmem:[#allocation14 + $0x60] sm:$0xff]
        %v3015 = vld [vmem:[#allocation14 + $0x68] sm:$0xff]
        %v3016 = vld [vmem:[#allocation14 + $0x70] sm:$0xff]
        %v3017 = vld [vmem:[#allocation14 + $0x78] sm:$0xff]
        %v3018 = vld [vmem:[#allocation14 + $0x80] sm:$0xff]
        %v3019 = vld [vmem:[#allocation14 + $0x88] sm:$0xff]
        %v3020 = vld [vmem:[#allocation14 + $0x90] sm:$0xff]
        %v3021 = vld [vmem:[#allocation14 + $0x98] sm:$0xff]
        %v3022 = vld [vmem:[#allocation14 + $0xa0] sm:$0xff]
        %v3023 = vld [vmem:[#allocation14 + $0xa8] sm:$0xff]
        %v3024 = vld [vmem:[#allocation14 + $0xb0] sm:$0xff]
        %v3025 = vld [vmem:[#allocation14 + $0xb8] sm:$0xff]
        %v3026 = vld [vmem:[#allocation14 + $0xc0] sm:$0xff]
        %v3027 = vld [vmem:[#allocation14 + $0xc8] sm:$0xff]
        %v3028 = vld [vmem:[#allocation14 + $0xd0] sm:$0xff]
        %v3029 = vld [vmem:[#allocation14 + $0xd8] sm:$0xff]
        %v3030 = vld [vmem:[#allocation14 + $0xe0] sm:$0xff]
        %v3031 = vld [vmem:[#allocation14 + $0xe8] sm:$0xff]
        %v3032 = vld [vmem:[#allocation14 + $0xf0] sm:$0xff]
        %v3033 = vld [vmem:[#allocation14 + $0xf8] sm:$0xff]
        %v3034 = vld [vmem:[%s13] sm:$0x1]
        %v3036 = vlaneseq
        %v3037 = vshrl.u32 %v3036, 7
        %v3038 = vsub.s32 0, %v3037
        %v3039 = vrot.slane %v3034, %v3038
        %3041 = vmatprep.subr.mxu0 0.0
        %3042 = vmatpush1.msra.mxu0 %v3002
        %3043 = vmatprep.subr.mxu0 0.0
        %3044 = vmatpush1.msra.mxu0 %v3003
        %3045 = vmatprep.subr.mxu0 0.0
        %3046 = vmatpush1.msra.mxu0 %v3004
        %3047 = vmatprep.subr.mxu0 0.0
        %3048 = vmatpush1.msra.mxu0 %v3005
        %3049 = vmatprep.subr.mxu0 0.0
        %3050 = vmatpush1.msra.mxu0 %v3006
        %3051 = vmatprep.subr.mxu0 0.0
        %3052 = vmatpush1.msra.mxu0 %v3007
        %3053 = vmatprep.subr.mxu0 0.0
        %3054 = vmatpush1.msra.mxu0 %v3008
        %3055 = vmatprep.subr.mxu0 0.0
        %3056 = vmatpush1.msra.mxu0 %v3009
        %3057 = vmatprep.subr.mxu0 0.0
        %3058 = vmatpush1.msra.mxu0 %v3010
        %3059 = vmatprep.subr.mxu0 0.0
        %3060 = vmatpush1.msra.mxu0 %v3011
        %3061 = vmatprep.subr.mxu0 0.0
        %3062 = vmatpush1.msra.mxu0 %v3012
        %3063 = vmatprep.subr.mxu0 0.0
        %3064 = vmatpush1.msra.mxu0 %v3013
        %3065 = vmatprep.subr.mxu0 0.0
        %3066 = vmatpush1.msra.mxu0 %v3014
        %3067 = vmatprep.subr.mxu0 0.0
        %3068 = vmatpush1.msra.mxu0 %v3015
        %3069 = vmatprep.subr.mxu0 0.0
        %3070 = vmatpush1.msra.mxu0 %v3016
        %3071 = vmatprep.subr.mxu0 0.0
        %3072 = vmatpush1.msra.mxu0 %v3017
        %3073 = vmatprep.subr.mxu0 0.0
        %3074 = vmatpush1.msra.mxu0 %v3018
        %3075 = vmatprep.subr.mxu0 0.0
        %3076 = vmatpush1.msra.mxu0 %v3019
        %3077 = vmatprep.subr.mxu0 0.0
        %3078 = vmatpush1.msra.mxu0 %v3020
        %3079 = vmatprep.subr.mxu0 0.0
        %3080 = vmatpush1.msra.mxu0 %v3021
        %3081 = vmatprep.subr.mxu0 0.0
        %3082 = vmatpush1.msra.mxu0 %v3022
        %3083 = vmatprep.subr.mxu0 0.0
        %3084 = vmatpush1.msra.mxu0 %v3023
        %3085 = vmatprep.subr.mxu0 0.0
        %3086 = vmatpush1.msra.mxu0 %v3024
        %3087 = vmatprep.subr.mxu0 0.0
        %3088 = vmatpush1.msra.mxu0 %v3025
        %3089 = vmatprep.subr.mxu0 0.0
        %3090 = vmatpush1.msra.mxu0 %v3026
        %3091 = vmatprep.subr.mxu0 0.0
        %3092 = vmatpush1.msra.mxu0 %v3027
        %3093 = vmatprep.subr.mxu0 0.0
        %3094 = vmatpush1.msra.mxu0 %v3028
        %3095 = vmatprep.subr.mxu0 0.0
        %3096 = vmatpush1.msra.mxu0 %v3029
        %3097 = vmatprep.subr.mxu0 0.0
        %3098 = vmatpush1.msra.mxu0 %v3030
        %3099 = vmatprep.subr.mxu0 0.0
        %3100 = vmatpush1.msra.mxu0 %v3031
        %3101 = vmatprep.subr.mxu0 0.0
        %3102 = vmatpush1.msra.mxu0 %v3032
        %3103 = vmatprep.subr.mxu0 0.0
        %3104 = vmatpush1.msra.mxu0 %v3033
        %3105 = vmatprep.mubr.f32.mxu0 %v3001
        %3106 = vmatmul.mubr.f32.gmra.mrb[0].mxu0 %v3000
        %v3107 = vpop.f32.mrb[0].mxu0
        %v3108 = vadd.f32 %v3039, %v3107
        %v3109 = vpop.f32.mrb[0].mxu0
        %3110 = vdwg.mxu0
        %v3111 = vadd.f32 %v2854, %v3108
        %3112 = vst [vmem:[%s651] sm:$0xff] %v3111
        %s3113 = sand.u32 %s361, 1
        %s3114 = scalar_lea.sflag [#allocation4], %s3113
        %s3115 = sand.u32 %s361, 1
        %s3116 = smul.addr %s3115, 8
        %s3117 = scalar_lea.vmem [#allocation16], %s3116
        // Predicated region
        $region109: #{tpu_custom_call.1} parent=75 // pred_check
          %p3118 = pneg %p371
        $region110: #{tpu_custom_call.1} parent=75 // pred_check_branch
          %3120 = sbr.rel (%p3118) target = $region112
        $region111: #{tpu_custom_call.1} parent=75 // pred_region
          %s3122 = ssub.s32 128, 128
          %3123 = vsyncadd %s3114, %s3122
          %s3124 = smul.addr %s39, 128
          %s3125 = scalar_lea.hbm %s14, %s3124
          %s3127 = sshll.u32 %s3117, 4
          %s3128 = int_to_ptr.vmem [resolvable:$true] %s3127
          %3130 = dma.vmem_to_hbm [thread:$0]  %s3128, 128, %s3125, %s3114
        $region112: #{tpu_custom_call.1} parent=75 // pred_fallthru
          _
      $region76: #{tpu_custom_call.1} parent=5 // pred_fallthru
        _
      %p3131 = scmp.le.s32.totalorder 2, %s34
      // Predicated region
      $region113: #{tpu_custom_call.1} parent=5 // pred_check
        %p3132 = pneg %p3131
      $region114: #{tpu_custom_call.1} parent=5 // pred_check_branch
        %3134 = sbr.rel (%p3132) target = $region116
      $region115: #{tpu_custom_call.1} parent=5 // pred_region
        %s3135 = ssub.s32 %s34, 2
        // Predicated region
        $region117: #{tpu_custom_call.1} parent=115 // pred_check
          %p3136 = pneg %p377
        $region118: #{tpu_custom_call.1} parent=115 // pred_check_branch
          %3138 = sbr.rel (%p3136) target = $region120
        $region119: #{tpu_custom_call.1} parent=115 // pred_region
          %s3139 = sand.u32 %s362, 1
          %s3140 = scalar_lea.sflag [#allocation4], %s3139
          %s3141 = sand.u32 %s362, 1
          %s3142 = smul.addr %s3141, 8
          %s3143 = scalar_lea.vmem [#allocation16], %s3142
          %3144 = dma.done %s3140, 128
        $region120: #{tpu_custom_call.1} parent=115 // pred_fallthru
          _
      $region116: #{tpu_custom_call.1} parent=5 // pred_fallthru
        _
    $region6: #{tpu_custom_call.1} parent=1 // loop_footer
      %s38 = sadd.s32 1, %s34
    $region7: #{tpu_custom_call.1} parent=1 // loop_footer_branch
      %33 = sbr.rel target = $region3
    $region8: #{tpu_custom_call.1} parent=1 // loop_exit
      _
    %3145 = vsyncpa [#allocation3], 1
    %s3146 = scalar_lea.sflag [#allocation3], 1
    %3147 = vsyncpa %s3146, 1
    %3148 = vsyncpa [#allocation6], 1
    %s3149 = scalar_lea.sflag [#allocation6], 1
    %3150 = vsyncpa %s3149, 1
    %3151 = vsyncpa [#allocation9], 1
    %s3152 = scalar_lea.sflag [#allocation9], 1
    %3153 = vsyncpa %s3152, 1
    %3154 = vsyncpa [#allocation12], 1
    %3155 = vsyncpa [#allocation15], 1
    %3156 = vsyncpa [#allocation4], 1
    %s3157 = scalar_lea.sflag [#allocation4], 1
    %3158 = vsyncpa %s3157, 1

</llo_original>
